<compile_context>
chip_gen: v5e
topology: v5e:2x2
jax: 0.10.0
libtpu: 0.0.40
codegen_flags: <defaults>
</compile_context>

<pallas_src>
import functools

import jax
import jax.numpy as jnp
from jax.experimental import pallas as pl
from jax.experimental.pallas import tpu as pltpu

CMD_TARGET_GATHER = 1
CMD_TARGET_ATTACK = 2
CMD_TARGET_BUILD_BUILDING = 3
CMD_TARGET_BUILD_UNIT = 4
CMD_TARGET_MOVE = 5

NUM_CMD_TYPES = 6
MAP_X = 32
MAP_Y = 32

HEAD_ORDER = (
    "cmd_type_prob",
    "gather_idx_prob",
    "attack_idx_prob",
    "unit_type_prob",
    "building_type_prob",
    "building_loc_prob",
    "move_loc_prob",
)
LP_NAMES = (
    "cmd_type",
    "gather_idx",
    "attack_idx",
    "unit_type",
    "building_type",
    "building_loc",
    "move_loc",
)
# cmd type that enables each sub-head in the masked sum (index 0 = cmd_type
# head itself, always counted).
MASK_CMD_TYPES = (
    0,
    CMD_TARGET_GATHER,
    CMD_TARGET_ATTACK,
    CMD_TARGET_BUILD_UNIT,
    CMD_TARGET_BUILD_BUILDING,
    CMD_TARGET_BUILD_BUILDING,
    CMD_TARGET_MOVE,
)


def _round_up(v, m):
    return -(-v // m) * m


def _tpu_vmem_capacity_bytes():
    try:
        info = pltpu.get_tpu_info()
        return int(getattr(info, "vmem_capacity_bytes", 64 << 20))
    except Exception:
        return 64 << 20  # conservative: v7x per-TC VMEM


def _tile_and_vmem_limit(n):
    """Generation-conditional row tile + scoped-VMEM limit.

    v5e / v6e (128 MiB physical VMEM): tile cap 512, raise scoped limit to 64 MiB
    (defaults are 16 / 32 MiB).  v7x (64 MiB per TC): keep cap 256, limit 40 MiB.
    """
    vmem = _tpu_vmem_capacity_bytes()
    if vmem >= (100 << 20):
        cap, limit = 512, 64 << 20
    else:
        cap, limit = 256, 40 << 20
    t = cap
    # prefer >=2 grid blocks when possible; floor 16 rows (bf16-sublane safe).
    while t > 16 and n < 2 * t:
        t //= 2
    return t, limit


# ----------------------------------------------------------------------------
# Fused kernel.
#   x:   [TN, H]        f32 (cast to bf16 in-kernel for the MXU)
#   w:   [H, K_total]   bf16 (packed small-head block first, then big heads)
#   b:   [1, K_total]   f32  (-1e30 on padded / unused lanes)
#   idx: [TN, 8]        int32 packed per-head gather indices
# outputs:
#   prob: [TN, K_total] bf16 (per-head softmax, padded lanes = 0)
#   lp:   [TN, 128]     f32  (cols 0..6 per-head log prob, col 7 masked sum)
#
# No full-width logits intermediate: one matmul per segment via static
# w_ref / b_ref slices (lane-aligned: offsets & widths are 128-multiples).
# ----------------------------------------------------------------------------
def _fused_heads_kernel(x_ref, w_ref, b_ref, idx_ref, prob_ref, lp_ref, *,
                        small_width, small_layout, big_segments,
                        mask_cmd_types):
    num_heads = len(small_layout) + len(big_segments)
    x = x_ref[...].astype(jnp.bfloat16)
    idx_all = idx_ref[...]
    cmd_type = idx_all[:, 0:1]

    lps = [None] * num_heads

    # ---- packed small-head block: one matmul, one exp pass, masked softmaxes
    if small_layout:
        logits_s = (jnp.dot(x, w_ref[:, 0:small_width],
                            preferred_element_type=jnp.float32)
                    + b_ref[:, 0:small_width])
        lanes = jax.lax.broadcasted_iota(jnp.int32, logits_s.shape, 1)
        masks, maxes = [], []
        m_vec = jnp.zeros_like(logits_s)          # per-lane shift = own head's max
        for h, so, k in small_layout:
            in_head = (lanes >= so) & (lanes < so + k)
            m_h = jnp.max(jnp.where(in_head, logits_s, -1e30),
                          axis=-1, keepdims=True)
            m_vec = jnp.where(in_head, m_h, m_vec)
            masks.append(in_head)
            maxes.append(m_h)
        # unused lanes: logits = -1e30, m_vec = 0  ->  exp underflows to 0.
        e_s = jnp.exp(logits_s - m_vec)
        prob_s = jnp.zeros_like(logits_s)
        for (h, so, k), in_head, m_h in zip(small_layout, masks, maxes):
            e_h = jnp.where(in_head, e_s, 0.0)
            s_h = jnp.sum(e_h, axis=-1, keepdims=True)
            prob_s = prob_s + e_h * pl.reciprocal(s_h, approx=True)
            idx_h = idx_all[:, h:h + 1] + so
            gathered = jnp.sum(jnp.where(lanes == idx_h, logits_s, 0.0),
                               axis=-1, keepdims=True)
            # log-softmax directly from logits: finite, no exp->div->log round trip
            lps[h] = gathered - m_h - jnp.log(s_h)
        prob_ref[:, 0:small_width] = prob_s.astype(prob_ref.dtype)

    # ---- big heads: per-segment matmul + softmax + log-softmax gather
    for h, off, kp in big_segments:
        seg = (jnp.dot(x, w_ref[:, off:off + kp],
                       preferred_element_type=jnp.float32)
               + b_ref[:, off:off + kp])
        m = jnp.max(seg, axis=-1, keepdims=True)
        e = jnp.exp(seg - m)
        s = jnp.sum(e, axis=-1, keepdims=True)
        prob_ref[:, off:off + kp] = (
            e * pl.reciprocal(s, approx=True)).astype(prob_ref.dtype)
        lanes_b = jax.lax.broadcasted_iota(jnp.int32, seg.shape, 1)
        gathered = jnp.sum(jnp.where(lanes_b == idx_all[:, h:h + 1], seg, 0.0),
                           axis=-1, keepdims=True)
        lps[h] = gathered - m - jnp.log(s)

    # ---- masked log-prob sum (cmd_type always counted)
    lp_sum = lps[0]
    for h in range(1, num_heads):
        mask = (cmd_type == mask_cmd_types[h]).astype(jnp.float32)
        lp_sum = lp_sum + mask * lps[h]           # lp is finite: safe

    # Pack the 7 per-head log probs + the masked sum into one lane-dense tile.
    cols = lps + [lp_sum]
    lanes_lp = jax.lax.broadcasted_iota(jnp.int32, lp_ref.shape, 1)
    packed = jnp.zeros(lp_ref.shape, jnp.float32)
    for i, v in enumerate(cols):
        packed = jnp.where(lanes_lp == i, v, packed)
    lp_ref[...] = packed


def fused_executor_heads(x, idx_all, w_all, b_all, *, small_width,
                         small_layout, big_segments, mask_cmd_types):
    N, H = x.shape
    K_total = w_all.shape[1]
    tile, vmem_limit = _tile_and_vmem_limit(N)
    n_pad = _round_up(N, tile)
    if n_pad != N:
        x = jnp.pad(x, ((0, n_pad - N), (0, 0)))
        idx_all = jnp.pad(idx_all, ((0, n_pad - N), (0, 0)))

    kernel = functools.partial(
        _fused_heads_kernel, small_width=small_width,
        small_layout=small_layout, big_segments=big_segments,
        mask_cmd_types=mask_cmd_types)

    def run(single_buffer_const):
        # w_all / b_all are grid-constant (index_map -> (0,0)); single-buffer
        # them so they don't waste VMEM that could go to a bigger row tile.
        const_kw = {"pipeline_mode": pl.Buffered(1)} if single_buffer_const else {}
        return pl.pallas_call(
            kernel,
            out_shape=(
                # bf16 prob: halves the dominant HBM writeback
                jax.ShapeDtypeStruct((n_pad, K_total), jnp.bfloat16),
                jax.ShapeDtypeStruct((n_pad, 128), jnp.float32),
            ),
            grid=(n_pad // tile,),
            in_specs=[
                pl.BlockSpec((tile, H), lambda i: (i, 0)),
                pl.BlockSpec((H, K_total), lambda i: (0, 0), **const_kw),
                pl.BlockSpec((1, K_total), lambda i: (0, 0), **const_kw),
                pl.BlockSpec((tile, idx_all.shape[1]), lambda i: (i, 0)),
            ],
            out_specs=(
                pl.BlockSpec((tile, K_total), lambda i: (i, 0)),
                pl.BlockSpec((tile, 128), lambda i: (i, 0)),
            ),
            compiler_params=pltpu.CompilerParams(
                dimension_semantics=("parallel",),
                vmem_limit_bytes=vmem_limit),
        )(x, w_all, b_all, idx_all)

    try:
        prob, lp = run(True)
    except Exception:
        # pipeline_mode / Buffered(1) unsupported on this JAX version:
        # fall back to default double-buffering (perf-only difference).
        prob, lp = run(False)
    return prob[:N], lp[:N]


# ----------------------------------------------------------------------------
# ExecutorWrapper (synthetic executor: per-head linear+softmax from features)
# ----------------------------------------------------------------------------
class ExecutorWrapper:
    def __init__(self, num_units, num_unit_types, hidden, key):
        self.hidden = hidden
        self.head_sizes = {
            "cmd_type_prob": NUM_CMD_TYPES,
            "gather_idx_prob": num_units,
            "attack_idx_prob": num_units,
            "unit_type_prob": num_unit_types,
            "building_type_prob": num_unit_types,
            "building_loc_prob": MAP_X * MAP_Y,
            "move_loc_prob": MAP_X * MAP_Y,
        }
        # deterministic synthetic per-head parameters
        self.params = {}
        for i, name in enumerate(HEAD_ORDER):
            K = self.head_sizes[name]
            kw = jax.random.fold_in(key, i)
            w = jax.random.normal(kw, (hidden, K), jnp.float32) * 0.1
            b = jnp.zeros((1, K), jnp.float32)
            self.params[name] = (w, b)

        # --- fused, packed parameter layout ---------------------------------
        # Heads with < 128 classes share ONE 128-multiple lane block (masked
        # softmax in-kernel); big heads get their own lane-padded segments.
        # Pad weights with 0, pad bias with -1e30 so padded lanes get prob 0.
        small = [(h, name) for h, name in enumerate(HEAD_ORDER)
                 if self.head_sizes[name] < 128]
        big = [(h, name) for h, name in enumerate(HEAD_ORDER)
               if self.head_sizes[name] >= 128]

        w_blocks, b_blocks = [], []
        self.head_loc = {}                 # name -> (offset in packed prob, K)
        small_layout = []                  # (head_idx, sub_offset, K)
        small_width = 0
        if small:
            sub = 0
            sw, sb = [], []
            for h, name in small:
                K = self.head_sizes[name]
                w, b = self.params[name]
                sw.append(w)
                sb.append(b)
                small_layout.append((h, sub, K))
                self.head_loc[name] = (sub, K)
                sub += K
            small_width = _round_up(sub, 128)
            w_cat = jnp.concatenate(sw, axis=1)
            b_cat = jnp.concatenate(sb, axis=1)
            w_blocks.append(jnp.pad(w_cat, ((0, 0), (0, small_width - sub))))
            b_blocks.append(jnp.pad(b_cat, ((0, 0), (0, small_width - sub)),
                                    constant_values=-1e30))

        off = small_width
        big_segments = []                  # (head_idx, offset, padded_k)
        for h, name in big:
            K = self.head_sizes[name]
            kp = _round_up(K, 128)
            w, b = self.params[name]
            w_blocks.append(jnp.pad(w, ((0, 0), (0, kp - K))))
            b_blocks.append(jnp.pad(b, ((0, 0), (0, kp - K)),
                                    constant_values=-1e30))
            big_segments.append((h, off, kp))
            self.head_loc[name] = (off, K)
            off += kp

        self.small_layout = tuple(small_layout)
        self.small_width = small_width
        self.big_segments = tuple(big_segments)
        self.k_total = off
        self.w_all = jnp.concatenate(w_blocks, axis=1).astype(jnp.bfloat16)
        self.b_all = jnp.concatenate(b_blocks, axis=1)

    # ------------------------------------------------------------------ #
    def _fused_call(self, x, idx_all):
        return fused_executor_heads(
            x, idx_all, self.w_all, self.b_all,
            small_width=self.small_width, small_layout=self.small_layout,
            big_segments=self.big_segments, mask_cmd_types=MASK_CMD_TYPES)

    def compute_prob_packed(self, features):
        """Packed lane-padded probs + layout; avoids per-head slice copies."""
        B, U, H = features.shape
        x = features.reshape(B * U, H)
        idx_dummy = jnp.zeros((B * U, 8), jnp.int32)
        prob_all, _ = self._fused_call(x, idx_dummy)
        return prob_all.reshape(B, U, self.k_total), dict(self.head_loc)

    # executor.compute_prob equivalent.  NOTE: materializing the per-head
    # slices re-reads the packed (bf16) prob array; consumers that can work
    # with the packed layout should use compute_prob_packed() instead.
    def compute_prob(self, features):
        prob_all, head_loc = self.compute_prob_packed(features)
        return {name: prob_all[..., off:off + K]
                for name, (off, K) in head_loc.items()}

    # One fused call: probs + per-head log-probs + masks + masked log-prob sum
    def _fused_forward(self, batch):
        features = batch["features"]
        B, U, H = features.shape
        x = features.reshape(B * U, H)

        cmd_type = batch["current_cmd_type"].astype(jnp.int32)
        gather_idx = batch["current_cmd_gather_idx"].astype(jnp.int32)
        attack_idx = batch["current_cmd_attack_idx"].astype(jnp.int32)
        unit_type = batch["current_cmd_unit_type"].astype(jnp.int32)
        building_type = batch["current_cmd_unit_type"].astype(jnp.int32)
        loc = (batch["current_cmd_y"] * 32 + batch["current_cmd_x"]).astype(jnp.int32)

        # Clamp to each head's class range: torch.gather would raise on OOB,
        # the in-kernel masked gather would otherwise silently return garbage.
        sizes = [self.head_sizes[n] for n in HEAD_ORDER]
        idx_cols = [cmd_type, gather_idx, attack_idx, unit_type, building_type,
                    loc, loc]
        idx_cols = [jnp.clip(c, 0, k - 1) for c, k in zip(idx_cols, sizes)]
        idx_cols.append(jnp.zeros_like(cmd_type))           # pad to 8 columns
        idx_all = jnp.stack([c.reshape(B * U) for c in idx_cols], axis=1)

        prob_all, lp_packed = self._fused_call(x, idx_all)

        executor_reply = {
            name: prob_all[:, off:off + K].reshape(B, U, K)
            for name, (off, K) in self.head_loc.items()}

        log_probs = {n: lp_packed[:, i].reshape(B, U)
                     for i, n in enumerate(LP_NAMES)}
        log_prob_sum = lp_packed[:, len(LP_NAMES)].reshape(B, U)

        masks = {
            "gather_idx": cmd_type == CMD_TARGET_GATHER,
            "attack_idx": cmd_type == CMD_TARGET_ATTACK,
            "unit_type": cmd_type == CMD_TARGET_BUILD_UNIT,
            "building_type": cmd_type == CMD_TARGET_BUILD_BUILDING,
            "building_loc": cmd_type == CMD_TARGET_BUILD_BUILDING,
            "move_loc": cmd_type == CMD_TARGET_MOVE,
        }
        return executor_reply, log_probs, masks, log_prob_sum

    # format_reply equivalent (pure dict glue)
    @staticmethod
    def format_reply(batch, coach_reply, executor_reply):
        reply = dict(coach_reply)
        reply.update(executor_reply)
        reply["num_unit"] = batch["num_army"]
        return reply

    def forward(self, batch):
        # TODO(synk): coach.sample / _get_human_instruction (RNG + string I/O) not ported.
        coach_reply = {}
        executor_reply, log_probs, masks, log_prob_sum = self._fused_forward(batch)
        batch["log_prob_sum"] = log_prob_sum
        reply = self.format_reply(batch, coach_reply, executor_reply)
        batch.update(reply)
        return reply, log_probs, masks, log_prob_sum


# ----------------------------------------------------------------------------
# main
# ----------------------------------------------------------------------------
if __name__ == "__main__":
    B, U, H, NUM_UNIT_TYPES = 2, 8, 32, 8
    key = jax.random.PRNGKey(0)
    k_feat, k_param, k1, k2, k3, k4, k5, k6, k7 = jax.random.split(key, 9)

    batch = {
        "features": jax.random.normal(k_feat, (B, U, H), jnp.float32),
        "current_cmd_type": jax.random.randint(k1, (B, U), 0, NUM_CMD_TYPES),
        "current_cmd_gather_idx": jax.random.randint(k2, (B, U), 0, U),
        "current_cmd_attack_idx": jax.random.randint(k3, (B, U), 0, U),
        "current_cmd_unit_type": jax.random.randint(k4, (B, U), 0, NUM_UNIT_TYPES),
        "current_cmd_x": jax.random.randint(k5, (B, U), 0, MAP_X),
        "current_cmd_y": jax.random.randint(k6, (B, U), 0, MAP_Y),
        "num_army": jax.random.randint(k7, (B, 1), 1, U + 1),
    }

    model = ExecutorWrapper(num_units=U, num_unit_types=NUM_UNIT_TYPES,
                            hidden=H, key=k_param)

    reply, log_probs, masks, log_prob_sum = model.forward(batch)
    log_prob_sum = jax.block_until_ready(log_prob_sum)

    # ---- correctness check vs. pure-JAX reference (bf16 matmul, f32 math) ----
    x2 = batch["features"].reshape(B * U, H).astype(jnp.bfloat16)

    def ref_logits(name):
        w, b = model.params[name]
        return (jnp.dot(x2, w.astype(jnp.bfloat16),
                        preferred_element_type=jnp.float32) + b).reshape(B, U, -1)

    loc = batch["current_cmd_y"] * 32 + batch["current_cmd_x"]
    idx_map = {
        "cmd_type": ("cmd_type_prob", batch["current_cmd_type"]),
        "gather_idx": ("gather_idx_prob", batch["current_cmd_gather_idx"]),
        "attack_idx": ("attack_idx_prob", batch["current_cmd_attack_idx"]),
        "unit_type": ("unit_type_prob", batch["current_cmd_unit_type"]),
        "building_type": ("building_type_prob", batch["current_cmd_unit_type"]),
        "building_loc": ("building_loc_prob", loc),
        "move_loc": ("move_loc_prob", loc),
    }

    ref_lp = {}
    for lp_name, (head, idx) in idx_map.items():
        lg = ref_logits(head)
        ref_p = jax.nn.softmax(lg, axis=-1)
        # kernel probs are bf16 + approx reciprocal -> generous tolerance
        assert jnp.allclose(reply[head].astype(jnp.float32), ref_p,
                            rtol=2e-2, atol=2e-3), head
        ref_lp[lp_name] = jnp.take_along_axis(
            jax.nn.log_softmax(lg, axis=-1), idx[..., None], axis=2)[..., 0]
        assert jnp.allclose(log_probs[lp_name], ref_lp[lp_name],
                            rtol=2e-2, atol=2e-3), lp_name

    ref_sum = ref_lp["cmd_type"]
    for k, m in masks.items():
        ref_sum = ref_sum + jnp.where(m, ref_lp[k], 0.0)
    assert jnp.allclose(log_prob_sum, ref_sum, rtol=2e-2, atol=2e-3)
    assert log_prob_sum.shape == (B, U)

    print("KERNEL_OK")
</pallas_src>

<mosaic_0001>
module attributes {stable_mosaic.version = 11 : i64} {
  func.func @_fused_heads_kernel(%arg0: i32, %arg1: memref<16x32xf32, #tpu.memory_space<vmem>>, %arg2: memref<32x2176xbf16, #tpu.memory_space<vmem>>, %arg3: memref<1x2176xf32, #tpu.memory_space<vmem>>, %arg4: memref<16x8xi32, #tpu.memory_space<vmem>>, %arg5: memref<16x2176xbf16, #tpu.memory_space<vmem>>, %arg6: memref<16x128xf32, #tpu.memory_space<vmem>>) attributes {dimension_semantics = [#tpu.dimension_semantics<parallel>], iteration_bounds = array<i64: 1>, scalar_prefetch = 0 : i64, scratch_operands = 0 : i64, tpu.core_type = #tpu.core_type<tc>, window_params = [{transform_indices = @transform_0, window_bounds = array<i64: 16, 32>}, {pipeline_mode = #tpu.pipeline_mode<synchronous>, transform_indices = @transform_1, window_bounds = array<i64: 32, 2176>}, {pipeline_mode = #tpu.pipeline_mode<synchronous>, transform_indices = @transform_2, window_bounds = array<i64: 1, 2176>}, {transform_indices = @transform_3, window_bounds = array<i64: 16, 8>}, {transform_indices = @transform_4, window_bounds = array<i64: 16, 2176>}, {transform_indices = @transform_5, window_bounds = array<i64: 16, 128>}]} {
    %c0 = arith.constant 0 : index
    %c0_0 = arith.constant 0 : index
    %0 = vector.load %arg1[%c0, %c0_0] : memref<16x32xf32, #tpu.memory_space<vmem>>, vector<16x32xf32>
    %1 = arith.truncf %0 : vector<16x32xf32> to vector<16x32xbf16>
    %c0_1 = arith.constant 0 : index
    %c0_2 = arith.constant 0 : index
    %2 = vector.load %arg4[%c0_1, %c0_2] : memref<16x8xi32, #tpu.memory_space<vmem>>, vector<16x8xi32>
    %3 = vector.extract_strided_slice %2 {offsets = [0, 0], sizes = [16, 1], strides = [1, 1]} : vector<16x8xi32> to vector<16x1xi32>
    %c0_3 = arith.constant 0 : index
    %c0_4 = arith.constant 0 : index
    %4 = vector.load %arg2[%c0_3, %c0_4] : memref<32x2176xbf16, #tpu.memory_space<vmem>>, vector<32x128xbf16>
    %cst = arith.constant dense<0.000000e+00> : vector<16x128xf32>
    %5 = tpu.matmul %1, %4, %cst {dimension_numbers = #tpu.dot_dimension_numbers<[1], [0], [0], [1], [0, 0, 1, 1], [], []>} : vector<16x32xbf16>, vector<32x128xbf16>, vector<16x128xf32> -> vector<16x128xf32>
    %c0_5 = arith.constant 0 : index
    %c0_6 = arith.constant 0 : index
    %6 = vector.load %arg3[%c0_5, %c0_6] : memref<1x2176xf32, #tpu.memory_space<vmem>>, vector<1x128xf32>
    %7 = vector.broadcast %6 : vector<1x128xf32> to vector<16x128xf32>
    %8 = arith.addf %5, %7 : vector<16x128xf32>
    %9 = tpu.iota {dimensions = array<i32: 1>} : vector<16x128xi32>
    %cst_7 = arith.constant 0.000000e+00 : f32
    %10 = vector.broadcast %cst_7 : f32 to vector<16x128xf32>
    %c0_i32 = arith.constant 0 : i32
    %11 = vector.broadcast %c0_i32 : i32 to vector<16x128xi32>
    %12 = arith.cmpi sge, %9, %11 : vector<16x128xi32>
    %c6_i32 = arith.constant 6 : i32
    %13 = vector.broadcast %c6_i32 : i32 to vector<16x128xi32>
    %14 = arith.cmpi slt, %9, %13 : vector<16x128xi32>
    %15 = arith.andi %12, %14 : vector<16x128xi1>
    %cst_8 = arith.constant -1.000000e+30 : f32
    %16 = vector.broadcast %cst_8 : f32 to vector<16x128xf32>
    %17 = arith.select %15, %8, %16 : vector<16x128xi1>, vector<16x128xf32>
    %cst_9 = arith.constant dense<0xFF800000> : vector<16xf32>
    %18 = vector.multi_reduction <maximumf>, %17, %cst_9 [1] : vector<16x128xf32> to vector<16xf32>
    %19 = vector.shape_cast %18 : vector<16xf32> to vector<16x1xf32>
    %20 = vector.shape_cast %19 : vector<16x1xf32> to vector<16x1xf32>
    %21 = vector.broadcast %20 : vector<16x1xf32> to vector<16x128xf32>
    %22 = arith.select %15, %21, %10 : vector<16x128xi1>, vector<16x128xf32>
    %c6_i32_10 = arith.constant 6 : i32
    %23 = vector.broadcast %c6_i32_10 : i32 to vector<16x128xi32>
    %24 = arith.cmpi sge, %9, %23 : vector<16x128xi32>
    %c14_i32 = arith.constant 14 : i32
    %25 = vector.broadcast %c14_i32 : i32 to vector<16x128xi32>
    %26 = arith.cmpi slt, %9, %25 : vector<16x128xi32>
    %27 = arith.andi %24, %26 : vector<16x128xi1>
    %cst_11 = arith.constant -1.000000e+30 : f32
    %28 = vector.broadcast %cst_11 : f32 to vector<16x128xf32>
    %29 = arith.select %27, %8, %28 : vector<16x128xi1>, vector<16x128xf32>
    %cst_12 = arith.constant dense<0xFF800000> : vector<16xf32>
    %30 = vector.multi_reduction <maximumf>, %29, %cst_12 [1] : vector<16x128xf32> to vector<16xf32>
    %31 = vector.shape_cast %30 : vector<16xf32> to vector<16x1xf32>
    %32 = vector.shape_cast %31 : vector<16x1xf32> to vector<16x1xf32>
    %33 = vector.broadcast %32 : vector<16x1xf32> to vector<16x128xf32>
    %34 = arith.select %27, %33, %22 : vector<16x128xi1>, vector<16x128xf32>
    %c14_i32_13 = arith.constant 14 : i32
    %35 = vector.broadcast %c14_i32_13 : i32 to vector<16x128xi32>
    %36 = arith.cmpi sge, %9, %35 : vector<16x128xi32>
    %c22_i32 = arith.constant 22 : i32
    %37 = vector.broadcast %c22_i32 : i32 to vector<16x128xi32>
    %38 = arith.cmpi slt, %9, %37 : vector<16x128xi32>
    %39 = arith.andi %36, %38 : vector<16x128xi1>
    %cst_14 = arith.constant -1.000000e+30 : f32
    %40 = vector.broadcast %cst_14 : f32 to vector<16x128xf32>
    %41 = arith.select %39, %8, %40 : vector<16x128xi1>, vector<16x128xf32>
    %cst_15 = arith.constant dense<0xFF800000> : vector<16xf32>
    %42 = vector.multi_reduction <maximumf>, %41, %cst_15 [1] : vector<16x128xf32> to vector<16xf32>
    %43 = vector.shape_cast %42 : vector<16xf32> to vector<16x1xf32>
    %44 = vector.shape_cast %43 : vector<16x1xf32> to vector<16x1xf32>
    %45 = vector.broadcast %44 : vector<16x1xf32> to vector<16x128xf32>
    %46 = arith.select %39, %45, %34 : vector<16x128xi1>, vector<16x128xf32>
    %c22_i32_16 = arith.constant 22 : i32
    %47 = vector.broadcast %c22_i32_16 : i32 to vector<16x128xi32>
    %48 = arith.cmpi sge, %9, %47 : vector<16x128xi32>
    %c30_i32 = arith.constant 30 : i32
    %49 = vector.broadcast %c30_i32 : i32 to vector<16x128xi32>
    %50 = arith.cmpi slt, %9, %49 : vector<16x128xi32>
    %51 = arith.andi %48, %50 : vector<16x128xi1>
    %cst_17 = arith.constant -1.000000e+30 : f32
    %52 = vector.broadcast %cst_17 : f32 to vector<16x128xf32>
    %53 = arith.select %51, %8, %52 : vector<16x128xi1>, vector<16x128xf32>
    %cst_18 = arith.constant dense<0xFF800000> : vector<16xf32>
    %54 = vector.multi_reduction <maximumf>, %53, %cst_18 [1] : vector<16x128xf32> to vector<16xf32>
    %55 = vector.shape_cast %54 : vector<16xf32> to vector<16x1xf32>
    %56 = vector.shape_cast %55 : vector<16x1xf32> to vector<16x1xf32>
    %57 = vector.broadcast %56 : vector<16x1xf32> to vector<16x128xf32>
    %58 = arith.select %51, %57, %46 : vector<16x128xi1>, vector<16x128xf32>
    %c30_i32_19 = arith.constant 30 : i32
    %59 = vector.broadcast %c30_i32_19 : i32 to vector<16x128xi32>
    %60 = arith.cmpi sge, %9, %59 : vector<16x128xi32>
    %c38_i32 = arith.constant 38 : i32
    %61 = vector.broadcast %c38_i32 : i32 to vector<16x128xi32>
    %62 = arith.cmpi slt, %9, %61 : vector<16x128xi32>
    %63 = arith.andi %60, %62 : vector<16x128xi1>
    %cst_20 = arith.constant -1.000000e+30 : f32
    %64 = vector.broadcast %cst_20 : f32 to vector<16x128xf32>
    %65 = arith.select %63, %8, %64 : vector<16x128xi1>, vector<16x128xf32>
    %cst_21 = arith.constant dense<0xFF800000> : vector<16xf32>
    %66 = vector.multi_reduction <maximumf>, %65, %cst_21 [1] : vector<16x128xf32> to vector<16xf32>
    %67 = vector.shape_cast %66 : vector<16xf32> to vector<16x1xf32>
    %68 = vector.shape_cast %67 : vector<16x1xf32> to vector<16x1xf32>
    %69 = vector.broadcast %68 : vector<16x1xf32> to vector<16x128xf32>
    %70 = arith.select %63, %69, %58 : vector<16x128xi1>, vector<16x128xf32>
    %71 = arith.subf %8, %70 : vector<16x128xf32>
    %72 = math.exp %71 : vector<16x128xf32>
    %cst_22 = arith.constant 0.000000e+00 : f32
    %73 = vector.broadcast %cst_22 : f32 to vector<16x128xf32>
    %cst_23 = arith.constant 0.000000e+00 : f32
    %74 = vector.broadcast %cst_23 : f32 to vector<16x128xf32>
    %75 = arith.select %15, %72, %74 : vector<16x128xi1>, vector<16x128xf32>
    %cst_24 = arith.constant dense<0.000000e+00> : vector<16xf32>
    %76 = vector.multi_reduction <add>, %75, %cst_24 [1] : vector<16x128xf32> to vector<16xf32>
    %77 = vector.shape_cast %76 : vector<16xf32> to vector<16x1xf32>
    %78 = tpu.reciprocal %77 {approx = true} : vector<16x1xf32> -> vector<16x1xf32>
    %79 = vector.broadcast %78 : vector<16x1xf32> to vector<16x128xf32>
    %80 = arith.mulf %75, %79 : vector<16x128xf32>
    %81 = arith.addf %73, %80 : vector<16x128xf32>
    %82 = vector.extract_strided_slice %2 {offsets = [0, 0], sizes = [16, 1], strides = [1, 1]} : vector<16x8xi32> to vector<16x1xi32>
    %c0_i32_25 = arith.constant 0 : i32
    %83 = vector.broadcast %c0_i32_25 : i32 to vector<16x1xi32>
    %84 = arith.addi %82, %83 : vector<16x1xi32>
    %85 = vector.broadcast %84 : vector<16x1xi32> to vector<16x128xi32>
    %86 = arith.cmpi eq, %9, %85 : vector<16x128xi32>
    %cst_26 = arith.constant 0.000000e+00 : f32
    %87 = vector.broadcast %cst_26 : f32 to vector<16x128xf32>
    %88 = arith.select %86, %8, %87 : vector<16x128xi1>, vector<16x128xf32>
    %cst_27 = arith.constant dense<0.000000e+00> : vector<16xf32>
    %89 = vector.multi_reduction <add>, %88, %cst_27 [1] : vector<16x128xf32> to vector<16xf32>
    %90 = vector.shape_cast %89 : vector<16xf32> to vector<16x1xf32>
    %91 = arith.subf %90, %19 : vector<16x1xf32>
    %92 = math.log %77 : vector<16x1xf32>
    %93 = arith.subf %91, %92 : vector<16x1xf32>
    %cst_28 = arith.constant 0.000000e+00 : f32
    %94 = vector.broadcast %cst_28 : f32 to vector<16x128xf32>
    %95 = arith.select %27, %72, %94 : vector<16x128xi1>, vector<16x128xf32>
    %cst_29 = arith.constant dense<0.000000e+00> : vector<16xf32>
    %96 = vector.multi_reduction <add>, %95, %cst_29 [1] : vector<16x128xf32> to vector<16xf32>
    %97 = vector.shape_cast %96 : vector<16xf32> to vector<16x1xf32>
    %98 = tpu.reciprocal %97 {approx = true} : vector<16x1xf32> -> vector<16x1xf32>
    %99 = vector.broadcast %98 : vector<16x1xf32> to vector<16x128xf32>
    %100 = arith.mulf %95, %99 : vector<16x128xf32>
    %101 = arith.addf %81, %100 : vector<16x128xf32>
    %102 = vector.extract_strided_slice %2 {offsets = [0, 1], sizes = [16, 1], strides = [1, 1]} : vector<16x8xi32> to vector<16x1xi32>
    %c6_i32_30 = arith.constant 6 : i32
    %103 = vector.broadcast %c6_i32_30 : i32 to vector<16x1xi32>
    %104 = arith.addi %102, %103 : vector<16x1xi32>
    %105 = vector.broadcast %104 : vector<16x1xi32> to vector<16x128xi32>
    %106 = arith.cmpi eq, %9, %105 : vector<16x128xi32>
    %cst_31 = arith.constant 0.000000e+00 : f32
    %107 = vector.broadcast %cst_31 : f32 to vector<16x128xf32>
    %108 = arith.select %106, %8, %107 : vector<16x128xi1>, vector<16x128xf32>
    %cst_32 = arith.constant dense<0.000000e+00> : vector<16xf32>
    %109 = vector.multi_reduction <add>, %108, %cst_32 [1] : vector<16x128xf32> to vector<16xf32>
    %110 = vector.shape_cast %109 : vector<16xf32> to vector<16x1xf32>
    %111 = arith.subf %110, %31 : vector<16x1xf32>
    %112 = math.log %97 : vector<16x1xf32>
    %113 = arith.subf %111, %112 : vector<16x1xf32>
    %cst_33 = arith.constant 0.000000e+00 : f32
    %114 = vector.broadcast %cst_33 : f32 to vector<16x128xf32>
    %115 = arith.select %39, %72, %114 : vector<16x128xi1>, vector<16x128xf32>
    %cst_34 = arith.constant dense<0.000000e+00> : vector<16xf32>
    %116 = vector.multi_reduction <add>, %115, %cst_34 [1] : vector<16x128xf32> to vector<16xf32>
    %117 = vector.shape_cast %116 : vector<16xf32> to vector<16x1xf32>
    %118 = tpu.reciprocal %117 {approx = true} : vector<16x1xf32> -> vector<16x1xf32>
    %119 = vector.broadcast %118 : vector<16x1xf32> to vector<16x128xf32>
    %120 = arith.mulf %115, %119 : vector<16x128xf32>
    %121 = arith.addf %101, %120 : vector<16x128xf32>
    %122 = vector.extract_strided_slice %2 {offsets = [0, 2], sizes = [16, 1], strides = [1, 1]} : vector<16x8xi32> to vector<16x1xi32>
    %c14_i32_35 = arith.constant 14 : i32
    %123 = vector.broadcast %c14_i32_35 : i32 to vector<16x1xi32>
    %124 = arith.addi %122, %123 : vector<16x1xi32>
    %125 = vector.broadcast %124 : vector<16x1xi32> to vector<16x128xi32>
    %126 = arith.cmpi eq, %9, %125 : vector<16x128xi32>
    %cst_36 = arith.constant 0.000000e+00 : f32
    %127 = vector.broadcast %cst_36 : f32 to vector<16x128xf32>
    %128 = arith.select %126, %8, %127 : vector<16x128xi1>, vector<16x128xf32>
    %cst_37 = arith.constant dense<0.000000e+00> : vector<16xf32>
    %129 = vector.multi_reduction <add>, %128, %cst_37 [1] : vector<16x128xf32> to vector<16xf32>
    %130 = vector.shape_cast %129 : vector<16xf32> to vector<16x1xf32>
    %131 = arith.subf %130, %43 : vector<16x1xf32>
    %132 = math.log %117 : vector<16x1xf32>
    %133 = arith.subf %131, %132 : vector<16x1xf32>
    %cst_38 = arith.constant 0.000000e+00 : f32
    %134 = vector.broadcast %cst_38 : f32 to vector<16x128xf32>
    %135 = arith.select %51, %72, %134 : vector<16x128xi1>, vector<16x128xf32>
    %cst_39 = arith.constant dense<0.000000e+00> : vector<16xf32>
    %136 = vector.multi_reduction <add>, %135, %cst_39 [1] : vector<16x128xf32> to vector<16xf32>
    %137 = vector.shape_cast %136 : vector<16xf32> to vector<16x1xf32>
    %138 = tpu.reciprocal %137 {approx = true} : vector<16x1xf32> -> vector<16x1xf32>
    %139 = vector.broadcast %138 : vector<16x1xf32> to vector<16x128xf32>
    %140 = arith.mulf %135, %139 : vector<16x128xf32>
    %141 = arith.addf %121, %140 : vector<16x128xf32>
    %142 = vector.extract_strided_slice %2 {offsets = [0, 3], sizes = [16, 1], strides = [1, 1]} : vector<16x8xi32> to vector<16x1xi32>
    %c22_i32_40 = arith.constant 22 : i32
    %143 = vector.broadcast %c22_i32_40 : i32 to vector<16x1xi32>
    %144 = arith.addi %142, %143 : vector<16x1xi32>
    %145 = vector.broadcast %144 : vector<16x1xi32> to vector<16x128xi32>
    %146 = arith.cmpi eq, %9, %145 : vector<16x128xi32>
    %cst_41 = arith.constant 0.000000e+00 : f32
    %147 = vector.broadcast %cst_41 : f32 to vector<16x128xf32>
    %148 = arith.select %146, %8, %147 : vector<16x128xi1>, vector<16x128xf32>
    %cst_42 = arith.constant dense<0.000000e+00> : vector<16xf32>
    %149 = vector.multi_reduction <add>, %148, %cst_42 [1] : vector<16x128xf32> to vector<16xf32>
    %150 = vector.shape_cast %149 : vector<16xf32> to vector<16x1xf32>
    %151 = arith.subf %150, %55 : vector<16x1xf32>
    %152 = math.log %137 : vector<16x1xf32>
    %153 = arith.subf %151, %152 : vector<16x1xf32>
    %cst_43 = arith.constant 0.000000e+00 : f32
    %154 = vector.broadcast %cst_43 : f32 to vector<16x128xf32>
    %155 = arith.select %63, %72, %154 : vector<16x128xi1>, vector<16x128xf32>
    %cst_44 = arith.constant dense<0.000000e+00> : vector<16xf32>
    %156 = vector.multi_reduction <add>, %155, %cst_44 [1] : vector<16x128xf32> to vector<16xf32>
    %157 = vector.shape_cast %156 : vector<16xf32> to vector<16x1xf32>
    %158 = tpu.reciprocal %157 {approx = true} : vector<16x1xf32> -> vector<16x1xf32>
    %159 = vector.broadcast %158 : vector<16x1xf32> to vector<16x128xf32>
    %160 = arith.mulf %155, %159 : vector<16x128xf32>
    %161 = arith.addf %141, %160 : vector<16x128xf32>
    %162 = vector.extract_strided_slice %2 {offsets = [0, 4], sizes = [16, 1], strides = [1, 1]} : vector<16x8xi32> to vector<16x1xi32>
    %c30_i32_45 = arith.constant 30 : i32
    %163 = vector.broadcast %c30_i32_45 : i32 to vector<16x1xi32>
    %164 = arith.addi %162, %163 : vector<16x1xi32>
    %165 = vector.broadcast %164 : vector<16x1xi32> to vector<16x128xi32>
    %166 = arith.cmpi eq, %9, %165 : vector<16x128xi32>
    %cst_46 = arith.constant 0.000000e+00 : f32
    %167 = vector.broadcast %cst_46 : f32 to vector<16x128xf32>
    %168 = arith.select %166, %8, %167 : vector<16x128xi1>, vector<16x128xf32>
    %cst_47 = arith.constant dense<0.000000e+00> : vector<16xf32>
    %169 = vector.multi_reduction <add>, %168, %cst_47 [1] : vector<16x128xf32> to vector<16xf32>
    %170 = vector.shape_cast %169 : vector<16xf32> to vector<16x1xf32>
    %171 = arith.subf %170, %67 : vector<16x1xf32>
    %172 = math.log %157 : vector<16x1xf32>
    %173 = arith.subf %171, %172 : vector<16x1xf32>
    %174 = arith.truncf %161 : vector<16x128xf32> to vector<16x128xbf16>
    %c0_48 = arith.constant 0 : index
    %c0_49 = arith.constant 0 : index
    %175 = vector.load %arg5[%c0_48, %c0_49] : memref<16x2176xbf16, #tpu.memory_space<vmem>>, vector<16x128xbf16>
    tpu.vector_store %arg5[%c0_48, %c0_49], %174 {strides = array<i32>} : memref<16x2176xbf16, #tpu.memory_space<vmem>>, vector<16x128xbf16>,
    %c0_50 = arith.constant 0 : index
    %c128 = arith.constant 128 : index
    %176 = vector.load %arg2[%c0_50, %c128] : memref<32x2176xbf16, #tpu.memory_space<vmem>>, vector<32x1024xbf16>
    %cst_51 = arith.constant dense<0.000000e+00> : vector<16x1024xf32>
    %177 = tpu.matmul %1, %176, %cst_51 {dimension_numbers = #tpu.dot_dimension_numbers<[1], [0], [0], [1], [0, 0, 1, 1], [], []>} : vector<16x32xbf16>, vector<32x1024xbf16>, vector<16x1024xf32> -> vector<16x1024xf32>
    %c0_52 = arith.constant 0 : index
    %c128_53 = arith.constant 128 : index
    %178 = vector.load %arg3[%c0_52, %c128_53] : memref<1x2176xf32, #tpu.memory_space<vmem>>, vector<1x1024xf32>
    %179 = vector.broadcast %178 : vector<1x1024xf32> to vector<16x1024xf32>
    %180 = arith.addf %177, %179 : vector<16x1024xf32>
    %cst_54 = arith.constant dense<0xFF800000> : vector<16xf32>
    %181 = vector.multi_reduction <maximumf>, %180, %cst_54 [1] : vector<16x1024xf32> to vector<16xf32>
    %182 = vector.shape_cast %181 : vector<16xf32> to vector<16x1xf32>
    %183 = vector.broadcast %182 : vector<16x1xf32> to vector<16x1024xf32>
    %184 = arith.subf %180, %183 : vector<16x1024xf32>
    %185 = math.exp %184 : vector<16x1024xf32>
    %cst_55 = arith.constant dense<0.000000e+00> : vector<16xf32>
    %186 = vector.multi_reduction <add>, %185, %cst_55 [1] : vector<16x1024xf32> to vector<16xf32>
    %187 = vector.shape_cast %186 : vector<16xf32> to vector<16x1xf32>
    %188 = tpu.reciprocal %187 {approx = true} : vector<16x1xf32> -> vector<16x1xf32>
    %189 = vector.broadcast %188 : vector<16x1xf32> to vector<16x1024xf32>
    %190 = arith.mulf %185, %189 : vector<16x1024xf32>
    %191 = arith.truncf %190 : vector<16x1024xf32> to vector<16x1024xbf16>
    %c0_56 = arith.constant 0 : index
    %c128_57 = arith.constant 128 : index
    %192 = vector.load %arg5[%c0_56, %c128_57] : memref<16x2176xbf16, #tpu.memory_space<vmem>>, vector<16x1024xbf16>
    tpu.vector_store %arg5[%c0_56, %c128_57], %191 {strides = array<i32>} : memref<16x2176xbf16, #tpu.memory_space<vmem>>, vector<16x1024xbf16>,
    %193 = tpu.iota {dimensions = array<i32: 1>} : vector<16x1024xi32>
    %194 = vector.extract_strided_slice %2 {offsets = [0, 5], sizes = [16, 1], strides = [1, 1]} : vector<16x8xi32> to vector<16x1xi32>
    %195 = vector.broadcast %194 : vector<16x1xi32> to vector<16x1024xi32>
    %196 = arith.cmpi eq, %193, %195 : vector<16x1024xi32>
    %cst_58 = arith.constant 0.000000e+00 : f32
    %197 = vector.broadcast %cst_58 : f32 to vector<16x1024xf32>
    %198 = arith.select %196, %180, %197 : vector<16x1024xi1>, vector<16x1024xf32>
    %cst_59 = arith.constant dense<0.000000e+00> : vector<16xf32>
    %199 = vector.multi_reduction <add>, %198, %cst_59 [1] : vector<16x1024xf32> to vector<16xf32>
    %200 = vector.shape_cast %199 : vector<16xf32> to vector<16x1xf32>
    %201 = arith.subf %200, %182 : vector<16x1xf32>
    %202 = math.log %187 : vector<16x1xf32>
    %203 = arith.subf %201, %202 : vector<16x1xf32>
    %c0_60 = arith.constant 0 : index
    %c1152 = arith.constant 1152 : index
    %204 = vector.load %arg2[%c0_60, %c1152] : memref<32x2176xbf16, #tpu.memory_space<vmem>>, vector<32x1024xbf16>
    %cst_61 = arith.constant dense<0.000000e+00> : vector<16x1024xf32>
    %205 = tpu.matmul %1, %204, %cst_61 {dimension_numbers = #tpu.dot_dimension_numbers<[1], [0], [0], [1], [0, 0, 1, 1], [], []>} : vector<16x32xbf16>, vector<32x1024xbf16>, vector<16x1024xf32> -> vector<16x1024xf32>
    %c0_62 = arith.constant 0 : index
    %c1152_63 = arith.constant 1152 : index
    %206 = vector.load %arg3[%c0_62, %c1152_63] : memref<1x2176xf32, #tpu.memory_space<vmem>>, vector<1x1024xf32>
    %207 = vector.broadcast %206 : vector<1x1024xf32> to vector<16x1024xf32>
    %208 = arith.addf %205, %207 : vector<16x1024xf32>
    %cst_64 = arith.constant dense<0xFF800000> : vector<16xf32>
    %209 = vector.multi_reduction <maximumf>, %208, %cst_64 [1] : vector<16x1024xf32> to vector<16xf32>
    %210 = vector.shape_cast %209 : vector<16xf32> to vector<16x1xf32>
    %211 = vector.broadcast %210 : vector<16x1xf32> to vector<16x1024xf32>
    %212 = arith.subf %208, %211 : vector<16x1024xf32>
    %213 = math.exp %212 : vector<16x1024xf32>
    %cst_65 = arith.constant dense<0.000000e+00> : vector<16xf32>
    %214 = vector.multi_reduction <add>, %213, %cst_65 [1] : vector<16x1024xf32> to vector<16xf32>
    %215 = vector.shape_cast %214 : vector<16xf32> to vector<16x1xf32>
    %216 = tpu.reciprocal %215 {approx = true} : vector<16x1xf32> -> vector<16x1xf32>
    %217 = vector.broadcast %216 : vector<16x1xf32> to vector<16x1024xf32>
    %218 = arith.mulf %213, %217 : vector<16x1024xf32>
    %219 = arith.truncf %218 : vector<16x1024xf32> to vector<16x1024xbf16>
    %c0_66 = arith.constant 0 : index
    %c1152_67 = arith.constant 1152 : index
    %220 = vector.load %arg5[%c0_66, %c1152_67] : memref<16x2176xbf16, #tpu.memory_space<vmem>>, vector<16x1024xbf16>
    tpu.vector_store %arg5[%c0_66, %c1152_67], %219 {strides = array<i32>} : memref<16x2176xbf16, #tpu.memory_space<vmem>>, vector<16x1024xbf16>,
    %221 = tpu.iota {dimensions = array<i32: 1>} : vector<16x1024xi32>
    %222 = vector.extract_strided_slice %2 {offsets = [0, 6], sizes = [16, 1], strides = [1, 1]} : vector<16x8xi32> to vector<16x1xi32>
    %223 = vector.broadcast %222 : vector<16x1xi32> to vector<16x1024xi32>
    %224 = arith.cmpi eq, %221, %223 : vector<16x1024xi32>
    %cst_68 = arith.constant 0.000000e+00 : f32
    %225 = vector.broadcast %cst_68 : f32 to vector<16x1024xf32>
    %226 = arith.select %224, %208, %225 : vector<16x1024xi1>, vector<16x1024xf32>
    %cst_69 = arith.constant dense<0.000000e+00> : vector<16xf32>
    %227 = vector.multi_reduction <add>, %226, %cst_69 [1] : vector<16x1024xf32> to vector<16xf32>
    %228 = vector.shape_cast %227 : vector<16xf32> to vector<16x1xf32>
    %229 = arith.subf %228, %210 : vector<16x1xf32>
    %230 = math.log %215 : vector<16x1xf32>
    %231 = arith.subf %229, %230 : vector<16x1xf32>
    %c1_i32 = arith.constant 1 : i32
    %232 = vector.broadcast %c1_i32 : i32 to vector<16x1xi32>
    %233 = arith.cmpi eq, %3, %232 : vector<16x1xi32>
    %234 = arith.extui %233 : vector<16x1xi1> to vector<16x1xi32>
    %235 = arith.sitofp %234 : vector<16x1xi32> to vector<16x1xf32>
    %236 = arith.mulf %235, %113 : vector<16x1xf32>
    %237 = arith.addf %93, %236 : vector<16x1xf32>
    %c2_i32 = arith.constant 2 : i32
    %238 = vector.broadcast %c2_i32 : i32 to vector<16x1xi32>
    %239 = arith.cmpi eq, %3, %238 : vector<16x1xi32>
    %240 = arith.extui %239 : vector<16x1xi1> to vector<16x1xi32>
    %241 = arith.sitofp %240 : vector<16x1xi32> to vector<16x1xf32>
    %242 = arith.mulf %241, %133 : vector<16x1xf32>
    %243 = arith.addf %237, %242 : vector<16x1xf32>
    %c4_i32 = arith.constant 4 : i32
    %244 = vector.broadcast %c4_i32 : i32 to vector<16x1xi32>
    %245 = arith.cmpi eq, %3, %244 : vector<16x1xi32>
    %246 = arith.extui %245 : vector<16x1xi1> to vector<16x1xi32>
    %247 = arith.sitofp %246 : vector<16x1xi32> to vector<16x1xf32>
    %248 = arith.mulf %247, %153 : vector<16x1xf32>
    %249 = arith.addf %243, %248 : vector<16x1xf32>
    %c3_i32 = arith.constant 3 : i32
    %250 = vector.broadcast %c3_i32 : i32 to vector<16x1xi32>
    %251 = arith.cmpi eq, %3, %250 : vector<16x1xi32>
    %252 = arith.extui %251 : vector<16x1xi1> to vector<16x1xi32>
    %253 = arith.sitofp %252 : vector<16x1xi32> to vector<16x1xf32>
    %254 = arith.mulf %253, %173 : vector<16x1xf32>
    %255 = arith.addf %249, %254 : vector<16x1xf32>
    %c3_i32_70 = arith.constant 3 : i32
    %256 = vector.broadcast %c3_i32_70 : i32 to vector<16x1xi32>
    %257 = arith.cmpi eq, %3, %256 : vector<16x1xi32>
    %258 = arith.extui %257 : vector<16x1xi1> to vector<16x1xi32>
    %259 = arith.sitofp %258 : vector<16x1xi32> to vector<16x1xf32>
    %260 = arith.mulf %259, %203 : vector<16x1xf32>
    %261 = arith.addf %255, %260 : vector<16x1xf32>
    %c5_i32 = arith.constant 5 : i32
    %262 = vector.broadcast %c5_i32 : i32 to vector<16x1xi32>
    %263 = arith.cmpi eq, %3, %262 : vector<16x1xi32>
    %264 = arith.extui %263 : vector<16x1xi1> to vector<16x1xi32>
    %265 = arith.sitofp %264 : vector<16x1xi32> to vector<16x1xf32>
    %266 = arith.mulf %265, %231 : vector<16x1xf32>
    %267 = arith.addf %261, %266 : vector<16x1xf32>
    %268 = tpu.iota {dimensions = array<i32: 1>} : vector<16x128xi32>
    %cst_71 = arith.constant 0.000000e+00 : f32
    %269 = vector.broadcast %cst_71 : f32 to vector<16x128xf32>
    %c0_i32_72 = arith.constant 0 : i32
    %270 = vector.broadcast %c0_i32_72 : i32 to vector<16x128xi32>
    %271 = arith.cmpi eq, %268, %270 : vector<16x128xi32>
    %272 = vector.shape_cast %93 : vector<16x1xf32> to vector<16x1xf32>
    %273 = vector.broadcast %272 : vector<16x1xf32> to vector<16x128xf32>
    %274 = arith.select %271, %273, %269 : vector<16x128xi1>, vector<16x128xf32>
    %c1_i32_73 = arith.constant 1 : i32
    %275 = vector.broadcast %c1_i32_73 : i32 to vector<16x128xi32>
    %276 = arith.cmpi eq, %268, %275 : vector<16x128xi32>
    %277 = vector.shape_cast %113 : vector<16x1xf32> to vector<16x1xf32>
    %278 = vector.broadcast %277 : vector<16x1xf32> to vector<16x128xf32>
    %279 = arith.select %276, %278, %274 : vector<16x128xi1>, vector<16x128xf32>
    %c2_i32_74 = arith.constant 2 : i32
    %280 = vector.broadcast %c2_i32_74 : i32 to vector<16x128xi32>
    %281 = arith.cmpi eq, %268, %280 : vector<16x128xi32>
    %282 = vector.shape_cast %133 : vector<16x1xf32> to vector<16x1xf32>
    %283 = vector.broadcast %282 : vector<16x1xf32> to vector<16x128xf32>
    %284 = arith.select %281, %283, %279 : vector<16x128xi1>, vector<16x128xf32>
    %c3_i32_75 = arith.constant 3 : i32
    %285 = vector.broadcast %c3_i32_75 : i32 to vector<16x128xi32>
    %286 = arith.cmpi eq, %268, %285 : vector<16x128xi32>
    %287 = vector.shape_cast %153 : vector<16x1xf32> to vector<16x1xf32>
    %288 = vector.broadcast %287 : vector<16x1xf32> to vector<16x128xf32>
    %289 = arith.select %286, %288, %284 : vector<16x128xi1>, vector<16x128xf32>
    %c4_i32_76 = arith.constant 4 : i32
    %290 = vector.broadcast %c4_i32_76 : i32 to vector<16x128xi32>
    %291 = arith.cmpi eq, %268, %290 : vector<16x128xi32>
    %292 = vector.shape_cast %173 : vector<16x1xf32> to vector<16x1xf32>
    %293 = vector.broadcast %292 : vector<16x1xf32> to vector<16x128xf32>
    %294 = arith.select %291, %293, %289 : vector<16x128xi1>, vector<16x128xf32>
    %c5_i32_77 = arith.constant 5 : i32
    %295 = vector.broadcast %c5_i32_77 : i32 to vector<16x128xi32>
    %296 = arith.cmpi eq, %268, %295 : vector<16x128xi32>
    %297 = vector.shape_cast %203 : vector<16x1xf32> to vector<16x1xf32>
    %298 = vector.broadcast %297 : vector<16x1xf32> to vector<16x128xf32>
    %299 = arith.select %296, %298, %294 : vector<16x128xi1>, vector<16x128xf32>
    %c6_i32_78 = arith.constant 6 : i32
    %300 = vector.broadcast %c6_i32_78 : i32 to vector<16x128xi32>
    %301 = arith.cmpi eq, %268, %300 : vector<16x128xi32>
    %302 = vector.shape_cast %231 : vector<16x1xf32> to vector<16x1xf32>
    %303 = vector.broadcast %302 : vector<16x1xf32> to vector<16x128xf32>
    %304 = arith.select %301, %303, %299 : vector<16x128xi1>, vector<16x128xf32>
    %c7_i32 = arith.constant 7 : i32
    %305 = vector.broadcast %c7_i32 : i32 to vector<16x128xi32>
    %306 = arith.cmpi eq, %268, %305 : vector<16x128xi32>
    %307 = vector.shape_cast %267 : vector<16x1xf32> to vector<16x1xf32>
    %308 = vector.broadcast %307 : vector<16x1xf32> to vector<16x128xf32>
    %309 = arith.select %306, %308, %304 : vector<16x128xi1>, vector<16x128xf32>
    %c0_79 = arith.constant 0 : index
    %c0_80 = arith.constant 0 : index
    %310 = vector.load %arg6[%c0_79, %c0_80] : memref<16x128xf32, #tpu.memory_space<vmem>>, vector<16x128xf32>
    tpu.vector_store %arg6[%c0_79, %c0_80], %309 {strides = array<i32>} : memref<16x128xf32, #tpu.memory_space<vmem>>, vector<16x128xf32>,
    return
  }
  func.func @transform_0(%arg0: i32) -> (i32, i32) {
    %c0_i32 = arith.constant 0 : i32
    %c0_i32_0 = arith.constant 0 : i32
    return %arg0, %c0_i32 : i32, i32
  }
  func.func @transform_1(%arg0: i32) -> (i32, i32) {
    %c0_i32 = arith.constant 0 : i32
    %c0_i32_0 = arith.constant 0 : i32
    %c0_i32_1 = arith.constant 0 : i32
    return %c0_i32, %c0_i32_0 : i32, i32
  }
  func.func @transform_2(%arg0: i32) -> (i32, i32) {
    %c0_i32 = arith.constant 0 : i32
    %c0_i32_0 = arith.constant 0 : i32
    %c0_i32_1 = arith.constant 0 : i32
    return %c0_i32, %c0_i32_0 : i32, i32
  }
  func.func @transform_3(%arg0: i32) -> (i32, i32) {
    %c0_i32 = arith.constant 0 : i32
    %c0_i32_0 = arith.constant 0 : i32
    return %arg0, %c0_i32 : i32, i32
  }
  func.func @transform_4(%arg0: i32) -> (i32, i32) {
    %c0_i32 = arith.constant 0 : i32
    %c0_i32_0 = arith.constant 0 : i32
    return %arg0, %c0_i32 : i32, i32
  }
  func.func @transform_5(%arg0: i32) -> (i32, i32) {
    %c0_i32 = arith.constant 0 : i32
    %c0_i32_0 = arith.constant 0 : i32
    return %arg0, %c0_i32 : i32, i32
  }
}

module attributes {stable_mosaic.version = 11 : i64} {
  func.func @_fused_heads_kernel(%arg0: i32, %arg1: memref<16x32xf32, #tpu.memory_space<vmem>>, %arg2: memref<32x2176xbf16, #tpu.memory_space<vmem>>, %arg3: memref<1x2176xf32, #tpu.memory_space<vmem>>, %arg4: memref<16x8xi32, #tpu.memory_space<vmem>>, %arg5: memref<16x2176xbf16, #tpu.memory_space<vmem>>, %arg6: memref<16x128xf32, #tpu.memory_space<vmem>>) attributes {dimension_semantics = [#tpu.dimension_semantics<parallel>], iteration_bounds = array<i64: 1>, scalar_prefetch = 0 : i64, scratch_operands = 0 : i64, tpu.core_type = #tpu.core_type<tc>, window_params = [{transform_indices = @transform_0, window_bounds = array<i64: 16, 32>}, {pipeline_mode = #tpu.pipeline_mode<synchronous>, transform_indices = @transform_1, window_bounds = array<i64: 32, 2176>}, {pipeline_mode = #tpu.pipeline_mode<synchronous>, transform_indices = @transform_2, window_bounds = array<i64: 1, 2176>}, {transform_indices = @transform_3, window_bounds = array<i64: 16, 8>}, {transform_indices = @transform_4, window_bounds = array<i64: 16, 2176>}, {transform_indices = @transform_5, window_bounds = array<i64: 16, 128>}]} {
    %c0 = arith.constant 0 : index
    %c0_0 = arith.constant 0 : index
    %0 = vector.load %arg1[%c0, %c0_0] : memref<16x32xf32, #tpu.memory_space<vmem>>, vector<16x32xf32>
    %1 = arith.truncf %0 : vector<16x32xf32> to vector<16x32xbf16>
    %c0_1 = arith.constant 0 : index
    %c0_2 = arith.constant 0 : index
    %2 = vector.load %arg4[%c0_1, %c0_2] : memref<16x8xi32, #tpu.memory_space<vmem>>, vector<16x8xi32>
    %3 = vector.extract_strided_slice %2 {offsets = [0, 0], sizes = [16, 1], strides = [1, 1]} : vector<16x8xi32> to vector<16x1xi32>
    %c0_3 = arith.constant 0 : index
    %c0_4 = arith.constant 0 : index
    %4 = vector.load %arg2[%c0_3, %c0_4] : memref<32x2176xbf16, #tpu.memory_space<vmem>>, vector<32x128xbf16>
    %cst = arith.constant dense<0.000000e+00> : vector<16x128xf32>
    %5 = tpu.matmul %1, %4, %cst {dimension_numbers = #tpu.dot_dimension_numbers<[1], [0], [0], [1], [0, 0, 1, 1], [], []>} : vector<16x32xbf16>, vector<32x128xbf16>, vector<16x128xf32> -> vector<16x128xf32>
    %c0_5 = arith.constant 0 : index
    %c0_6 = arith.constant 0 : index
    %6 = vector.load %arg3[%c0_5, %c0_6] : memref<1x2176xf32, #tpu.memory_space<vmem>>, vector<1x128xf32>
    %7 = vector.broadcast %6 : vector<1x128xf32> to vector<16x128xf32>
    %8 = arith.addf %5, %7 : vector<16x128xf32>
    %9 = tpu.iota {dimensions = array<i32: 1>} : vector<16x128xi32>
    %cst_7 = arith.constant 0.000000e+00 : f32
    %10 = vector.broadcast %cst_7 : f32 to vector<16x128xf32>
    %c0_i32 = arith.constant 0 : i32
    %11 = vector.broadcast %c0_i32 : i32 to vector<16x128xi32>
    %12 = arith.cmpi sge, %9, %11 : vector<16x128xi32>
    %c6_i32 = arith.constant 6 : i32
    %13 = vector.broadcast %c6_i32 : i32 to vector<16x128xi32>
    %14 = arith.cmpi slt, %9, %13 : vector<16x128xi32>
    %15 = arith.andi %12, %14 : vector<16x128xi1>
    %cst_8 = arith.constant -1.000000e+30 : f32
    %16 = vector.broadcast %cst_8 : f32 to vector<16x128xf32>
    %17 = arith.select %15, %8, %16 : vector<16x128xi1>, vector<16x128xf32>
    %cst_9 = arith.constant dense<0xFF800000> : vector<16xf32>
    %18 = vector.multi_reduction <maximumf>, %17, %cst_9 [1] : vector<16x128xf32> to vector<16xf32>
    %19 = vector.shape_cast %18 : vector<16xf32> to vector<16x1xf32>
    %20 = vector.shape_cast %19 : vector<16x1xf32> to vector<16x1xf32>
    %21 = vector.broadcast %20 : vector<16x1xf32> to vector<16x128xf32>
    %22 = arith.select %15, %21, %10 : vector<16x128xi1>, vector<16x128xf32>
    %c6_i32_10 = arith.constant 6 : i32
    %23 = vector.broadcast %c6_i32_10 : i32 to vector<16x128xi32>
    %24 = arith.cmpi sge, %9, %23 : vector<16x128xi32>
    %c14_i32 = arith.constant 14 : i32
    %25 = vector.broadcast %c14_i32 : i32 to vector<16x128xi32>
    %26 = arith.cmpi slt, %9, %25 : vector<16x128xi32>
    %27 = arith.andi %24, %26 : vector<16x128xi1>
    %cst_11 = arith.constant -1.000000e+30 : f32
    %28 = vector.broadcast %cst_11 : f32 to vector<16x128xf32>
    %29 = arith.select %27, %8, %28 : vector<16x128xi1>, vector<16x128xf32>
    %cst_12 = arith.constant dense<0xFF800000> : vector<16xf32>
    %30 = vector.multi_reduction <maximumf>, %29, %cst_12 [1] : vector<16x128xf32> to vector<16xf32>
    %31 = vector.shape_cast %30 : vector<16xf32> to vector<16x1xf32>
    %32 = vector.shape_cast %31 : vector<16x1xf32> to vector<16x1xf32>
    %33 = vector.broadcast %32 : vector<16x1xf32> to vector<16x128xf32>
    %34 = arith.select %27, %33, %22 : vector<16x128xi1>, vector<16x128xf32>
    %c14_i32_13 = arith.constant 14 : i32
    %35 = vector.broadcast %c14_i32_13 : i32 to vector<16x128xi32>
    %36 = arith.cmpi sge, %9, %35 : vector<16x128xi32>
    %c22_i32 = arith.constant 22 : i32
    %37 = vector.broadcast %c22_i32 : i32 to vector<16x128xi32>
    %38 = arith.cmpi slt, %9, %37 : vector<16x128xi32>
    %39 = arith.andi %36, %38 : vector<16x128xi1>
    %cst_14 = arith.constant -1.000000e+30 : f32
    %40 = vector.broadcast %cst_14 : f32 to vector<16x128xf32>
    %41 = arith.select %39, %8, %40 : vector<16x128xi1>, vector<16x128xf32>
    %cst_15 = arith.constant dense<0xFF800000> : vector<16xf32>
    %42 = vector.multi_reduction <maximumf>, %41, %cst_15 [1] : vector<16x128xf32> to vector<16xf32>
    %43 = vector.shape_cast %42 : vector<16xf32> to vector<16x1xf32>
    %44 = vector.shape_cast %43 : vector<16x1xf32> to vector<16x1xf32>
    %45 = vector.broadcast %44 : vector<16x1xf32> to vector<16x128xf32>
    %46 = arith.select %39, %45, %34 : vector<16x128xi1>, vector<16x128xf32>
    %c22_i32_16 = arith.constant 22 : i32
    %47 = vector.broadcast %c22_i32_16 : i32 to vector<16x128xi32>
    %48 = arith.cmpi sge, %9, %47 : vector<16x128xi32>
    %c30_i32 = arith.constant 30 : i32
    %49 = vector.broadcast %c30_i32 : i32 to vector<16x128xi32>
    %50 = arith.cmpi slt, %9, %49 : vector<16x128xi32>
    %51 = arith.andi %48, %50 : vector<16x128xi1>
    %cst_17 = arith.constant -1.000000e+30 : f32
    %52 = vector.broadcast %cst_17 : f32 to vector<16x128xf32>
    %53 = arith.select %51, %8, %52 : vector<16x128xi1>, vector<16x128xf32>
    %cst_18 = arith.constant dense<0xFF800000> : vector<16xf32>
    %54 = vector.multi_reduction <maximumf>, %53, %cst_18 [1] : vector<16x128xf32> to vector<16xf32>
    %55 = vector.shape_cast %54 : vector<16xf32> to vector<16x1xf32>
    %56 = vector.shape_cast %55 : vector<16x1xf32> to vector<16x1xf32>
    %57 = vector.broadcast %56 : vector<16x1xf32> to vector<16x128xf32>
    %58 = arith.select %51, %57, %46 : vector<16x128xi1>, vector<16x128xf32>
    %c30_i32_19 = arith.constant 30 : i32
    %59 = vector.broadcast %c30_i32_19 : i32 to vector<16x128xi32>
    %60 = arith.cmpi sge, %9, %59 : vector<16x128xi32>
    %c38_i32 = arith.constant 38 : i32
    %61 = vector.broadcast %c38_i32 : i32 to vector<16x128xi32>
    %62 = arith.cmpi slt, %9, %61 : vector<16x128xi32>
    %63 = arith.andi %60, %62 : vector<16x128xi1>
    %cst_20 = arith.constant -1.000000e+30 : f32
    %64 = vector.broadcast %cst_20 : f32 to vector<16x128xf32>
    %65 = arith.select %63, %8, %64 : vector<16x128xi1>, vector<16x128xf32>
    %cst_21 = arith.constant dense<0xFF800000> : vector<16xf32>
    %66 = vector.multi_reduction <maximumf>, %65, %cst_21 [1] : vector<16x128xf32> to vector<16xf32>
    %67 = vector.shape_cast %66 : vector<16xf32> to vector<16x1xf32>
    %68 = vector.shape_cast %67 : vector<16x1xf32> to vector<16x1xf32>
    %69 = vector.broadcast %68 : vector<16x1xf32> to vector<16x128xf32>
    %70 = arith.select %63, %69, %58 : vector<16x128xi1>, vector<16x128xf32>
    %71 = arith.subf %8, %70 : vector<16x128xf32>
    %72 = math.exp %71 : vector<16x128xf32>
    %cst_22 = arith.constant 0.000000e+00 : f32
    %73 = vector.broadcast %cst_22 : f32 to vector<16x128xf32>
    %cst_23 = arith.constant 0.000000e+00 : f32
    %74 = vector.broadcast %cst_23 : f32 to vector<16x128xf32>
    %75 = arith.select %15, %72, %74 : vector<16x128xi1>, vector<16x128xf32>
    %cst_24 = arith.constant dense<0.000000e+00> : vector<16xf32>
    %76 = vector.multi_reduction <add>, %75, %cst_24 [1] : vector<16x128xf32> to vector<16xf32>
    %77 = vector.shape_cast %76 : vector<16xf32> to vector<16x1xf32>
    %78 = tpu.reciprocal %77 {approx = true} : vector<16x1xf32> -> vector<16x1xf32>
    %79 = vector.broadcast %78 : vector<16x1xf32> to vector<16x128xf32>
    %80 = arith.mulf %75, %79 : vector<16x128xf32>
    %81 = arith.addf %73, %80 : vector<16x128xf32>
    %82 = vector.extract_strided_slice %2 {offsets = [0, 0], sizes = [16, 1], strides = [1, 1]} : vector<16x8xi32> to vector<16x1xi32>
    %c0_i32_25 = arith.constant 0 : i32
    %83 = vector.broadcast %c0_i32_25 : i32 to vector<16x1xi32>
    %84 = arith.addi %82, %83 : vector<16x1xi32>
    %85 = vector.broadcast %84 : vector<16x1xi32> to vector<16x128xi32>
    %86 = arith.cmpi eq, %9, %85 : vector<16x128xi32>
    %cst_26 = arith.constant 0.000000e+00 : f32
    %87 = vector.broadcast %cst_26 : f32 to vector<16x128xf32>
    %88 = arith.select %86, %8, %87 : vector<16x128xi1>, vector<16x128xf32>
    %cst_27 = arith.constant dense<0.000000e+00> : vector<16xf32>
    %89 = vector.multi_reduction <add>, %88, %cst_27 [1] : vector<16x128xf32> to vector<16xf32>
    %90 = vector.shape_cast %89 : vector<16xf32> to vector<16x1xf32>
    %91 = arith.subf %90, %19 : vector<16x1xf32>
    %92 = math.log %77 : vector<16x1xf32>
    %93 = arith.subf %91, %92 : vector<16x1xf32>
    %cst_28 = arith.constant 0.000000e+00 : f32
    %94 = vector.broadcast %cst_28 : f32 to vector<16x128xf32>
    %95 = arith.select %27, %72, %94 : vector<16x128xi1>, vector<16x128xf32>
    %cst_29 = arith.constant dense<0.000000e+00> : vector<16xf32>
    %96 = vector.multi_reduction <add>, %95, %cst_29 [1] : vector<16x128xf32> to vector<16xf32>
    %97 = vector.shape_cast %96 : vector<16xf32> to vector<16x1xf32>
    %98 = tpu.reciprocal %97 {approx = true} : vector<16x1xf32> -> vector<16x1xf32>
    %99 = vector.broadcast %98 : vector<16x1xf32> to vector<16x128xf32>
    %100 = arith.mulf %95, %99 : vector<16x128xf32>
    %101 = arith.addf %81, %100 : vector<16x128xf32>
    %102 = vector.extract_strided_slice %2 {offsets = [0, 1], sizes = [16, 1], strides = [1, 1]} : vector<16x8xi32> to vector<16x1xi32>
    %c6_i32_30 = arith.constant 6 : i32
    %103 = vector.broadcast %c6_i32_30 : i32 to vector<16x1xi32>
    %104 = arith.addi %102, %103 : vector<16x1xi32>
    %105 = vector.broadcast %104 : vector<16x1xi32> to vector<16x128xi32>
    %106 = arith.cmpi eq, %9, %105 : vector<16x128xi32>
    %cst_31 = arith.constant 0.000000e+00 : f32
    %107 = vector.broadcast %cst_31 : f32 to vector<16x128xf32>
    %108 = arith.select %106, %8, %107 : vector<16x128xi1>, vector<16x128xf32>
    %cst_32 = arith.constant dense<0.000000e+00> : vector<16xf32>
    %109 = vector.multi_reduction <add>, %108, %cst_32 [1] : vector<16x128xf32> to vector<16xf32>
    %110 = vector.shape_cast %109 : vector<16xf32> to vector<16x1xf32>
    %111 = arith.subf %110, %31 : vector<16x1xf32>
    %112 = math.log %97 : vector<16x1xf32>
    %113 = arith.subf %111, %112 : vector<16x1xf32>
    %cst_33 = arith.constant 0.000000e+00 : f32
    %114 = vector.broadcast %cst_33 : f32 to vector<16x128xf32>
    %115 = arith.select %39, %72, %114 : vector<16x128xi1>, vector<16x128xf32>
    %cst_34 = arith.constant dense<0.000000e+00> : vector<16xf32>
    %116 = vector.multi_reduction <add>, %115, %cst_34 [1] : vector<16x128xf32> to vector<16xf32>
    %117 = vector.shape_cast %116 : vector<16xf32> to vector<16x1xf32>
    %118 = tpu.reciprocal %117 {approx = true} : vector<16x1xf32> -> vector<16x1xf32>
    %119 = vector.broadcast %118 : vector<16x1xf32> to vector<16x128xf32>
    %120 = arith.mulf %115, %119 : vector<16x128xf32>
    %121 = arith.addf %101, %120 : vector<16x128xf32>
    %122 = vector.extract_strided_slice %2 {offsets = [0, 2], sizes = [16, 1], strides = [1, 1]} : vector<16x8xi32> to vector<16x1xi32>
    %c14_i32_35 = arith.constant 14 : i32
    %123 = vector.broadcast %c14_i32_35 : i32 to vector<16x1xi32>
    %124 = arith.addi %122, %123 : vector<16x1xi32>
    %125 = vector.broadcast %124 : vector<16x1xi32> to vector<16x128xi32>
    %126 = arith.cmpi eq, %9, %125 : vector<16x128xi32>
    %cst_36 = arith.constant 0.000000e+00 : f32
    %127 = vector.broadcast %cst_36 : f32 to vector<16x128xf32>
    %128 = arith.select %126, %8, %127 : vector<16x128xi1>, vector<16x128xf32>
    %cst_37 = arith.constant dense<0.000000e+00> : vector<16xf32>
    %129 = vector.multi_reduction <add>, %128, %cst_37 [1] : vector<16x128xf32> to vector<16xf32>
    %130 = vector.shape_cast %129 : vector<16xf32> to vector<16x1xf32>
    %131 = arith.subf %130, %43 : vector<16x1xf32>
    %132 = math.log %117 : vector<16x1xf32>
    %133 = arith.subf %131, %132 : vector<16x1xf32>
    %cst_38 = arith.constant 0.000000e+00 : f32
    %134 = vector.broadcast %cst_38 : f32 to vector<16x128xf32>
    %135 = arith.select %51, %72, %134 : vector<16x128xi1>, vector<16x128xf32>
    %cst_39 = arith.constant dense<0.000000e+00> : vector<16xf32>
    %136 = vector.multi_reduction <add>, %135, %cst_39 [1] : vector<16x128xf32> to vector<16xf32>
    %137 = vector.shape_cast %136 : vector<16xf32> to vector<16x1xf32>
    %138 = tpu.reciprocal %137 {approx = true} : vector<16x1xf32> -> vector<16x1xf32>
    %139 = vector.broadcast %138 : vector<16x1xf32> to vector<16x128xf32>
    %140 = arith.mulf %135, %139 : vector<16x128xf32>
    %141 = arith.addf %121, %140 : vector<16x128xf32>
    %142 = vector.extract_strided_slice %2 {offsets = [0, 3], sizes = [16, 1], strides = [1, 1]} : vector<16x8xi32> to vector<16x1xi32>
    %c22_i32_40 = arith.constant 22 : i32
    %143 = vector.broadcast %c22_i32_40 : i32 to vector<16x1xi32>
    %144 = arith.addi %142, %143 : vector<16x1xi32>
    %145 = vector.broadcast %144 : vector<16x1xi32> to vector<16x128xi32>
    %146 = arith.cmpi eq, %9, %145 : vector<16x128xi32>
    %cst_41 = arith.constant 0.000000e+00 : f32
    %147 = vector.broadcast %cst_41 : f32 to vector<16x128xf32>
    %148 = arith.select %146, %8, %147 : vector<16x128xi1>, vector<16x128xf32>
    %cst_42 = arith.constant dense<0.000000e+00> : vector<16xf32>
    %149 = vector.multi_reduction <add>, %148, %cst_42 [1] : vector<16x128xf32> to vector<16xf32>
    %150 = vector.shape_cast %149 : vector<16xf32> to vector<16x1xf32>
    %151 = arith.subf %150, %55 : vector<16x1xf32>
    %152 = math.log %137 : vector<16x1xf32>
    %153 = arith.subf %151, %152 : vector<16x1xf32>
    %cst_43 = arith.constant 0.000000e+00 : f32
    %154 = vector.broadcast %cst_43 : f32 to vector<16x128xf32>
    %155 = arith.select %63, %72, %154 : vector<16x128xi1>, vector<16x128xf32>
    %cst_44 = arith.constant dense<0.000000e+00> : vector<16xf32>
    %156 = vector.multi_reduction <add>, %155, %cst_44 [1] : vector<16x128xf32> to vector<16xf32>
    %157 = vector.shape_cast %156 : vector<16xf32> to vector<16x1xf32>
    %158 = tpu.reciprocal %157 {approx = true} : vector<16x1xf32> -> vector<16x1xf32>
    %159 = vector.broadcast %158 : vector<16x1xf32> to vector<16x128xf32>
    %160 = arith.mulf %155, %159 : vector<16x128xf32>
    %161 = arith.addf %141, %160 : vector<16x128xf32>
    %162 = vector.extract_strided_slice %2 {offsets = [0, 4], sizes = [16, 1], strides = [1, 1]} : vector<16x8xi32> to vector<16x1xi32>
    %c30_i32_45 = arith.constant 30 : i32
    %163 = vector.broadcast %c30_i32_45 : i32 to vector<16x1xi32>
    %164 = arith.addi %162, %163 : vector<16x1xi32>
    %165 = vector.broadcast %164 : vector<16x1xi32> to vector<16x128xi32>
    %166 = arith.cmpi eq, %9, %165 : vector<16x128xi32>
    %cst_46 = arith.constant 0.000000e+00 : f32
    %167 = vector.broadcast %cst_46 : f32 to vector<16x128xf32>
    %168 = arith.select %166, %8, %167 : vector<16x128xi1>, vector<16x128xf32>
    %cst_47 = arith.constant dense<0.000000e+00> : vector<16xf32>
    %169 = vector.multi_reduction <add>, %168, %cst_47 [1] : vector<16x128xf32> to vector<16xf32>
    %170 = vector.shape_cast %169 : vector<16xf32> to vector<16x1xf32>
    %171 = arith.subf %170, %67 : vector<16x1xf32>
    %172 = math.log %157 : vector<16x1xf32>
    %173 = arith.subf %171, %172 : vector<16x1xf32>
    %174 = arith.truncf %161 : vector<16x128xf32> to vector<16x128xbf16>
    %c0_48 = arith.constant 0 : index
    %c0_49 = arith.constant 0 : index
    %175 = vector.load %arg5[%c0_48, %c0_49] : memref<16x2176xbf16, #tpu.memory_space<vmem>>, vector<16x128xbf16>
    tpu.vector_store %arg5[%c0_48, %c0_49], %174 {strides = array<i32>} : memref<16x2176xbf16, #tpu.memory_space<vmem>>, vector<16x128xbf16>,
    %c0_50 = arith.constant 0 : index
    %c128 = arith.constant 128 : index
    %176 = vector.load %arg2[%c0_50, %c128] : memref<32x2176xbf16, #tpu.memory_space<vmem>>, vector<32x1024xbf16>
    %cst_51 = arith.constant dense<0.000000e+00> : vector<16x1024xf32>
    %177 = tpu.matmul %1, %176, %cst_51 {dimension_numbers = #tpu.dot_dimension_numbers<[1], [0], [0], [1], [0, 0, 1, 1], [], []>} : vector<16x32xbf16>, vector<32x1024xbf16>, vector<16x1024xf32> -> vector<16x1024xf32>
    %c0_52 = arith.constant 0 : index
    %c128_53 = arith.constant 128 : index
    %178 = vector.load %arg3[%c0_52, %c128_53] : memref<1x2176xf32, #tpu.memory_space<vmem>>, vector<1x1024xf32>
    %179 = vector.broadcast %178 : vector<1x1024xf32> to vector<16x1024xf32>
    %180 = arith.addf %177, %179 : vector<16x1024xf32>
    %cst_54 = arith.constant dense<0xFF800000> : vector<16xf32>
    %181 = vector.multi_reduction <maximumf>, %180, %cst_54 [1] : vector<16x1024xf32> to vector<16xf32>
    %182 = vector.shape_cast %181 : vector<16xf32> to vector<16x1xf32>
    %183 = vector.broadcast %182 : vector<16x1xf32> to vector<16x1024xf32>
    %184 = arith.subf %180, %183 : vector<16x1024xf32>
    %185 = math.exp %184 : vector<16x1024xf32>
    %cst_55 = arith.constant dense<0.000000e+00> : vector<16xf32>
    %186 = vector.multi_reduction <add>, %185, %cst_55 [1] : vector<16x1024xf32> to vector<16xf32>
    %187 = vector.shape_cast %186 : vector<16xf32> to vector<16x1xf32>
    %188 = tpu.reciprocal %187 {approx = true} : vector<16x1xf32> -> vector<16x1xf32>
    %189 = vector.broadcast %188 : vector<16x1xf32> to vector<16x1024xf32>
    %190 = arith.mulf %185, %189 : vector<16x1024xf32>
    %191 = arith.truncf %190 : vector<16x1024xf32> to vector<16x1024xbf16>
    %c0_56 = arith.constant 0 : index
    %c128_57 = arith.constant 128 : index
    %192 = vector.load %arg5[%c0_56, %c128_57] : memref<16x2176xbf16, #tpu.memory_space<vmem>>, vector<16x1024xbf16>
    tpu.vector_store %arg5[%c0_56, %c128_57], %191 {strides = array<i32>} : memref<16x2176xbf16, #tpu.memory_space<vmem>>, vector<16x1024xbf16>,
    %193 = tpu.iota {dimensions = array<i32: 1>} : vector<16x1024xi32>
    %194 = vector.extract_strided_slice %2 {offsets = [0, 5], sizes = [16, 1], strides = [1, 1]} : vector<16x8xi32> to vector<16x1xi32>
    %195 = vector.broadcast %194 : vector<16x1xi32> to vector<16x1024xi32>
    %196 = arith.cmpi eq, %193, %195 : vector<16x1024xi32>
    %cst_58 = arith.constant 0.000000e+00 : f32
    %197 = vector.broadcast %cst_58 : f32 to vector<16x1024xf32>
    %198 = arith.select %196, %180, %197 : vector<16x1024xi1>, vector<16x1024xf32>
    %cst_59 = arith.constant dense<0.000000e+00> : vector<16xf32>
    %199 = vector.multi_reduction <add>, %198, %cst_59 [1] : vector<16x1024xf32> to vector<16xf32>
    %200 = vector.shape_cast %199 : vector<16xf32> to vector<16x1xf32>
    %201 = arith.subf %200, %182 : vector<16x1xf32>
    %202 = math.log %187 : vector<16x1xf32>
    %203 = arith.subf %201, %202 : vector<16x1xf32>
    %c0_60 = arith.constant 0 : index
    %c1152 = arith.constant 1152 : index
    %204 = vector.load %arg2[%c0_60, %c1152] : memref<32x2176xbf16, #tpu.memory_space<vmem>>, vector<32x1024xbf16>
    %cst_61 = arith.constant dense<0.000000e+00> : vector<16x1024xf32>
    %205 = tpu.matmul %1, %204, %cst_61 {dimension_numbers = #tpu.dot_dimension_numbers<[1], [0], [0], [1], [0, 0, 1, 1], [], []>} : vector<16x32xbf16>, vector<32x1024xbf16>, vector<16x1024xf32> -> vector<16x1024xf32>
    %c0_62 = arith.constant 0 : index
    %c1152_63 = arith.constant 1152 : index
    %206 = vector.load %arg3[%c0_62, %c1152_63] : memref<1x2176xf32, #tpu.memory_space<vmem>>, vector<1x1024xf32>
    %207 = vector.broadcast %206 : vector<1x1024xf32> to vector<16x1024xf32>
    %208 = arith.addf %205, %207 : vector<16x1024xf32>
    %cst_64 = arith.constant dense<0xFF800000> : vector<16xf32>
    %209 = vector.multi_reduction <maximumf>, %208, %cst_64 [1] : vector<16x1024xf32> to vector<16xf32>
    %210 = vector.shape_cast %209 : vector<16xf32> to vector<16x1xf32>
    %211 = vector.broadcast %210 : vector<16x1xf32> to vector<16x1024xf32>
    %212 = arith.subf %208, %211 : vector<16x1024xf32>
    %213 = math.exp %212 : vector<16x1024xf32>
    %cst_65 = arith.constant dense<0.000000e+00> : vector<16xf32>
    %214 = vector.multi_reduction <add>, %213, %cst_65 [1] : vector<16x1024xf32> to vector<16xf32>
    %215 = vector.shape_cast %214 : vector<16xf32> to vector<16x1xf32>
    %216 = tpu.reciprocal %215 {approx = true} : vector<16x1xf32> -> vector<16x1xf32>
    %217 = vector.broadcast %216 : vector<16x1xf32> to vector<16x1024xf32>
    %218 = arith.mulf %213, %217 : vector<16x1024xf32>
    %219 = arith.truncf %218 : vector<16x1024xf32> to vector<16x1024xbf16>
    %c0_66 = arith.constant 0 : index
    %c1152_67 = arith.constant 1152 : index
    %220 = vector.load %arg5[%c0_66, %c1152_67] : memref<16x2176xbf16, #tpu.memory_space<vmem>>, vector<16x1024xbf16>
    tpu.vector_store %arg5[%c0_66, %c1152_67], %219 {strides = array<i32>} : memref<16x2176xbf16, #tpu.memory_space<vmem>>, vector<16x1024xbf16>,
    %221 = tpu.iota {dimensions = array<i32: 1>} : vector<16x1024xi32>
    %222 = vector.extract_strided_slice %2 {offsets = [0, 6], sizes = [16, 1], strides = [1, 1]} : vector<16x8xi32> to vector<16x1xi32>
    %223 = vector.broadcast %222 : vector<16x1xi32> to vector<16x1024xi32>
    %224 = arith.cmpi eq, %221, %223 : vector<16x1024xi32>
    %cst_68 = arith.constant 0.000000e+00 : f32
    %225 = vector.broadcast %cst_68 : f32 to vector<16x1024xf32>
    %226 = arith.select %224, %208, %225 : vector<16x1024xi1>, vector<16x1024xf32>
    %cst_69 = arith.constant dense<0.000000e+00> : vector<16xf32>
    %227 = vector.multi_reduction <add>, %226, %cst_69 [1] : vector<16x1024xf32> to vector<16xf32>
    %228 = vector.shape_cast %227 : vector<16xf32> to vector<16x1xf32>
    %229 = arith.subf %228, %210 : vector<16x1xf32>
    %230 = math.log %215 : vector<16x1xf32>
    %231 = arith.subf %229, %230 : vector<16x1xf32>
    %c1_i32 = arith.constant 1 : i32
    %232 = vector.broadcast %c1_i32 : i32 to vector<16x1xi32>
    %233 = arith.cmpi eq, %3, %232 : vector<16x1xi32>
    %234 = arith.extui %233 : vector<16x1xi1> to vector<16x1xi32>
    %235 = arith.sitofp %234 : vector<16x1xi32> to vector<16x1xf32>
    %236 = arith.mulf %235, %113 : vector<16x1xf32>
    %237 = arith.addf %93, %236 : vector<16x1xf32>
    %c2_i32 = arith.constant 2 : i32
    %238 = vector.broadcast %c2_i32 : i32 to vector<16x1xi32>
    %239 = arith.cmpi eq, %3, %238 : vector<16x1xi32>
    %240 = arith.extui %239 : vector<16x1xi1> to vector<16x1xi32>
    %241 = arith.sitofp %240 : vector<16x1xi32> to vector<16x1xf32>
    %242 = arith.mulf %241, %133 : vector<16x1xf32>
    %243 = arith.addf %237, %242 : vector<16x1xf32>
    %c4_i32 = arith.constant 4 : i32
    %244 = vector.broadcast %c4_i32 : i32 to vector<16x1xi32>
    %245 = arith.cmpi eq, %3, %244 : vector<16x1xi32>
    %246 = arith.extui %245 : vector<16x1xi1> to vector<16x1xi32>
    %247 = arith.sitofp %246 : vector<16x1xi32> to vector<16x1xf32>
    %248 = arith.mulf %247, %153 : vector<16x1xf32>
    %249 = arith.addf %243, %248 : vector<16x1xf32>
    %c3_i32 = arith.constant 3 : i32
    %250 = vector.broadcast %c3_i32 : i32 to vector<16x1xi32>
    %251 = arith.cmpi eq, %3, %250 : vector<16x1xi32>
    %252 = arith.extui %251 : vector<16x1xi1> to vector<16x1xi32>
    %253 = arith.sitofp %252 : vector<16x1xi32> to vector<16x1xf32>
    %254 = arith.mulf %253, %173 : vector<16x1xf32>
    %255 = arith.addf %249, %254 : vector<16x1xf32>
    %c3_i32_70 = arith.constant 3 : i32
    %256 = vector.broadcast %c3_i32_70 : i32 to vector<16x1xi32>
    %257 = arith.cmpi eq, %3, %256 : vector<16x1xi32>
    %258 = arith.extui %257 : vector<16x1xi1> to vector<16x1xi32>
    %259 = arith.sitofp %258 : vector<16x1xi32> to vector<16x1xf32>
    %260 = arith.mulf %259, %203 : vector<16x1xf32>
    %261 = arith.addf %255, %260 : vector<16x1xf32>
    %c5_i32 = arith.constant 5 : i32
    %262 = vector.broadcast %c5_i32 : i32 to vector<16x1xi32>
    %263 = arith.cmpi eq, %3, %262 : vector<16x1xi32>
    %264 = arith.extui %263 : vector<16x1xi1> to vector<16x1xi32>
    %265 = arith.sitofp %264 : vector<16x1xi32> to vector<16x1xf32>
    %266 = arith.mulf %265, %231 : vector<16x1xf32>
    %267 = arith.addf %261, %266 : vector<16x1xf32>
    %268 = tpu.iota {dimensions = array<i32: 1>} : vector<16x128xi32>
    %cst_71 = arith.constant 0.000000e+00 : f32
    %269 = vector.broadcast %cst_71 : f32 to vector<16x128xf32>
    %c0_i32_72 = arith.constant 0 : i32
    %270 = vector.broadcast %c0_i32_72 : i32 to vector<16x128xi32>
    %271 = arith.cmpi eq, %268, %270 : vector<16x128xi32>
    %272 = vector.shape_cast %93 : vector<16x1xf32> to vector<16x1xf32>
    %273 = vector.broadcast %272 : vector<16x1xf32> to vector<16x128xf32>
    %274 = arith.select %271, %273, %269 : vector<16x128xi1>, vector<16x128xf32>
    %c1_i32_73 = arith.constant 1 : i32
    %275 = vector.broadcast %c1_i32_73 : i32 to vector<16x128xi32>
    %276 = arith.cmpi eq, %268, %275 : vector<16x128xi32>
    %277 = vector.shape_cast %113 : vector<16x1xf32> to vector<16x1xf32>
    %278 = vector.broadcast %277 : vector<16x1xf32> to vector<16x128xf32>
    %279 = arith.select %276, %278, %274 : vector<16x128xi1>, vector<16x128xf32>
    %c2_i32_74 = arith.constant 2 : i32
    %280 = vector.broadcast %c2_i32_74 : i32 to vector<16x128xi32>
    %281 = arith.cmpi eq, %268, %280 : vector<16x128xi32>
    %282 = vector.shape_cast %133 : vector<16x1xf32> to vector<16x1xf32>
    %283 = vector.broadcast %282 : vector<16x1xf32> to vector<16x128xf32>
    %284 = arith.select %281, %283, %279 : vector<16x128xi1>, vector<16x128xf32>
    %c3_i32_75 = arith.constant 3 : i32
    %285 = vector.broadcast %c3_i32_75 : i32 to vector<16x128xi32>
    %286 = arith.cmpi eq, %268, %285 : vector<16x128xi32>
    %287 = vector.shape_cast %153 : vector<16x1xf32> to vector<16x1xf32>
    %288 = vector.broadcast %287 : vector<16x1xf32> to vector<16x128xf32>
    %289 = arith.select %286, %288, %284 : vector<16x128xi1>, vector<16x128xf32>
    %c4_i32_76 = arith.constant 4 : i32
    %290 = vector.broadcast %c4_i32_76 : i32 to vector<16x128xi32>
    %291 = arith.cmpi eq, %268, %290 : vector<16x128xi32>
    %292 = vector.shape_cast %173 : vector<16x1xf32> to vector<16x1xf32>
    %293 = vector.broadcast %292 : vector<16x1xf32> to vector<16x128xf32>
    %294 = arith.select %291, %293, %289 : vector<16x128xi1>, vector<16x128xf32>
    %c5_i32_77 = arith.constant 5 : i32
    %295 = vector.broadcast %c5_i32_77 : i32 to vector<16x128xi32>
    %296 = arith.cmpi eq, %268, %295 : vector<16x128xi32>
    %297 = vector.shape_cast %203 : vector<16x1xf32> to vector<16x1xf32>
    %298 = vector.broadcast %297 : vector<16x1xf32> to vector<16x128xf32>
    %299 = arith.select %296, %298, %294 : vector<16x128xi1>, vector<16x128xf32>
    %c6_i32_78 = arith.constant 6 : i32
    %300 = vector.broadcast %c6_i32_78 : i32 to vector<16x128xi32>
    %301 = arith.cmpi eq, %268, %300 : vector<16x128xi32>
    %302 = vector.shape_cast %231 : vector<16x1xf32> to vector<16x1xf32>
    %303 = vector.broadcast %302 : vector<16x1xf32> to vector<16x128xf32>
    %304 = arith.select %301, %303, %299 : vector<16x128xi1>, vector<16x128xf32>
    %c7_i32 = arith.constant 7 : i32
    %305 = vector.broadcast %c7_i32 : i32 to vector<16x128xi32>
    %306 = arith.cmpi eq, %268, %305 : vector<16x128xi32>
    %307 = vector.shape_cast %267 : vector<16x1xf32> to vector<16x1xf32>
    %308 = vector.broadcast %307 : vector<16x1xf32> to vector<16x128xf32>
    %309 = arith.select %306, %308, %304 : vector<16x128xi1>, vector<16x128xf32>
    %c0_79 = arith.constant 0 : index
    %c0_80 = arith.constant 0 : index
    %310 = vector.load %arg6[%c0_79, %c0_80] : memref<16x128xf32, #tpu.memory_space<vmem>>, vector<16x128xf32>
    tpu.vector_store %arg6[%c0_79, %c0_80], %309 {strides = array<i32>} : memref<16x128xf32, #tpu.memory_space<vmem>>, vector<16x128xf32>,
    return
  }
  func.func @transform_0(%arg0: i32) -> (i32, i32) {
    %c0_i32 = arith.constant 0 : i32
    %c0_i32_0 = arith.constant 0 : i32
    return %arg0, %c0_i32 : i32, i32
  }
  func.func @transform_1(%arg0: i32) -> (i32, i32) {
    %c0_i32 = arith.constant 0 : i32
    %c0_i32_0 = arith.constant 0 : i32
    %c0_i32_1 = arith.constant 0 : i32
    return %c0_i32, %c0_i32_0 : i32, i32
  }
  func.func @transform_2(%arg0: i32) -> (i32, i32) {
    %c0_i32 = arith.constant 0 : i32
    %c0_i32_0 = arith.constant 0 : i32
    %c0_i32_1 = arith.constant 0 : i32
    return %c0_i32, %c0_i32_0 : i32, i32
  }
  func.func @transform_3(%arg0: i32) -> (i32, i32) {
    %c0_i32 = arith.constant 0 : i32
    %c0_i32_0 = arith.constant 0 : i32
    return %arg0, %c0_i32 : i32, i32
  }
  func.func @transform_4(%arg0: i32) -> (i32, i32) {
    %c0_i32 = arith.constant 0 : i32
    %c0_i32_0 = arith.constant 0 : i32
    return %arg0, %c0_i32 : i32, i32
  }
  func.func @transform_5(%arg0: i32) -> (i32, i32) {
    %c0_i32 = arith.constant 0 : i32
    %c0_i32_0 = arith.constant 0 : i32
    return %arg0, %c0_i32 : i32, i32
  }
}

</mosaic_0001>

<llo_original>
// kernel: tpu_custom_call.1
$region0: #{tpu_custom_call.1}
  #allocation0 [shape = 'u32[]', space=smem, size = 0x4, offset = 0x4, fixed_abs, tag = 'smem constant byte address 0x4 - core index']
  #allocation1 [shape = 'u32[72,128]{1,0:T(1,128)}', space=vmem, size = 0x9000, scoped, tag = 'internal scratch']
  %s0 = inlined_call_operand.hbm [shape: f32[16,32], index: 0, kind: input, shape index: {}]
  %s1 = inlined_call_operand.hbm [shape: bf16[32,2176], index: 1, kind: input, shape index: {}]
  %s2 = inlined_call_operand.vmem [shape: f32[1,2176], index: 2, kind: input, shape index: {}]
  %s3 = inlined_call_operand.vmem [shape: s32[16,8], index: 3, kind: input, shape index: {}]
  %s4 = inlined_call_operand.hbm [shape: bf16[16,2176], index: 4, kind: output, shape index: {0}]
  %s5 = inlined_call_operand.hbm [shape: f32[16,128], index: 5, kind: output, shape index: {1}]
  %6 = xla_tuple %s4, %s5
  %s7 = sld [smem:[#allocation0]]
  $region42: #{tpu_custom_call.1} parent=0
    _
  %s9 = ssub.s32 1, %s7
  %s10 = scalar_select 0, %s9, %s7
  $region1: #{tpu_custom_call.1} parent=0
    #allocation2 [shape = 'u8[8192]{0}', space=vmem, size = 0x2000, scoped, tag = 'input window, operand 0, single buffered']
    #allocation3 [shape = 's32[1]{0}', space=sflag, size = 0x4, scoped, tag = 'scoped memory for tpu_custom_call.1']
    #allocation4 [shape = 's32[1]{0}', space=sflag, size = 0x4, scoped, tag = 'scoped memory for tpu_custom_call.1']
    #allocation5 [shape = 'u8[139264]{0}', space=vmem, size = 0x22000, scoped, tag = 'input window, operand 1, single buffered']
    #allocation6 [shape = 's32[1]{0}', space=sflag, size = 0x4, scoped, tag = 'scoped memory for tpu_custom_call.1']
    #allocation7 [shape = 'u8[69632]{0}', space=vmem, size = 0x11000, scoped, tag = 'output window, operand 0, single buffered']
    #allocation8 [shape = 'u8[8192]{0}', space=vmem, size = 0x2000, scoped, tag = 'output window, operand 1, single buffered']
    #allocation9 [shape = 's32[1]{0}', space=sflag, size = 0x4, scoped, tag = 'scoped memory for tpu_custom_call.1']
    %11 = vsyncpa [#allocation3], 0
    %12 = vsyncpa [#allocation6], 0
    %13 = vsyncpa [#allocation4], 0
    %14 = vsyncpa [#allocation9], 0
    // Predicated region
    $region2: #{tpu_custom_call.1} parent=1 // pred_check
      _
    $region3: #{tpu_custom_call.1} parent=1 // pred_check_branch
      %16 = sbr.rel (0) target = $region5
    $region4: #{tpu_custom_call.1} parent=1 // pred_region
      %18 = vsyncadd [#allocation3], 0
      %s19 = sshll.u32 %s0, 4
      %s20 = int_to_ptr.hbm [resolvable:$true] %s19
      %s21 = sshll.u32 [#allocation2], 4
      %s22 = int_to_ptr.vmem [resolvable:$true] %s21
      %27 = dma.hbm_to_vmem [thread:$0]  %s20, 256, %s22, [#allocation3], 128, 128, 8
    $region5: #{tpu_custom_call.1} parent=1 // pred_fallthru
      _
    // Predicated region
    $region6: #{tpu_custom_call.1} parent=1 // pred_check
      _
    $region7: #{tpu_custom_call.1} parent=1 // pred_check_branch
      %29 = sbr.rel (0) target = $region9
    $region8: #{tpu_custom_call.1} parent=1 // pred_region
      %31 = vsyncadd [#allocation6], 0
      %s32 = sshll.u32 %s1, 4
      %s33 = int_to_ptr.hbm [resolvable:$true] %s32
      %s34 = sshll.u32 [#allocation5], 4
      %s35 = int_to_ptr.vmem [resolvable:$true] %s34
      %40 = dma.hbm_to_vmem [thread:$0]  %s33, 4352, %s35, [#allocation6], 1088, 1088, 68
    $region9: #{tpu_custom_call.1} parent=1 // pred_fallthru
      _
    // Predicated region
    $region10: #{tpu_custom_call.1} parent=1 // pred_check
      _
    $region11: #{tpu_custom_call.1} parent=1 // pred_check_branch
      %42 = sbr.rel (0) target = $region13
    $region12: #{tpu_custom_call.1} parent=1 // pred_region
      _
    $region13: #{tpu_custom_call.1} parent=1 // pred_fallthru
      _
    // Predicated region
    $region14: #{tpu_custom_call.1} parent=1 // pred_check
      _
    $region15: #{tpu_custom_call.1} parent=1 // pred_check_branch
      %44 = sbr.rel (0) target = $region17
    $region16: #{tpu_custom_call.1} parent=1 // pred_region
      _
    $region17: #{tpu_custom_call.1} parent=1 // pred_fallthru
      _
    // Predicated region
    $region18: #{tpu_custom_call.1} parent=1 // pred_check
      _
    $region19: #{tpu_custom_call.1} parent=1 // pred_check_branch
      %46 = sbr.rel (0) target = $region21
    $region20: #{tpu_custom_call.1} parent=1 // pred_region
      %48 = dma.done [#allocation3], 256
    $region21: #{tpu_custom_call.1} parent=1 // pred_fallthru
      _
    // Predicated region
    $region22: #{tpu_custom_call.1} parent=1 // pred_check
      _
    $region23: #{tpu_custom_call.1} parent=1 // pred_check_branch
      %50 = sbr.rel (0) target = $region25
    $region24: #{tpu_custom_call.1} parent=1 // pred_region
      %52 = dma.done [#allocation6], 4352
    $region25: #{tpu_custom_call.1} parent=1 // pred_fallthru
      _
    %v54 = vld [vmem:[#allocation2] sm:$0xff]
    %v55 = vld [vmem:[#allocation2 + $0x8] sm:$0xff]
    %v56 = vpack.c.bf16 %v55, %v54
    %v57 = vld [vmem:[%s3] sm:$0xff]
    %v58 = vld [vmem:[%s3 + $0x8] sm:$0xff]
    %v59 = vld [vmem:[#allocation5] sm:$0xf]
    %v60 = vld [vmem:[#allocation5 + $0x44] sm:$0xf]
    %v61 = vld [vmem:[#allocation5 + $0x88] sm:$0xf]
    %v62 = vld [vmem:[#allocation5 + $0xcc] sm:$0xf]
    %v63 = vld [vmem:[%s2] sm:$0x1]
    %v65 = vperm.slane %v63, 0
    %v71 = vunpack.c.l.b16 %v59
    %v72 = vunpack.c.l.b16 %v60
    %v73 = vunpack.c.l.b16 %v61
    %v74 = vunpack.c.l.b16 %v62
    %v75 = vpack.c.b16 %v72, %v71
    %v76 = vpack.c.b16 %v74, %v73
    %vm79 = vcmask 261120
    %v81 = vsel %vm79, %v56, 0
    %83 = vmatpush.bf16.msra.mxu0 0
    %84 = vmatpush.bf16.msra.mxu0 0
    %85 = vmatpush.bf16.msra.mxu0 0
    %86 = vmatpush.bf16.msra.mxu0 0
    %87 = vmatpush.bf16.msra.mxu0 0
    %88 = vmatpush.bf16.msra.mxu0 0
    %89 = vmatpush.bf16.msra.mxu0 %v76
    %90 = vmatpush.bf16.msra.mxu0 %v75
    %91 = vmatmul.bf16.gmra.mxu0 %v81
    %v92 = vpop.f32.mrf.mxu0
    %v93 = vadd.f32 %v65, %v92
    %v94 = vpop.f32.mrf.mxu0
    %v95 = vadd.f32 %v65, %v94
    %96 = vdwg.mxu0
    %v97 = vlaneseq
    %v98 = vand.u32 %v97, 127
    %vm99 = vcmp.ge.s32.totalorder %v98, 0
    %vm100 = vcmp.lt.s32.totalorder %v98, 6
    %vm101 = vmand %vm99, %vm100
    %v102 = vsel %vm101, %v93, -1e+30
    %v103 = vsel %vm101, %v95, -1e+30
    %104 = vmax.xlane.f32.xlu0 %v102
    %v105 = vpop.xlane.xlu0 %104
    %106 = vmax.xlane.f32.xlu0 %v103
    %v107 = vpop.xlane.xlu0 %106
    %v108 = vsel %vm101, %v105, 0.0
    %v109 = vsel %vm101, %v107, 0.0
    %vm110 = vcmp.ge.s32.totalorder %v98, 6
    %vm111 = vcmp.lt.s32.totalorder %v98, 14
    %vm112 = vmand %vm110, %vm111
    %v113 = vsel %vm112, %v93, -1e+30
    %v114 = vsel %vm112, %v95, -1e+30
    %115 = vmax.xlane.f32.xlu0 %v113
    %v116 = vpop.xlane.xlu0 %115
    %117 = vmax.xlane.f32.xlu0 %v114
    %v118 = vpop.xlane.xlu0 %117
    %v119 = vsel %vm112, %v116, %v108
    %v120 = vsel %vm112, %v118, %v109
    %vm121 = vcmp.ge.s32.totalorder %v98, 14
    %vm122 = vcmp.lt.s32.totalorder %v98, 22
    %vm123 = vmand %vm121, %vm122
    %v124 = vsel %vm123, %v93, -1e+30
    %v125 = vsel %vm123, %v95, -1e+30
    %126 = vmax.xlane.f32.xlu0 %v124
    %v127 = vpop.xlane.xlu0 %126
    %128 = vmax.xlane.f32.xlu0 %v125
    %v129 = vpop.xlane.xlu0 %128
    %v130 = vsel %vm123, %v127, %v119
    %v131 = vsel %vm123, %v129, %v120
    %vm132 = vcmp.ge.s32.totalorder %v98, 22
    %vm133 = vcmp.lt.s32.totalorder %v98, 30
    %vm134 = vmand %vm132, %vm133
    %v135 = vsel %vm134, %v93, -1e+30
    %v136 = vsel %vm134, %v95, -1e+30
    %137 = vmax.xlane.f32.xlu0 %v135
    %v138 = vpop.xlane.xlu0 %137
    %139 = vmax.xlane.f32.xlu0 %v136
    %v140 = vpop.xlane.xlu0 %139
    %v141 = vsel %vm134, %v138, %v130
    %v142 = vsel %vm134, %v140, %v131
    %vm143 = vcmp.ge.s32.totalorder %v98, 30
    %vm144 = vcmp.lt.s32.totalorder %v98, 38
    %vm145 = vmand %vm143, %vm144
    %v146 = vsel %vm145, %v93, -1e+30
    %v147 = vsel %vm145, %v95, -1e+30
    %148 = vmax.xlane.f32.xlu0 %v146
    %v149 = vpop.xlane.xlu0 %148
    %150 = vmax.xlane.f32.xlu0 %v147
    %v151 = vpop.xlane.xlu0 %150
    %v152 = vsel %vm145, %v149, %v141
    %v153 = vsel %vm145, %v151, %v142
    %v154 = vsub.f32 %v93, %v152
    %v155 = vsub.f32 %v95, %v153
    %v156 = vmul.f32 %v154, 1.442695
    %v157 = vpow.pop %v156
    %v158 = vmul.f32 %v155, 1.442695
    %v159 = vpow.pop %v158
    %v160 = vsel %vm101, %v157, 0.0
    %v161 = vsel %vm101, %v159, 0.0
    %162 = vadd.xlane.f32.xlu0 %v160
    %v163 = vpop.xlane.xlu0 %162
    %164 = vadd.xlane.f32.xlu0 %v161
    %v165 = vpop.xlane.xlu0 %164
    %v166 = vrcp.pop %v163
    %v167 = vrcp.pop %v165
    %v168 = vmul.f32 %v160, %v166
    %v169 = vmul.f32 %v161, %v167
    %v170 = vadd.f32 %v168, 0.0
    %v171 = vadd.f32 %v169, 0.0
    %172 = vset.pattern.permute.xlu0 0
    %173 = vperm.xlu0 %172, %v57
    %v174 = vpop.permute.xlu0 %173
    %175 = vset.pattern.permute.xlu0 0
    %176 = vperm.xlu0 %175, %v58
    %v177 = vpop.permute.xlu0 %176
    %vm178 = vcmp.eq.s32.totalorder %v98, %v174
    %vm179 = vcmp.eq.s32.totalorder %v98, %v177
    %v180 = vsel %vm178, %v93, 0.0
    %v181 = vsel %vm179, %v95, 0.0
    %182 = vadd.xlane.f32.xlu0 %v180
    %v183 = vpop.xlane.xlu0 %182
    %184 = vadd.xlane.f32.xlu0 %v181
    %v185 = vpop.xlane.xlu0 %184
    %v186 = vsub.f32 %v183, %v105
    %v187 = vsub.f32 %v185, %v107
    %v188 = vlog2.pop %v163
    %v189 = vmul.f32 %v188, 0.6931472
    %v190 = vlog2.pop %v165
    %v191 = vmul.f32 %v190, 0.6931472
    %v192 = vsub.f32 %v186, %v189
    %v193 = vsub.f32 %v187, %v191
    %v194 = vsel %vm112, %v157, 0.0
    %v195 = vsel %vm112, %v159, 0.0
    %196 = vadd.xlane.f32.xlu0 %v194
    %v197 = vpop.xlane.xlu0 %196
    %198 = vadd.xlane.f32.xlu0 %v195
    %v199 = vpop.xlane.xlu0 %198
    %v200 = vrcp.pop %v197
    %v201 = vrcp.pop %v199
    %v202 = vmul.f32 %v194, %v200
    %v203 = vmul.f32 %v195, %v201
    %v204 = vadd.f32 %v170, %v202
    %v205 = vadd.f32 %v171, %v203
    %v206 = vadd.s32 %v57, 6
    %v207 = vadd.s32 %v58, 6
    %208 = vset.pattern.permute.xlu0 1
    %209 = vperm.xlu0 %208, %v206
    %v210 = vpop.permute.xlu0 %209
    %211 = vset.pattern.permute.xlu0 1
    %212 = vperm.xlu0 %211, %v207
    %v213 = vpop.permute.xlu0 %212
    %vm214 = vcmp.eq.s32.totalorder %v98, %v210
    %vm215 = vcmp.eq.s32.totalorder %v98, %v213
    %v216 = vsel %vm214, %v93, 0.0
    %v217 = vsel %vm215, %v95, 0.0
    %218 = vadd.xlane.f32.xlu0 %v216
    %v219 = vpop.xlane.xlu0 %218
    %220 = vadd.xlane.f32.xlu0 %v217
    %v221 = vpop.xlane.xlu0 %220
    %v222 = vsub.f32 %v219, %v116
    %v223 = vsub.f32 %v221, %v118
    %v224 = vlog2.pop %v197
    %v225 = vmul.f32 %v224, 0.6931472
    %v226 = vlog2.pop %v199
    %v227 = vmul.f32 %v226, 0.6931472
    %v228 = vsub.f32 %v222, %v225
    %v229 = vsub.f32 %v223, %v227
    %v230 = vsel %vm123, %v157, 0.0
    %v231 = vsel %vm123, %v159, 0.0
    %232 = vadd.xlane.f32.xlu0 %v230
    %v233 = vpop.xlane.xlu0 %232
    %234 = vadd.xlane.f32.xlu0 %v231
    %v235 = vpop.xlane.xlu0 %234
    %v236 = vrcp.pop %v233
    %v237 = vrcp.pop %v235
    %v238 = vmul.f32 %v230, %v236
    %v239 = vmul.f32 %v231, %v237
    %v240 = vadd.f32 %v204, %v238
    %v241 = vadd.f32 %v205, %v239
    %v242 = vadd.s32 %v57, 14
    %v243 = vadd.s32 %v58, 14
    %244 = vset.pattern.permute.xlu0 2
    %245 = vperm.xlu0 %244, %v242
    %v246 = vpop.permute.xlu0 %245
    %247 = vset.pattern.permute.xlu0 2
    %248 = vperm.xlu0 %247, %v243
    %v249 = vpop.permute.xlu0 %248
    %vm250 = vcmp.eq.s32.totalorder %v98, %v246
    %vm251 = vcmp.eq.s32.totalorder %v98, %v249
    %v252 = vsel %vm250, %v93, 0.0
    %v253 = vsel %vm251, %v95, 0.0
    %254 = vadd.xlane.f32.xlu0 %v252
    %v255 = vpop.xlane.xlu0 %254
    %256 = vadd.xlane.f32.xlu0 %v253
    %v257 = vpop.xlane.xlu0 %256
    %v258 = vsub.f32 %v255, %v127
    %v259 = vsub.f32 %v257, %v129
    %v260 = vlog2.pop %v233
    %v261 = vmul.f32 %v260, 0.6931472
    %v262 = vlog2.pop %v235
    %v263 = vmul.f32 %v262, 0.6931472
    %v264 = vsub.f32 %v258, %v261
    %v265 = vsub.f32 %v259, %v263
    %v266 = vsel %vm134, %v157, 0.0
    %v267 = vsel %vm134, %v159, 0.0
    %268 = vadd.xlane.f32.xlu0 %v266
    %v269 = vpop.xlane.xlu0 %268
    %270 = vadd.xlane.f32.xlu0 %v267
    %v271 = vpop.xlane.xlu0 %270
    %v272 = vrcp.pop %v269
    %v273 = vrcp.pop %v271
    %v274 = vmul.f32 %v266, %v272
    %v275 = vmul.f32 %v267, %v273
    %v276 = vadd.f32 %v240, %v274
    %v277 = vadd.f32 %v241, %v275
    %v278 = vadd.s32 %v57, 22
    %v279 = vadd.s32 %v58, 22
    %280 = vset.pattern.permute.xlu0 3
    %281 = vperm.xlu0 %280, %v278
    %v282 = vpop.permute.xlu0 %281
    %283 = vset.pattern.permute.xlu0 3
    %284 = vperm.xlu0 %283, %v279
    %v285 = vpop.permute.xlu0 %284
    %vm286 = vcmp.eq.s32.totalorder %v98, %v282
    %vm287 = vcmp.eq.s32.totalorder %v98, %v285
    %v288 = vsel %vm286, %v93, 0.0
    %v289 = vsel %vm287, %v95, 0.0
    %290 = vadd.xlane.f32.xlu0 %v288
    %v291 = vpop.xlane.xlu0 %290
    %292 = vadd.xlane.f32.xlu0 %v289
    %v293 = vpop.xlane.xlu0 %292
    %v294 = vsub.f32 %v291, %v138
    %v295 = vsub.f32 %v293, %v140
    %v296 = vlog2.pop %v269
    %v297 = vmul.f32 %v296, 0.6931472
    %v298 = vlog2.pop %v271
    %v299 = vmul.f32 %v298, 0.6931472
    %v300 = vsub.f32 %v294, %v297
    %v301 = vsub.f32 %v295, %v299
    %v302 = vsel %vm145, %v157, 0.0
    %v303 = vsel %vm145, %v159, 0.0
    %304 = vadd.xlane.f32.xlu0 %v302
    %v305 = vpop.xlane.xlu0 %304
    %306 = vadd.xlane.f32.xlu0 %v303
    %v307 = vpop.xlane.xlu0 %306
    %v308 = vrcp.pop %v305
    %v309 = vrcp.pop %v307
    %v310 = vmul.f32 %v302, %v308
    %v311 = vmul.f32 %v303, %v309
    %v312 = vadd.f32 %v276, %v310
    %v313 = vadd.f32 %v277, %v311
    %v314 = vadd.s32 %v57, 30
    %v315 = vadd.s32 %v58, 30
    %316 = vset.pattern.permute.xlu0 4
    %317 = vperm.xlu0 %316, %v314
    %v318 = vpop.permute.xlu0 %317
    %319 = vset.pattern.permute.xlu0 4
    %320 = vperm.xlu0 %319, %v315
    %v321 = vpop.permute.xlu0 %320
    %vm322 = vcmp.eq.s32.totalorder %v98, %v318
    %vm323 = vcmp.eq.s32.totalorder %v98, %v321
    %v324 = vsel %vm322, %v93, 0.0
    %v325 = vsel %vm323, %v95, 0.0
    %326 = vadd.xlane.f32.xlu0 %v324
    %v327 = vpop.xlane.xlu0 %326
    %328 = vadd.xlane.f32.xlu0 %v325
    %v329 = vpop.xlane.xlu0 %328
    %v330 = vsub.f32 %v327, %v149
    %v331 = vsub.f32 %v329, %v151
    %v332 = vlog2.pop %v305
    %v333 = vmul.f32 %v332, 0.6931472
    %v334 = vlog2.pop %v307
    %v335 = vmul.f32 %v334, 0.6931472
    %v336 = vsub.f32 %v330, %v333
    %v337 = vsub.f32 %v331, %v335
    %v338 = vpack.c.bf16 %v312, %v312
    %v339 = vpack.c.bf16 %v313, %v313
    %340 = vst [vmem:[#allocation7] sm:$0xf] %v338
    %341 = vst [vmem:[#allocation7 + $0x44] sm:$0xf] %v339
    %v342 = vld [vmem:[#allocation5 + $0x4] sm:$0xff]
    %v343 = vld [vmem:[#allocation5 + $0xc] sm:$0xff]
    %v344 = vld [vmem:[#allocation5 + $0x14] sm:$0xff]
    %v345 = vld [vmem:[#allocation5 + $0x1c] sm:$0xff]
    %v346 = vld [vmem:[#allocation5 + $0x48] sm:$0xff]
    %v347 = vld [vmem:[#allocation5 + $0x50] sm:$0xff]
    %v348 = vld [vmem:[#allocation5 + $0x58] sm:$0xff]
    %v349 = vld [vmem:[#allocation5 + $0x60] sm:$0xff]
    %v350 = vld [vmem:[#allocation5 + $0x8c] sm:$0xff]
    %v351 = vld [vmem:[#allocation5 + $0x94] sm:$0xff]
    %v352 = vld [vmem:[#allocation5 + $0x9c] sm:$0xff]
    %v353 = vld [vmem:[#allocation5 + $0xa4] sm:$0xff]
    %v354 = vld [vmem:[#allocation5 + $0xd0] sm:$0xff]
    %v355 = vld [vmem:[#allocation5 + $0xd8] sm:$0xff]
    %v356 = vld [vmem:[#allocation5 + $0xe0] sm:$0xff]
    %v357 = vld [vmem:[#allocation5 + $0xe8] sm:$0xff]
    %v358 = vld [vmem:[%s2 + $0x1] sm:$0xff]
    %v360 = vperm.slane %v358, 0
    %v361 = vperm.slane %v358, 1
    %v362 = vperm.slane %v358, 2
    %v363 = vperm.slane %v358, 3
    %v364 = vperm.slane %v358, 4
    %v365 = vperm.slane %v358, 5
    %v366 = vperm.slane %v358, 6
    %v367 = vperm.slane %v358, 7
    %v392 = vunpack.c.l.b16 %v342
    %v393 = vunpack.c.h.b16 %v342
    %v394 = vunpack.c.l.b16 %v343
    %v395 = vunpack.c.h.b16 %v343
    %v396 = vunpack.c.l.b16 %v344
    %v397 = vunpack.c.h.b16 %v344
    %v398 = vunpack.c.l.b16 %v345
    %v399 = vunpack.c.h.b16 %v345
    %v400 = vunpack.c.l.b16 %v346
    %v401 = vunpack.c.h.b16 %v346
    %v402 = vunpack.c.l.b16 %v347
    %v403 = vunpack.c.h.b16 %v347
    %v404 = vunpack.c.l.b16 %v348
    %v405 = vunpack.c.h.b16 %v348
    %v406 = vunpack.c.l.b16 %v349
    %v407 = vunpack.c.h.b16 %v349
    %v408 = vunpack.c.l.b16 %v350
    %v409 = vunpack.c.h.b16 %v350
    %v410 = vunpack.c.l.b16 %v351
    %v411 = vunpack.c.h.b16 %v351
    %v412 = vunpack.c.l.b16 %v352
    %v413 = vunpack.c.h.b16 %v352
    %v414 = vunpack.c.l.b16 %v353
    %v415 = vunpack.c.h.b16 %v353
    %v416 = vunpack.c.l.b16 %v354
    %v417 = vunpack.c.h.b16 %v354
    %v418 = vunpack.c.l.b16 %v355
    %v419 = vunpack.c.h.b16 %v355
    %v420 = vunpack.c.l.b16 %v356
    %v421 = vunpack.c.h.b16 %v356
    %v422 = vunpack.c.l.b16 %v357
    %v423 = vunpack.c.h.b16 %v357
    %v424 = vpack.c.b16 %v400, %v392
    %v425 = vpack.c.b16 %v401, %v393
    %v426 = vpack.c.b16 %v402, %v394
    %v427 = vpack.c.b16 %v403, %v395
    %v428 = vpack.c.b16 %v404, %v396
    %v429 = vpack.c.b16 %v405, %v397
    %v430 = vpack.c.b16 %v406, %v398
    %v431 = vpack.c.b16 %v407, %v399
    %v432 = vpack.c.b16 %v416, %v408
    %v433 = vpack.c.b16 %v417, %v409
    %v434 = vpack.c.b16 %v418, %v410
    %v435 = vpack.c.b16 %v419, %v411
    %v436 = vpack.c.b16 %v420, %v412
    %v437 = vpack.c.b16 %v421, %v413
    %v438 = vpack.c.b16 %v422, %v414
    %v439 = vpack.c.b16 %v423, %v415
    %456 = vmatpush.bf16.msra.mxu0 0
    %457 = vmatpush.bf16.msra.mxu0 0
    %458 = vmatpush.bf16.msra.mxu0 0
    %459 = vmatpush.bf16.msra.mxu0 0
    %460 = vmatpush.bf16.msra.mxu0 0
    %461 = vmatpush.bf16.msra.mxu0 0
    %462 = vmatpush.bf16.msra.mxu0 %v432
    %463 = vmatpush.bf16.msra.mxu0 %v424
    %464 = vmatmul.bf16.gmra.mxu0 %v81
    %v465 = vpop.f32.mrf.mxu0
    %v466 = vadd.f32 %v360, %v465
    %v467 = vpop.f32.mrf.mxu0
    %v468 = vadd.f32 %v360, %v467
    %469 = vdwg.mxu0
    %470 = vmatpush.bf16.msra.mxu0 0
    %471 = vmatpush.bf16.msra.mxu0 0
    %472 = vmatpush.bf16.msra.mxu0 0
    %473 = vmatpush.bf16.msra.mxu0 0
    %474 = vmatpush.bf16.msra.mxu0 0
    %475 = vmatpush.bf16.msra.mxu0 0
    %476 = vmatpush.bf16.msra.mxu0 %v433
    %477 = vmatpush.bf16.msra.mxu0 %v425
    %478 = vmatmul.bf16.gmra.mxu0 %v81
    %v479 = vpop.f32.mrf.mxu0
    %v480 = vadd.f32 %v361, %v479
    %v481 = vpop.f32.mrf.mxu0
    %v482 = vadd.f32 %v361, %v481
    %483 = vdwg.mxu0
    %484 = vmatpush.bf16.msra.mxu0 0
    %485 = vmatpush.bf16.msra.mxu0 0
    %486 = vmatpush.bf16.msra.mxu0 0
    %487 = vmatpush.bf16.msra.mxu0 0
    %488 = vmatpush.bf16.msra.mxu0 0
    %489 = vmatpush.bf16.msra.mxu0 0
    %490 = vmatpush.bf16.msra.mxu0 %v434
    %491 = vmatpush.bf16.msra.mxu0 %v426
    %492 = vmatmul.bf16.gmra.mxu0 %v81
    %v493 = vpop.f32.mrf.mxu0
    %v494 = vadd.f32 %v362, %v493
    %v495 = vpop.f32.mrf.mxu0
    %v496 = vadd.f32 %v362, %v495
    %497 = vdwg.mxu0
    %498 = vmatpush.bf16.msra.mxu0 0
    %499 = vmatpush.bf16.msra.mxu0 0
    %500 = vmatpush.bf16.msra.mxu0 0
    %501 = vmatpush.bf16.msra.mxu0 0
    %502 = vmatpush.bf16.msra.mxu0 0
    %503 = vmatpush.bf16.msra.mxu0 0
    %504 = vmatpush.bf16.msra.mxu0 %v435
    %505 = vmatpush.bf16.msra.mxu0 %v427
    %506 = vmatmul.bf16.gmra.mxu0 %v81
    %v507 = vpop.f32.mrf.mxu0
    %v508 = vadd.f32 %v363, %v507
    %v509 = vpop.f32.mrf.mxu0
    %v510 = vadd.f32 %v363, %v509
    %511 = vdwg.mxu0
    %512 = vmatpush.bf16.msra.mxu0 0
    %513 = vmatpush.bf16.msra.mxu0 0
    %514 = vmatpush.bf16.msra.mxu0 0
    %515 = vmatpush.bf16.msra.mxu0 0
    %516 = vmatpush.bf16.msra.mxu0 0
    %517 = vmatpush.bf16.msra.mxu0 0
    %518 = vmatpush.bf16.msra.mxu0 %v436
    %519 = vmatpush.bf16.msra.mxu0 %v428
    %520 = vmatmul.bf16.gmra.mxu0 %v81
    %v521 = vpop.f32.mrf.mxu0
    %v522 = vadd.f32 %v364, %v521
    %v523 = vpop.f32.mrf.mxu0
    %v524 = vadd.f32 %v364, %v523
    %525 = vdwg.mxu0
    %526 = vmatpush.bf16.msra.mxu0 0
    %527 = vmatpush.bf16.msra.mxu0 0
    %528 = vmatpush.bf16.msra.mxu0 0
    %529 = vmatpush.bf16.msra.mxu0 0
    %530 = vmatpush.bf16.msra.mxu0 0
    %531 = vmatpush.bf16.msra.mxu0 0
    %532 = vmatpush.bf16.msra.mxu0 %v437
    %533 = vmatpush.bf16.msra.mxu0 %v429
    %534 = vmatmul.bf16.gmra.mxu0 %v81
    %v535 = vpop.f32.mrf.mxu0
    %v536 = vadd.f32 %v365, %v535
    %v537 = vpop.f32.mrf.mxu0
    %v538 = vadd.f32 %v365, %v537
    %539 = vdwg.mxu0
    %540 = vmatpush.bf16.msra.mxu0 0
    %541 = vmatpush.bf16.msra.mxu0 0
    %542 = vmatpush.bf16.msra.mxu0 0
    %543 = vmatpush.bf16.msra.mxu0 0
    %544 = vmatpush.bf16.msra.mxu0 0
    %545 = vmatpush.bf16.msra.mxu0 0
    %546 = vmatpush.bf16.msra.mxu0 %v438
    %547 = vmatpush.bf16.msra.mxu0 %v430
    %548 = vmatmul.bf16.gmra.mxu0 %v81
    %v549 = vpop.f32.mrf.mxu0
    %v550 = vadd.f32 %v366, %v549
    %v551 = vpop.f32.mrf.mxu0
    %v552 = vadd.f32 %v366, %v551
    %553 = vdwg.mxu0
    %554 = vmatpush.bf16.msra.mxu0 0
    %555 = vmatpush.bf16.msra.mxu0 0
    %556 = vmatpush.bf16.msra.mxu0 0
    %557 = vmatpush.bf16.msra.mxu0 0
    %558 = vmatpush.bf16.msra.mxu0 0
    %559 = vmatpush.bf16.msra.mxu0 0
    %560 = vmatpush.bf16.msra.mxu0 %v439
    %561 = vmatpush.bf16.msra.mxu0 %v431
    %562 = vmatmul.bf16.gmra.mxu0 %v81
    %v563 = vpop.f32.mrf.mxu0
    %v564 = vadd.f32 %v367, %v563
    %v565 = vpop.f32.mrf.mxu0
    %v566 = vadd.f32 %v367, %v565
    %567 = vdwg.mxu0
    %v568 = vmax.f32 %v466, %v494
    %v569 = vmax.f32 %v480, %v508
    %v570 = vmax.f32 %v568, %v522
    %v571 = vmax.f32 %v569, %v536
    %v572 = vmax.f32 %v570, %v550
    %v573 = vmax.f32 %v571, %v564
    %v574 = vmax.f32 %v572, %v573
    %575 = vmax.xlane.f32.xlu0 %v574
    %v576 = vpop.xlane.xlu0 %575
    %v577 = vmax.f32 %v468, %v496
    %v578 = vmax.f32 %v482, %v510
    %v579 = vmax.f32 %v577, %v524
    %v580 = vmax.f32 %v578, %v538
    %v581 = vmax.f32 %v579, %v552
    %v582 = vmax.f32 %v580, %v566
    %v583 = vmax.f32 %v581, %v582
    %584 = vmax.xlane.f32.xlu0 %v583
    %v585 = vpop.xlane.xlu0 %584
    %v586 = vsub.f32 %v466, %v576
    %v587 = vsub.f32 %v480, %v576
    %v588 = vsub.f32 %v494, %v576
    %v589 = vsub.f32 %v508, %v576
    %v590 = vsub.f32 %v522, %v576
    %v591 = vsub.f32 %v536, %v576
    %v592 = vsub.f32 %v550, %v576
    %v593 = vsub.f32 %v564, %v576
    %v594 = vsub.f32 %v468, %v585
    %v595 = vsub.f32 %v482, %v585
    %v596 = vsub.f32 %v496, %v585
    %v597 = vsub.f32 %v510, %v585
    %v598 = vsub.f32 %v524, %v585
    %v599 = vsub.f32 %v538, %v585
    %v600 = vsub.f32 %v552, %v585
    %v601 = vsub.f32 %v566, %v585
    %v602 = vmul.f32 %v586, 1.442695
    %v603 = vpow.pop %v602
    %v604 = vmul.f32 %v587, 1.442695
    %v605 = vpow.pop %v604
    %v606 = vmul.f32 %v588, 1.442695
    %v607 = vpow.pop %v606
    %v608 = vmul.f32 %v589, 1.442695
    %v609 = vpow.pop %v608
    %v610 = vmul.f32 %v590, 1.442695
    %v611 = vpow.pop %v610
    %v612 = vmul.f32 %v591, 1.442695
    %v613 = vpow.pop %v612
    %v614 = vmul.f32 %v592, 1.442695
    %v615 = vpow.pop %v614
    %v616 = vmul.f32 %v593, 1.442695
    %v617 = vpow.pop %v616
    %v618 = vmul.f32 %v594, 1.442695
    %v619 = vpow.pop %v618
    %v620 = vmul.f32 %v595, 1.442695
    %v621 = vpow.pop %v620
    %v622 = vmul.f32 %v596, 1.442695
    %v623 = vpow.pop %v622
    %v624 = vmul.f32 %v597, 1.442695
    %v625 = vpow.pop %v624
    %v626 = vmul.f32 %v598, 1.442695
    %v627 = vpow.pop %v626
    %v628 = vmul.f32 %v599, 1.442695
    %v629 = vpow.pop %v628
    %v630 = vmul.f32 %v600, 1.442695
    %v631 = vpow.pop %v630
    %v632 = vmul.f32 %v601, 1.442695
    %v633 = vpow.pop %v632
    %v634 = vadd.f32 %v603, %v605
    %v635 = vadd.f32 %v634, %v607
    %v636 = vadd.f32 %v635, %v609
    %v637 = vadd.f32 %v636, %v611
    %v638 = vadd.f32 %v637, %v613
    %v639 = vadd.f32 %v638, %v615
    %v640 = vadd.f32 %v639, %v617
    %641 = vadd.xlane.f32.xlu0 %v640
    %v642 = vpop.xlane.xlu0 %641
    %v643 = vadd.f32 %v619, %v621
    %v644 = vadd.f32 %v643, %v623
    %v645 = vadd.f32 %v644, %v625
    %v646 = vadd.f32 %v645, %v627
    %v647 = vadd.f32 %v646, %v629
    %v648 = vadd.f32 %v647, %v631
    %v649 = vadd.f32 %v648, %v633
    %650 = vadd.xlane.f32.xlu0 %v649
    %v651 = vpop.xlane.xlu0 %650
    %v652 = vrcp.pop %v642
    %v653 = vrcp.pop %v651
    %v654 = vmul.f32 %v603, %v652
    %v655 = vmul.f32 %v605, %v652
    %v656 = vmul.f32 %v607, %v652
    %v657 = vmul.f32 %v609, %v652
    %v658 = vmul.f32 %v611, %v652
    %v659 = vmul.f32 %v613, %v652
    %v660 = vmul.f32 %v615, %v652
    %v661 = vmul.f32 %v617, %v652
    %v662 = vmul.f32 %v619, %v653
    %v663 = vmul.f32 %v621, %v653
    %v664 = vmul.f32 %v623, %v653
    %v665 = vmul.f32 %v625, %v653
    %v666 = vmul.f32 %v627, %v653
    %v667 = vmul.f32 %v629, %v653
    %v668 = vmul.f32 %v631, %v653
    %v669 = vmul.f32 %v633, %v653
    %v670 = vpack.c.bf16 %v655, %v654
    %v671 = vpack.c.bf16 %v657, %v656
    %v672 = vpack.c.bf16 %v659, %v658
    %v673 = vpack.c.bf16 %v661, %v660
    %v674 = vpack.c.bf16 %v663, %v662
    %v675 = vpack.c.bf16 %v665, %v664
    %v676 = vpack.c.bf16 %v667, %v666
    %v677 = vpack.c.bf16 %v669, %v668
    %678 = vst [vmem:[#allocation7 + $0x4] sm:$0xff] %v670
    %679 = vst [vmem:[#allocation7 + $0xc] sm:$0xff] %v671
    %680 = vst [vmem:[#allocation7 + $0x14] sm:$0xff] %v672
    %681 = vst [vmem:[#allocation7 + $0x1c] sm:$0xff] %v673
    %682 = vst [vmem:[#allocation7 + $0x48] sm:$0xff] %v674
    %683 = vst [vmem:[#allocation7 + $0x50] sm:$0xff] %v675
    %684 = vst [vmem:[#allocation7 + $0x58] sm:$0xff] %v676
    %685 = vst [vmem:[#allocation7 + $0x60] sm:$0xff] %v677
    %v686 = vadd.s32 %v98, 128
    %v687 = vadd.s32 %v98, 256
    %v688 = vadd.s32 %v98, 384
    %v689 = vadd.s32 %v98, 512
    %v690 = vadd.s32 %v98, 640
    %v691 = vadd.s32 %v98, 768
    %v692 = vadd.s32 %v98, 896
    %693 = vset.pattern.permute.xlu0 5
    %694 = vperm.xlu0 %693, %v57
    %v695 = vpop.permute.xlu0 %694
    %696 = vset.pattern.permute.xlu0 5
    %697 = vperm.xlu0 %696, %v58
    %v698 = vpop.permute.xlu0 %697
    %vm699 = vcmp.eq.s32.totalorder %v98, %v695
    %vm700 = vcmp.eq.s32.totalorder %v686, %v695
    %vm701 = vcmp.eq.s32.totalorder %v687, %v695
    %vm702 = vcmp.eq.s32.totalorder %v688, %v695
    %vm703 = vcmp.eq.s32.totalorder %v689, %v695
    %vm704 = vcmp.eq.s32.totalorder %v690, %v695
    %vm705 = vcmp.eq.s32.totalorder %v691, %v695
    %vm706 = vcmp.eq.s32.totalorder %v692, %v695
    %vm707 = vcmp.eq.s32.totalorder %v98, %v698
    %vm708 = vcmp.eq.s32.totalorder %v686, %v698
    %vm709 = vcmp.eq.s32.totalorder %v687, %v698
    %vm710 = vcmp.eq.s32.totalorder %v688, %v698
    %vm711 = vcmp.eq.s32.totalorder %v689, %v698
    %vm712 = vcmp.eq.s32.totalorder %v690, %v698
    %vm713 = vcmp.eq.s32.totalorder %v691, %v698
    %vm714 = vcmp.eq.s32.totalorder %v692, %v698
    %v715 = vsel %vm699, %v466, 0.0
    %v716 = vsel %vm700, %v480, 0.0
    %v717 = vsel %vm701, %v494, 0.0
    %v718 = vsel %vm702, %v508, 0.0
    %v719 = vsel %vm703, %v522, 0.0
    %v720 = vsel %vm704, %v536, 0.0
    %v721 = vsel %vm705, %v550, 0.0
    %v722 = vsel %vm706, %v564, 0.0
    %v723 = vsel %vm707, %v468, 0.0
    %v724 = vsel %vm708, %v482, 0.0
    %v725 = vsel %vm709, %v496, 0.0
    %v726 = vsel %vm710, %v510, 0.0
    %v727 = vsel %vm711, %v524, 0.0
    %v728 = vsel %vm712, %v538, 0.0
    %v729 = vsel %vm713, %v552, 0.0
    %v730 = vsel %vm714, %v566, 0.0
    %v731 = vadd.f32 %v715, %v716
    %v732 = vadd.f32 %v731, %v717
    %v733 = vadd.f32 %v732, %v718
    %v734 = vadd.f32 %v733, %v719
    %v735 = vadd.f32 %v734, %v720
    %v736 = vadd.f32 %v735, %v721
    %v737 = vadd.f32 %v736, %v722
    %738 = vadd.xlane.f32.xlu0 %v737
    %v739 = vpop.xlane.xlu0 %738
    %v740 = vadd.f32 %v723, %v724
    %v741 = vadd.f32 %v740, %v725
    %v742 = vadd.f32 %v741, %v726
    %v743 = vadd.f32 %v742, %v727
    %v744 = vadd.f32 %v743, %v728
    %v745 = vadd.f32 %v744, %v729
    %v746 = vadd.f32 %v745, %v730
    %747 = vadd.xlane.f32.xlu0 %v746
    %v748 = vpop.xlane.xlu0 %747
    %v749 = vsub.f32 %v739, %v576
    %v750 = vsub.f32 %v748, %v585
    %v751 = vlog2.pop %v642
    %v752 = vmul.f32 %v751, 0.6931472
    %v753 = vlog2.pop %v651
    %v754 = vmul.f32 %v753, 0.6931472
    %v755 = vsub.f32 %v749, %v752
    %v756 = vsub.f32 %v750, %v754
    %v757 = vld [vmem:[#allocation5 + $0x24] sm:$0xff]
    %v758 = vld [vmem:[#allocation5 + $0x2c] sm:$0xff]
    %v759 = vld [vmem:[#allocation5 + $0x34] sm:$0xff]
    %v760 = vld [vmem:[#allocation5 + $0x3c] sm:$0xff]
    %v761 = vld [vmem:[#allocation5 + $0x68] sm:$0xff]
    %v762 = vld [vmem:[#allocation5 + $0x70] sm:$0xff]
    %v763 = vld [vmem:[#allocation5 + $0x78] sm:$0xff]
    %v764 = vld [vmem:[#allocation5 + $0x80] sm:$0xff]
    %v765 = vld [vmem:[#allocation5 + $0xac] sm:$0xff]
    %v766 = vld [vmem:[#allocation5 + $0xb4] sm:$0xff]
    %v767 = vld [vmem:[#allocation5 + $0xbc] sm:$0xff]
    %v768 = vld [vmem:[#allocation5 + $0xc4] sm:$0xff]
    %v769 = vld [vmem:[#allocation5 + $0xf0] sm:$0xff]
    %v770 = vld [vmem:[#allocation5 + $0xf8] sm:$0xff]
    %v771 = vld [vmem:[#allocation5 + $0x100] sm:$0xff]
    %v772 = vld [vmem:[#allocation5 + $0x108] sm:$0xff]
    %v773 = vld [vmem:[%s2 + $0x9] sm:$0xff]
    %v775 = vperm.slane %v773, 0
    %v776 = vperm.slane %v773, 1
    %v777 = vperm.slane %v773, 2
    %v778 = vperm.slane %v773, 3
    %v779 = vperm.slane %v773, 4
    %v780 = vperm.slane %v773, 5
    %v781 = vperm.slane %v773, 6
    %v782 = vperm.slane %v773, 7
    %v807 = vunpack.c.l.b16 %v757
    %v808 = vunpack.c.h.b16 %v757
    %v809 = vunpack.c.l.b16 %v758
    %v810 = vunpack.c.h.b16 %v758
    %v811 = vunpack.c.l.b16 %v759
    %v812 = vunpack.c.h.b16 %v759
    %v813 = vunpack.c.l.b16 %v760
    %v814 = vunpack.c.h.b16 %v760
    %v815 = vunpack.c.l.b16 %v761
    %v816 = vunpack.c.h.b16 %v761
    %v817 = vunpack.c.l.b16 %v762
    %v818 = vunpack.c.h.b16 %v762
    %v819 = vunpack.c.l.b16 %v763
    %v820 = vunpack.c.h.b16 %v763
    %v821 = vunpack.c.l.b16 %v764
    %v822 = vunpack.c.h.b16 %v764
    %v823 = vunpack.c.l.b16 %v765
    %v824 = vunpack.c.h.b16 %v765
    %v825 = vunpack.c.l.b16 %v766
    %v826 = vunpack.c.h.b16 %v766
    %v827 = vunpack.c.l.b16 %v767
    %v828 = vunpack.c.h.b16 %v767
    %v829 = vunpack.c.l.b16 %v768
    %v830 = vunpack.c.h.b16 %v768
    %v831 = vunpack.c.l.b16 %v769
    %v832 = vunpack.c.h.b16 %v769
    %v833 = vunpack.c.l.b16 %v770
    %v834 = vunpack.c.h.b16 %v770
    %v835 = vunpack.c.l.b16 %v771
    %v836 = vunpack.c.h.b16 %v771
    %v837 = vunpack.c.l.b16 %v772
    %v838 = vunpack.c.h.b16 %v772
    %v839 = vpack.c.b16 %v815, %v807
    %v840 = vpack.c.b16 %v816, %v808
    %v841 = vpack.c.b16 %v817, %v809
    %v842 = vpack.c.b16 %v818, %v810
    %v843 = vpack.c.b16 %v819, %v811
    %v844 = vpack.c.b16 %v820, %v812
    %v845 = vpack.c.b16 %v821, %v813
    %v846 = vpack.c.b16 %v822, %v814
    %v847 = vpack.c.b16 %v831, %v823
    %v848 = vpack.c.b16 %v832, %v824
    %v849 = vpack.c.b16 %v833, %v825
    %v850 = vpack.c.b16 %v834, %v826
    %v851 = vpack.c.b16 %v835, %v827
    %v852 = vpack.c.b16 %v836, %v828
    %v853 = vpack.c.b16 %v837, %v829
    %v854 = vpack.c.b16 %v838, %v830
    %871 = vmatpush.bf16.msra.mxu0 0
    %872 = vmatpush.bf16.msra.mxu0 0
    %873 = vmatpush.bf16.msra.mxu0 0
    %874 = vmatpush.bf16.msra.mxu0 0
    %875 = vmatpush.bf16.msra.mxu0 0
    %876 = vmatpush.bf16.msra.mxu0 0
    %877 = vmatpush.bf16.msra.mxu0 %v847
    %878 = vmatpush.bf16.msra.mxu0 %v839
    %879 = vmatmul.bf16.gmra.mxu0 %v81
    %v880 = vpop.f32.mrf.mxu0
    %v881 = vadd.f32 %v775, %v880
    %v882 = vpop.f32.mrf.mxu0
    %v883 = vadd.f32 %v775, %v882
    %884 = vdwg.mxu0
    %885 = vmatpush.bf16.msra.mxu0 0
    %886 = vmatpush.bf16.msra.mxu0 0
    %887 = vmatpush.bf16.msra.mxu0 0
    %888 = vmatpush.bf16.msra.mxu0 0
    %889 = vmatpush.bf16.msra.mxu0 0
    %890 = vmatpush.bf16.msra.mxu0 0
    %891 = vmatpush.bf16.msra.mxu0 %v848
    %892 = vmatpush.bf16.msra.mxu0 %v840
    %893 = vmatmul.bf16.gmra.mxu0 %v81
    %v894 = vpop.f32.mrf.mxu0
    %v895 = vadd.f32 %v776, %v894
    %v896 = vpop.f32.mrf.mxu0
    %v897 = vadd.f32 %v776, %v896
    %898 = vdwg.mxu0
    %899 = vmatpush.bf16.msra.mxu0 0
    %900 = vmatpush.bf16.msra.mxu0 0
    %901 = vmatpush.bf16.msra.mxu0 0
    %902 = vmatpush.bf16.msra.mxu0 0
    %903 = vmatpush.bf16.msra.mxu0 0
    %904 = vmatpush.bf16.msra.mxu0 0
    %905 = vmatpush.bf16.msra.mxu0 %v849
    %906 = vmatpush.bf16.msra.mxu0 %v841
    %907 = vmatmul.bf16.gmra.mxu0 %v81
    %v908 = vpop.f32.mrf.mxu0
    %v909 = vadd.f32 %v777, %v908
    %v910 = vpop.f32.mrf.mxu0
    %v911 = vadd.f32 %v777, %v910
    %912 = vdwg.mxu0
    %913 = vmatpush.bf16.msra.mxu0 0
    %914 = vmatpush.bf16.msra.mxu0 0
    %915 = vmatpush.bf16.msra.mxu0 0
    %916 = vmatpush.bf16.msra.mxu0 0
    %917 = vmatpush.bf16.msra.mxu0 0
    %918 = vmatpush.bf16.msra.mxu0 0
    %919 = vmatpush.bf16.msra.mxu0 %v850
    %920 = vmatpush.bf16.msra.mxu0 %v842
    %921 = vmatmul.bf16.gmra.mxu0 %v81
    %v922 = vpop.f32.mrf.mxu0
    %v923 = vadd.f32 %v778, %v922
    %v924 = vpop.f32.mrf.mxu0
    %v925 = vadd.f32 %v778, %v924
    %926 = vdwg.mxu0
    %927 = vmatpush.bf16.msra.mxu0 0
    %928 = vmatpush.bf16.msra.mxu0 0
    %929 = vmatpush.bf16.msra.mxu0 0
    %930 = vmatpush.bf16.msra.mxu0 0
    %931 = vmatpush.bf16.msra.mxu0 0
    %932 = vmatpush.bf16.msra.mxu0 0
    %933 = vmatpush.bf16.msra.mxu0 %v851
    %934 = vmatpush.bf16.msra.mxu0 %v843
    %935 = vmatmul.bf16.gmra.mxu0 %v81
    %v936 = vpop.f32.mrf.mxu0
    %v937 = vadd.f32 %v779, %v936
    %v938 = vpop.f32.mrf.mxu0
    %v939 = vadd.f32 %v779, %v938
    %940 = vdwg.mxu0
    %941 = vmatpush.bf16.msra.mxu0 0
    %942 = vmatpush.bf16.msra.mxu0 0
    %943 = vmatpush.bf16.msra.mxu0 0
    %944 = vmatpush.bf16.msra.mxu0 0
    %945 = vmatpush.bf16.msra.mxu0 0
    %946 = vmatpush.bf16.msra.mxu0 0
    %947 = vmatpush.bf16.msra.mxu0 %v852
    %948 = vmatpush.bf16.msra.mxu0 %v844
    %949 = vmatmul.bf16.gmra.mxu0 %v81
    %v950 = vpop.f32.mrf.mxu0
    %v951 = vadd.f32 %v780, %v950
    %v952 = vpop.f32.mrf.mxu0
    %v953 = vadd.f32 %v780, %v952
    %954 = vdwg.mxu0
    %955 = vmatpush.bf16.msra.mxu0 0
    %956 = vmatpush.bf16.msra.mxu0 0
    %957 = vmatpush.bf16.msra.mxu0 0
    %958 = vmatpush.bf16.msra.mxu0 0
    %959 = vmatpush.bf16.msra.mxu0 0
    %960 = vmatpush.bf16.msra.mxu0 0
    %961 = vmatpush.bf16.msra.mxu0 %v853
    %962 = vmatpush.bf16.msra.mxu0 %v845
    %963 = vmatmul.bf16.gmra.mxu0 %v81
    %v964 = vpop.f32.mrf.mxu0
    %v965 = vadd.f32 %v781, %v964
    %v966 = vpop.f32.mrf.mxu0
    %v967 = vadd.f32 %v781, %v966
    %968 = vdwg.mxu0
    %969 = vmatpush.bf16.msra.mxu0 0
    %970 = vmatpush.bf16.msra.mxu0 0
    %971 = vmatpush.bf16.msra.mxu0 0
    %972 = vmatpush.bf16.msra.mxu0 0
    %973 = vmatpush.bf16.msra.mxu0 0
    %974 = vmatpush.bf16.msra.mxu0 0
    %975 = vmatpush.bf16.msra.mxu0 %v854
    %976 = vmatpush.bf16.msra.mxu0 %v846
    %977 = vmatmul.bf16.gmra.mxu0 %v81
    %v978 = vpop.f32.mrf.mxu0
    %v979 = vadd.f32 %v782, %v978
    %v980 = vpop.f32.mrf.mxu0
    %v981 = vadd.f32 %v782, %v980
    %982 = vdwg.mxu0
    %v983 = vmax.f32 %v881, %v909
    %v984 = vmax.f32 %v895, %v923
    %v985 = vmax.f32 %v983, %v937
    %v986 = vmax.f32 %v984, %v951
    %v987 = vmax.f32 %v985, %v965
    %v988 = vmax.f32 %v986, %v979
    %v989 = vmax.f32 %v987, %v988
    %990 = vmax.xlane.f32.xlu0 %v989
    %v991 = vpop.xlane.xlu0 %990
    %v992 = vmax.f32 %v883, %v911
    %v993 = vmax.f32 %v897, %v925
    %v994 = vmax.f32 %v992, %v939
    %v995 = vmax.f32 %v993, %v953
    %v996 = vmax.f32 %v994, %v967
    %v997 = vmax.f32 %v995, %v981
    %v998 = vmax.f32 %v996, %v997
    %999 = vmax.xlane.f32.xlu0 %v998
    %v1000 = vpop.xlane.xlu0 %999
    %v1001 = vsub.f32 %v881, %v991
    %v1002 = vsub.f32 %v895, %v991
    %v1003 = vsub.f32 %v909, %v991
    %v1004 = vsub.f32 %v923, %v991
    %v1005 = vsub.f32 %v937, %v991
    %v1006 = vsub.f32 %v951, %v991
    %v1007 = vsub.f32 %v965, %v991
    %v1008 = vsub.f32 %v979, %v991
    %v1009 = vsub.f32 %v883, %v1000
    %v1010 = vsub.f32 %v897, %v1000
    %v1011 = vsub.f32 %v911, %v1000
    %v1012 = vsub.f32 %v925, %v1000
    %v1013 = vsub.f32 %v939, %v1000
    %v1014 = vsub.f32 %v953, %v1000
    %v1015 = vsub.f32 %v967, %v1000
    %v1016 = vsub.f32 %v981, %v1000
    %v1017 = vmul.f32 %v1001, 1.442695
    %v1018 = vpow.pop %v1017
    %v1019 = vmul.f32 %v1002, 1.442695
    %v1020 = vpow.pop %v1019
    %v1021 = vmul.f32 %v1003, 1.442695
    %v1022 = vpow.pop %v1021
    %v1023 = vmul.f32 %v1004, 1.442695
    %v1024 = vpow.pop %v1023
    %v1025 = vmul.f32 %v1005, 1.442695
    %v1026 = vpow.pop %v1025
    %v1027 = vmul.f32 %v1006, 1.442695
    %v1028 = vpow.pop %v1027
    %v1029 = vmul.f32 %v1007, 1.442695
    %v1030 = vpow.pop %v1029
    %v1031 = vmul.f32 %v1008, 1.442695
    %v1032 = vpow.pop %v1031
    %v1033 = vmul.f32 %v1009, 1.442695
    %v1034 = vpow.pop %v1033
    %v1035 = vmul.f32 %v1010, 1.442695
    %v1036 = vpow.pop %v1035
    %v1037 = vmul.f32 %v1011, 1.442695
    %v1038 = vpow.pop %v1037
    %v1039 = vmul.f32 %v1012, 1.442695
    %v1040 = vpow.pop %v1039
    %v1041 = vmul.f32 %v1013, 1.442695
    %v1042 = vpow.pop %v1041
    %v1043 = vmul.f32 %v1014, 1.442695
    %v1044 = vpow.pop %v1043
    %v1045 = vmul.f32 %v1015, 1.442695
    %v1046 = vpow.pop %v1045
    %v1047 = vmul.f32 %v1016, 1.442695
    %v1048 = vpow.pop %v1047
    %v1049 = vadd.f32 %v1018, %v1020
    %v1050 = vadd.f32 %v1049, %v1022
    %v1051 = vadd.f32 %v1050, %v1024
    %v1052 = vadd.f32 %v1051, %v1026
    %v1053 = vadd.f32 %v1052, %v1028
    %v1054 = vadd.f32 %v1053, %v1030
    %v1055 = vadd.f32 %v1054, %v1032
    %1056 = vadd.xlane.f32.xlu0 %v1055
    %v1057 = vpop.xlane.xlu0 %1056
    %v1058 = vadd.f32 %v1034, %v1036
    %v1059 = vadd.f32 %v1058, %v1038
    %v1060 = vadd.f32 %v1059, %v1040
    %v1061 = vadd.f32 %v1060, %v1042
    %v1062 = vadd.f32 %v1061, %v1044
    %v1063 = vadd.f32 %v1062, %v1046
    %v1064 = vadd.f32 %v1063, %v1048
    %1065 = vadd.xlane.f32.xlu0 %v1064
    %v1066 = vpop.xlane.xlu0 %1065
    %v1067 = vrcp.pop %v1057
    %v1068 = vrcp.pop %v1066
    %v1069 = vmul.f32 %v1018, %v1067
    %v1070 = vmul.f32 %v1020, %v1067
    %v1071 = vmul.f32 %v1022, %v1067
    %v1072 = vmul.f32 %v1024, %v1067
    %v1073 = vmul.f32 %v1026, %v1067
    %v1074 = vmul.f32 %v1028, %v1067
    %v1075 = vmul.f32 %v1030, %v1067
    %v1076 = vmul.f32 %v1032, %v1067
    %v1077 = vmul.f32 %v1034, %v1068
    %v1078 = vmul.f32 %v1036, %v1068
    %v1079 = vmul.f32 %v1038, %v1068
    %v1080 = vmul.f32 %v1040, %v1068
    %v1081 = vmul.f32 %v1042, %v1068
    %v1082 = vmul.f32 %v1044, %v1068
    %v1083 = vmul.f32 %v1046, %v1068
    %v1084 = vmul.f32 %v1048, %v1068
    %v1085 = vpack.c.bf16 %v1070, %v1069
    %v1086 = vpack.c.bf16 %v1072, %v1071
    %v1087 = vpack.c.bf16 %v1074, %v1073
    %v1088 = vpack.c.bf16 %v1076, %v1075
    %v1089 = vpack.c.bf16 %v1078, %v1077
    %v1090 = vpack.c.bf16 %v1080, %v1079
    %v1091 = vpack.c.bf16 %v1082, %v1081
    %v1092 = vpack.c.bf16 %v1084, %v1083
    %1093 = vst [vmem:[#allocation7 + $0x24] sm:$0xff] %v1085
    %1094 = vst [vmem:[#allocation7 + $0x2c] sm:$0xff] %v1086
    %1095 = vst [vmem:[#allocation7 + $0x34] sm:$0xff] %v1087
    %1096 = vst [vmem:[#allocation7 + $0x3c] sm:$0xff] %v1088
    %1097 = vst [vmem:[#allocation7 + $0x68] sm:$0xff] %v1089
    %1098 = vst [vmem:[#allocation7 + $0x70] sm:$0xff] %v1090
    %1099 = vst [vmem:[#allocation7 + $0x78] sm:$0xff] %v1091
    %1100 = vst [vmem:[#allocation7 + $0x80] sm:$0xff] %v1092
    %1101 = vset.pattern.permute.xlu0 6
    %1102 = vperm.xlu0 %1101, %v57
    %v1103 = vpop.permute.xlu0 %1102
    %1104 = vset.pattern.permute.xlu0 6
    %1105 = vperm.xlu0 %1104, %v58
    %v1106 = vpop.permute.xlu0 %1105
    %vm1107 = vcmp.eq.s32.totalorder %v98, %v1103
    %vm1108 = vcmp.eq.s32.totalorder %v686, %v1103
    %vm1109 = vcmp.eq.s32.totalorder %v687, %v1103
    %vm1110 = vcmp.eq.s32.totalorder %v688, %v1103
    %vm1111 = vcmp.eq.s32.totalorder %v689, %v1103
    %vm1112 = vcmp.eq.s32.totalorder %v690, %v1103
    %vm1113 = vcmp.eq.s32.totalorder %v691, %v1103
    %vm1114 = vcmp.eq.s32.totalorder %v692, %v1103
    %vm1115 = vcmp.eq.s32.totalorder %v98, %v1106
    %vm1116 = vcmp.eq.s32.totalorder %v686, %v1106
    %vm1117 = vcmp.eq.s32.totalorder %v687, %v1106
    %vm1118 = vcmp.eq.s32.totalorder %v688, %v1106
    %vm1119 = vcmp.eq.s32.totalorder %v689, %v1106
    %vm1120 = vcmp.eq.s32.totalorder %v690, %v1106
    %vm1121 = vcmp.eq.s32.totalorder %v691, %v1106
    %vm1122 = vcmp.eq.s32.totalorder %v692, %v1106
    %v1123 = vsel %vm1107, %v881, 0.0
    %v1124 = vsel %vm1108, %v895, 0.0
    %v1125 = vsel %vm1109, %v909, 0.0
    %v1126 = vsel %vm1110, %v923, 0.0
    %v1127 = vsel %vm1111, %v937, 0.0
    %v1128 = vsel %vm1112, %v951, 0.0
    %v1129 = vsel %vm1113, %v965, 0.0
    %v1130 = vsel %vm1114, %v979, 0.0
    %v1131 = vsel %vm1115, %v883, 0.0
    %v1132 = vsel %vm1116, %v897, 0.0
    %v1133 = vsel %vm1117, %v911, 0.0
    %v1134 = vsel %vm1118, %v925, 0.0
    %v1135 = vsel %vm1119, %v939, 0.0
    %v1136 = vsel %vm1120, %v953, 0.0
    %v1137 = vsel %vm1121, %v967, 0.0
    %v1138 = vsel %vm1122, %v981, 0.0
    %v1139 = vadd.f32 %v1123, %v1124
    %v1140 = vadd.f32 %v1139, %v1125
    %v1141 = vadd.f32 %v1140, %v1126
    %v1142 = vadd.f32 %v1141, %v1127
    %v1143 = vadd.f32 %v1142, %v1128
    %v1144 = vadd.f32 %v1143, %v1129
    %v1145 = vadd.f32 %v1144, %v1130
    %1146 = vadd.xlane.f32.xlu0 %v1145
    %v1147 = vpop.xlane.xlu0 %1146
    %v1148 = vadd.f32 %v1131, %v1132
    %v1149 = vadd.f32 %v1148, %v1133
    %v1150 = vadd.f32 %v1149, %v1134
    %v1151 = vadd.f32 %v1150, %v1135
    %v1152 = vadd.f32 %v1151, %v1136
    %v1153 = vadd.f32 %v1152, %v1137
    %v1154 = vadd.f32 %v1153, %v1138
    %1155 = vadd.xlane.f32.xlu0 %v1154
    %v1156 = vpop.xlane.xlu0 %1155
    %v1157 = vsub.f32 %v1147, %v991
    %v1158 = vsub.f32 %v1156, %v1000
    %v1159 = vlog2.pop %v1057
    %v1160 = vmul.f32 %v1159, 0.6931472
    %v1161 = vlog2.pop %v1066
    %v1162 = vmul.f32 %v1161, 0.6931472
    %v1163 = vsub.f32 %v1157, %v1160
    %v1164 = vsub.f32 %v1158, %v1162
    %vm1165 = vcmp.eq.s32.totalorder %v57, 1
    %vm1166 = vcmp.eq.s32.totalorder %v58, 1
    %v1167 = vsel %vm1165, 1, 0
    %v1168 = vsel %vm1166, 1, 0
    %v1169 = vcvt.s32.f32 %v1167
    %v1170 = vcvt.s32.f32 %v1168
    %v1171 = vmul.f32 %v1169, %v228
    %v1172 = vmul.f32 %v1170, %v229
    %v1173 = vadd.f32 %v192, %v1171
    %v1174 = vadd.f32 %v193, %v1172
    %vm1175 = vcmp.eq.s32.totalorder %v57, 2
    %vm1176 = vcmp.eq.s32.totalorder %v58, 2
    %v1177 = vsel %vm1175, 1, 0
    %v1178 = vsel %vm1176, 1, 0
    %v1179 = vcvt.s32.f32 %v1177
    %v1180 = vcvt.s32.f32 %v1178
    %v1181 = vmul.f32 %v1179, %v264
    %v1182 = vmul.f32 %v1180, %v265
    %v1183 = vadd.f32 %v1173, %v1181
    %v1184 = vadd.f32 %v1174, %v1182
    %vm1185 = vcmp.eq.s32.totalorder %v57, 4
    %vm1186 = vcmp.eq.s32.totalorder %v58, 4
    %v1187 = vsel %vm1185, 1, 0
    %v1188 = vsel %vm1186, 1, 0
    %v1189 = vcvt.s32.f32 %v1187
    %v1190 = vcvt.s32.f32 %v1188
    %v1191 = vmul.f32 %v1189, %v300
    %v1192 = vmul.f32 %v1190, %v301
    %v1193 = vadd.f32 %v1183, %v1191
    %v1194 = vadd.f32 %v1184, %v1192
    %vm1195 = vcmp.eq.s32.totalorder %v57, 3
    %vm1196 = vcmp.eq.s32.totalorder %v58, 3
    %v1197 = vsel %vm1195, 1, 0
    %v1198 = vsel %vm1196, 1, 0
    %v1199 = vcvt.s32.f32 %v1197
    %v1200 = vcvt.s32.f32 %v1198
    %v1201 = vmul.f32 %v1199, %v336
    %v1202 = vmul.f32 %v1200, %v337
    %v1203 = vadd.f32 %v1193, %v1201
    %v1204 = vadd.f32 %v1194, %v1202
    %v1205 = vmul.f32 %v1199, %v755
    %v1206 = vmul.f32 %v1200, %v756
    %v1207 = vadd.f32 %v1203, %v1205
    %v1208 = vadd.f32 %v1204, %v1206
    %vm1209 = vcmp.eq.s32.totalorder %v57, 5
    %vm1210 = vcmp.eq.s32.totalorder %v58, 5
    %v1211 = vsel %vm1209, 1, 0
    %v1212 = vsel %vm1210, 1, 0
    %v1213 = vcvt.s32.f32 %v1211
    %v1214 = vcvt.s32.f32 %v1212
    %v1215 = vmul.f32 %v1213, %v1163
    %v1216 = vmul.f32 %v1214, %v1164
    %v1217 = vadd.f32 %v1207, %v1215
    %v1218 = vadd.f32 %v1208, %v1216
    %vm1219 = vcmp.eq.s32.totalorder %v98, 0
    %v1220 = vsel %vm1219, %v192, 0.0
    %v1221 = vsel %vm1219, %v193, 0.0
    %vm1222 = vcmp.eq.s32.totalorder %v98, 1
    %v1223 = vsel %vm1222, %v228, %v1220
    %v1224 = vsel %vm1222, %v229, %v1221
    %vm1225 = vcmp.eq.s32.totalorder %v98, 2
    %v1226 = vsel %vm1225, %v264, %v1223
    %v1227 = vsel %vm1225, %v265, %v1224
    %vm1228 = vcmp.eq.s32.totalorder %v98, 3
    %v1229 = vsel %vm1228, %v300, %v1226
    %v1230 = vsel %vm1228, %v301, %v1227
    %vm1231 = vcmp.eq.s32.totalorder %v98, 4
    %v1232 = vsel %vm1231, %v336, %v1229
    %v1233 = vsel %vm1231, %v337, %v1230
    %vm1234 = vcmp.eq.s32.totalorder %v98, 5
    %v1235 = vsel %vm1234, %v755, %v1232
    %v1236 = vsel %vm1234, %v756, %v1233
    %vm1237 = vcmp.eq.s32.totalorder %v98, 6
    %v1238 = vsel %vm1237, %v1163, %v1235
    %v1239 = vsel %vm1237, %v1164, %v1236
    %vm1240 = vcmp.eq.s32.totalorder %v98, 7
    %1242 = vset.pattern.permute.xlu0 0
    %1243 = vperm.xlu0 %1242, %v1217
    %v1244 = vpop.permute.xlu0 %1243
    %1247 = vset.pattern.permute.xlu0 0
    %1248 = vperm.xlu0 %1247, %v1218
    %v1249 = vpop.permute.xlu0 %1248
    %v1251 = vsel %vm1240, %v1244, %v1238
    %v1252 = vsel %vm1240, %v1249, %v1239
    %1253 = vst [vmem:[#allocation8] sm:$0xff] %v1251
    %1254 = vst [vmem:[#allocation8 + $0x8] sm:$0xff] %v1252
    // Predicated region
    $region26: #{tpu_custom_call.1} parent=1 // pred_check
      _
    $region27: #{tpu_custom_call.1} parent=1 // pred_check_branch
      %1256 = sbr.rel (0) target = $region29
    $region28: #{tpu_custom_call.1} parent=1 // pred_region
      %1258 = vsyncadd [#allocation4], 0
      %s1259 = sshll.u32 [#allocation7], 4
      %s1260 = int_to_ptr.vmem [resolvable:$true] %s1259
      %s1261 = sshll.u32 %s4, 4
      %s1262 = int_to_ptr.hbm [resolvable:$true] %s1261
      %1267 = dma.vmem_to_hbm [thread:$0]  %s1260, 2176, %s1262, [#allocation4], 1088, 1088, 68
    $region29: #{tpu_custom_call.1} parent=1 // pred_fallthru
      _
    // Predicated region
    $region30: #{tpu_custom_call.1} parent=1 // pred_check
      _
    $region31: #{tpu_custom_call.1} parent=1 // pred_check_branch
      %1269 = sbr.rel (0) target = $region33
    $region32: #{tpu_custom_call.1} parent=1 // pred_region
      %1271 = vsyncadd [#allocation9], 0
      %s1272 = sshll.u32 [#allocation8], 4
      %s1273 = int_to_ptr.vmem [resolvable:$true] %s1272
      %s1274 = sshll.u32 %s5, 4
      %s1275 = int_to_ptr.hbm [resolvable:$true] %s1274
      %1280 = dma.vmem_to_hbm [thread:$0]  %s1273, 256, %s1275, [#allocation9], 128, 128, 8
    $region33: #{tpu_custom_call.1} parent=1 // pred_fallthru
      _
    // Predicated region
    $region34: #{tpu_custom_call.1} parent=1 // pred_check
      _
    $region35: #{tpu_custom_call.1} parent=1 // pred_check_branch
      %1282 = sbr.rel (0) target = $region37
    $region36: #{tpu_custom_call.1} parent=1 // pred_region
      %1284 = dma.done [#allocation4], 2176
    $region37: #{tpu_custom_call.1} parent=1 // pred_fallthru
      _
    // Predicated region
    $region38: #{tpu_custom_call.1} parent=1 // pred_check
      _
    $region39: #{tpu_custom_call.1} parent=1 // pred_check_branch
      %1286 = sbr.rel (0) target = $region41
    $region40: #{tpu_custom_call.1} parent=1 // pred_region
      %1288 = dma.done [#allocation9], 256
    $region41: #{tpu_custom_call.1} parent=1 // pred_fallthru
      _
    %1289 = vsyncpa [#allocation3], 1
    %1290 = vsyncpa [#allocation6], 1
    %1291 = vsyncpa [#allocation4], 1
    %1292 = vsyncpa [#allocation9], 1

// kernel: tpu_custom_call.1
$region0: #{tpu_custom_call.1}
  #allocation0 [shape = 'u32[]', space=smem, size = 0x4, offset = 0x4, fixed_abs, tag = 'smem constant byte address 0x4 - core index']
  #allocation1 [shape = 'u32[72,128]{1,0:T(1,128)}', space=vmem, size = 0x9000, scoped, tag = 'internal scratch']
  %s0 = inlined_call_operand.hbm [shape: f32[16,32], index: 0, kind: input, shape index: {}]
  %s1 = inlined_call_operand.hbm [shape: bf16[32,2176], index: 1, kind: input, shape index: {}]
  %s2 = inlined_call_operand.vmem [shape: f32[1,2176], index: 2, kind: input, shape index: {}]
  %s3 = inlined_call_operand.vmem [shape: s32[16,8], index: 3, kind: input, shape index: {}]
  %s4 = inlined_call_operand.hbm [shape: bf16[16,2176], index: 4, kind: output, shape index: {0}]
  %s5 = inlined_call_operand.hbm [shape: f32[16,128], index: 5, kind: output, shape index: {1}]
  %6 = xla_tuple %s4, %s5
  %s7 = sld [smem:[#allocation0]]
  $region42: #{tpu_custom_call.1} parent=0
    _
  %s9 = ssub.s32 1, %s7
  %s10 = scalar_select 0, %s9, %s7
  $region1: #{tpu_custom_call.1} parent=0
    #allocation2 [shape = 'u8[8192]{0}', space=vmem, size = 0x2000, scoped, tag = 'input window, operand 0, single buffered']
    #allocation3 [shape = 's32[1]{0}', space=sflag, size = 0x4, scoped, tag = 'scoped memory for tpu_custom_call.1']
    #allocation4 [shape = 's32[1]{0}', space=sflag, size = 0x4, scoped, tag = 'scoped memory for tpu_custom_call.1']
    #allocation5 [shape = 'u8[139264]{0}', space=vmem, size = 0x22000, scoped, tag = 'input window, operand 1, single buffered']
    #allocation6 [shape = 's32[1]{0}', space=sflag, size = 0x4, scoped, tag = 'scoped memory for tpu_custom_call.1']
    #allocation7 [shape = 'u8[69632]{0}', space=vmem, size = 0x11000, scoped, tag = 'output window, operand 0, single buffered']
    #allocation8 [shape = 'u8[8192]{0}', space=vmem, size = 0x2000, scoped, tag = 'output window, operand 1, single buffered']
    #allocation9 [shape = 's32[1]{0}', space=sflag, size = 0x4, scoped, tag = 'scoped memory for tpu_custom_call.1']
    %11 = vsyncpa [#allocation3], 0
    %12 = vsyncpa [#allocation6], 0
    %13 = vsyncpa [#allocation4], 0
    %14 = vsyncpa [#allocation9], 0
    // Predicated region
    $region2: #{tpu_custom_call.1} parent=1 // pred_check
      _
    $region3: #{tpu_custom_call.1} parent=1 // pred_check_branch
      %16 = sbr.rel (0) target = $region5
    $region4: #{tpu_custom_call.1} parent=1 // pred_region
      %18 = vsyncadd [#allocation3], 0
      %s19 = sshll.u32 %s0, 4
      %s20 = int_to_ptr.hbm [resolvable:$true] %s19
      %s21 = sshll.u32 [#allocation2], 4
      %s22 = int_to_ptr.vmem [resolvable:$true] %s21
      %27 = dma.hbm_to_vmem [thread:$0]  %s20, 256, %s22, [#allocation3], 128, 128, 8
    $region5: #{tpu_custom_call.1} parent=1 // pred_fallthru
      _
    // Predicated region
    $region6: #{tpu_custom_call.1} parent=1 // pred_check
      _
    $region7: #{tpu_custom_call.1} parent=1 // pred_check_branch
      %29 = sbr.rel (0) target = $region9
    $region8: #{tpu_custom_call.1} parent=1 // pred_region
      %31 = vsyncadd [#allocation6], 0
      %s32 = sshll.u32 %s1, 4
      %s33 = int_to_ptr.hbm [resolvable:$true] %s32
      %s34 = sshll.u32 [#allocation5], 4
      %s35 = int_to_ptr.vmem [resolvable:$true] %s34
      %40 = dma.hbm_to_vmem [thread:$0]  %s33, 4352, %s35, [#allocation6], 1088, 1088, 68
    $region9: #{tpu_custom_call.1} parent=1 // pred_fallthru
      _
    // Predicated region
    $region10: #{tpu_custom_call.1} parent=1 // pred_check
      _
    $region11: #{tpu_custom_call.1} parent=1 // pred_check_branch
      %42 = sbr.rel (0) target = $region13
    $region12: #{tpu_custom_call.1} parent=1 // pred_region
      _
    $region13: #{tpu_custom_call.1} parent=1 // pred_fallthru
      _
    // Predicated region
    $region14: #{tpu_custom_call.1} parent=1 // pred_check
      _
    $region15: #{tpu_custom_call.1} parent=1 // pred_check_branch
      %44 = sbr.rel (0) target = $region17
    $region16: #{tpu_custom_call.1} parent=1 // pred_region
      _
    $region17: #{tpu_custom_call.1} parent=1 // pred_fallthru
      _
    // Predicated region
    $region18: #{tpu_custom_call.1} parent=1 // pred_check
      _
    $region19: #{tpu_custom_call.1} parent=1 // pred_check_branch
      %46 = sbr.rel (0) target = $region21
    $region20: #{tpu_custom_call.1} parent=1 // pred_region
      %48 = dma.done [#allocation3], 256
    $region21: #{tpu_custom_call.1} parent=1 // pred_fallthru
      _
    // Predicated region
    $region22: #{tpu_custom_call.1} parent=1 // pred_check
      _
    $region23: #{tpu_custom_call.1} parent=1 // pred_check_branch
      %50 = sbr.rel (0) target = $region25
    $region24: #{tpu_custom_call.1} parent=1 // pred_region
      %52 = dma.done [#allocation6], 4352
    $region25: #{tpu_custom_call.1} parent=1 // pred_fallthru
      _
    %v54 = vld [vmem:[#allocation2] sm:$0xff]
    %v55 = vld [vmem:[#allocation2 + $0x8] sm:$0xff]
    %v56 = vpack.c.bf16 %v55, %v54
    %v57 = vld [vmem:[%s3] sm:$0xff]
    %v58 = vld [vmem:[%s3 + $0x8] sm:$0xff]
    %v59 = vld [vmem:[#allocation5] sm:$0xf]
    %v60 = vld [vmem:[#allocation5 + $0x44] sm:$0xf]
    %v61 = vld [vmem:[#allocation5 + $0x88] sm:$0xf]
    %v62 = vld [vmem:[#allocation5 + $0xcc] sm:$0xf]
    %v63 = vld [vmem:[%s2] sm:$0x1]
    %v65 = vperm.slane %v63, 0
    %v71 = vunpack.c.l.b16 %v59
    %v72 = vunpack.c.l.b16 %v60
    %v73 = vunpack.c.l.b16 %v61
    %v74 = vunpack.c.l.b16 %v62
    %v75 = vpack.c.b16 %v72, %v71
    %v76 = vpack.c.b16 %v74, %v73
    %vm79 = vcmask 261120
    %v81 = vsel %vm79, %v56, 0
    %83 = vmatpush.bf16.msra.mxu0 0
    %84 = vmatpush.bf16.msra.mxu0 0
    %85 = vmatpush.bf16.msra.mxu0 0
    %86 = vmatpush.bf16.msra.mxu0 0
    %87 = vmatpush.bf16.msra.mxu0 0
    %88 = vmatpush.bf16.msra.mxu0 0
    %89 = vmatpush.bf16.msra.mxu0 %v76
    %90 = vmatpush.bf16.msra.mxu0 %v75
    %91 = vmatmul.bf16.gmra.mxu0 %v81
    %v92 = vpop.f32.mrf.mxu0
    %v93 = vadd.f32 %v65, %v92
    %v94 = vpop.f32.mrf.mxu0
    %v95 = vadd.f32 %v65, %v94
    %96 = vdwg.mxu0
    %v97 = vlaneseq
    %v98 = vand.u32 %v97, 127
    %vm99 = vcmp.ge.s32.totalorder %v98, 0
    %vm100 = vcmp.lt.s32.totalorder %v98, 6
    %vm101 = vmand %vm99, %vm100
    %v102 = vsel %vm101, %v93, -1e+30
    %v103 = vsel %vm101, %v95, -1e+30
    %104 = vmax.xlane.f32.xlu0 %v102
    %v105 = vpop.xlane.xlu0 %104
    %106 = vmax.xlane.f32.xlu0 %v103
    %v107 = vpop.xlane.xlu0 %106
    %v108 = vsel %vm101, %v105, 0.0
    %v109 = vsel %vm101, %v107, 0.0
    %vm110 = vcmp.ge.s32.totalorder %v98, 6
    %vm111 = vcmp.lt.s32.totalorder %v98, 14
    %vm112 = vmand %vm110, %vm111
    %v113 = vsel %vm112, %v93, -1e+30
    %v114 = vsel %vm112, %v95, -1e+30
    %115 = vmax.xlane.f32.xlu0 %v113
    %v116 = vpop.xlane.xlu0 %115
    %117 = vmax.xlane.f32.xlu0 %v114
    %v118 = vpop.xlane.xlu0 %117
    %v119 = vsel %vm112, %v116, %v108
    %v120 = vsel %vm112, %v118, %v109
    %vm121 = vcmp.ge.s32.totalorder %v98, 14
    %vm122 = vcmp.lt.s32.totalorder %v98, 22
    %vm123 = vmand %vm121, %vm122
    %v124 = vsel %vm123, %v93, -1e+30
    %v125 = vsel %vm123, %v95, -1e+30
    %126 = vmax.xlane.f32.xlu0 %v124
    %v127 = vpop.xlane.xlu0 %126
    %128 = vmax.xlane.f32.xlu0 %v125
    %v129 = vpop.xlane.xlu0 %128
    %v130 = vsel %vm123, %v127, %v119
    %v131 = vsel %vm123, %v129, %v120
    %vm132 = vcmp.ge.s32.totalorder %v98, 22
    %vm133 = vcmp.lt.s32.totalorder %v98, 30
    %vm134 = vmand %vm132, %vm133
    %v135 = vsel %vm134, %v93, -1e+30
    %v136 = vsel %vm134, %v95, -1e+30
    %137 = vmax.xlane.f32.xlu0 %v135
    %v138 = vpop.xlane.xlu0 %137
    %139 = vmax.xlane.f32.xlu0 %v136
    %v140 = vpop.xlane.xlu0 %139
    %v141 = vsel %vm134, %v138, %v130
    %v142 = vsel %vm134, %v140, %v131
    %vm143 = vcmp.ge.s32.totalorder %v98, 30
    %vm144 = vcmp.lt.s32.totalorder %v98, 38
    %vm145 = vmand %vm143, %vm144
    %v146 = vsel %vm145, %v93, -1e+30
    %v147 = vsel %vm145, %v95, -1e+30
    %148 = vmax.xlane.f32.xlu0 %v146
    %v149 = vpop.xlane.xlu0 %148
    %150 = vmax.xlane.f32.xlu0 %v147
    %v151 = vpop.xlane.xlu0 %150
    %v152 = vsel %vm145, %v149, %v141
    %v153 = vsel %vm145, %v151, %v142
    %v154 = vsub.f32 %v93, %v152
    %v155 = vsub.f32 %v95, %v153
    %v156 = vmul.f32 %v154, 1.442695
    %v157 = vpow.pop %v156
    %v158 = vmul.f32 %v155, 1.442695
    %v159 = vpow.pop %v158
    %v160 = vsel %vm101, %v157, 0.0
    %v161 = vsel %vm101, %v159, 0.0
    %162 = vadd.xlane.f32.xlu0 %v160
    %v163 = vpop.xlane.xlu0 %162
    %164 = vadd.xlane.f32.xlu0 %v161
    %v165 = vpop.xlane.xlu0 %164
    %v166 = vrcp.pop %v163
    %v167 = vrcp.pop %v165
    %v168 = vmul.f32 %v160, %v166
    %v169 = vmul.f32 %v161, %v167
    %v170 = vadd.f32 %v168, 0.0
    %v171 = vadd.f32 %v169, 0.0
    %172 = vset.pattern.permute.xlu0 0
    %173 = vperm.xlu0 %172, %v57
    %v174 = vpop.permute.xlu0 %173
    %175 = vset.pattern.permute.xlu0 0
    %176 = vperm.xlu0 %175, %v58
    %v177 = vpop.permute.xlu0 %176
    %vm178 = vcmp.eq.s32.totalorder %v98, %v174
    %vm179 = vcmp.eq.s32.totalorder %v98, %v177
    %v180 = vsel %vm178, %v93, 0.0
    %v181 = vsel %vm179, %v95, 0.0
    %182 = vadd.xlane.f32.xlu0 %v180
    %v183 = vpop.xlane.xlu0 %182
    %184 = vadd.xlane.f32.xlu0 %v181
    %v185 = vpop.xlane.xlu0 %184
    %v186 = vsub.f32 %v183, %v105
    %v187 = vsub.f32 %v185, %v107
    %v188 = vlog2.pop %v163
    %v189 = vmul.f32 %v188, 0.6931472
    %v190 = vlog2.pop %v165
    %v191 = vmul.f32 %v190, 0.6931472
    %v192 = vsub.f32 %v186, %v189
    %v193 = vsub.f32 %v187, %v191
    %v194 = vsel %vm112, %v157, 0.0
    %v195 = vsel %vm112, %v159, 0.0
    %196 = vadd.xlane.f32.xlu0 %v194
    %v197 = vpop.xlane.xlu0 %196
    %198 = vadd.xlane.f32.xlu0 %v195
    %v199 = vpop.xlane.xlu0 %198
    %v200 = vrcp.pop %v197
    %v201 = vrcp.pop %v199
    %v202 = vmul.f32 %v194, %v200
    %v203 = vmul.f32 %v195, %v201
    %v204 = vadd.f32 %v170, %v202
    %v205 = vadd.f32 %v171, %v203
    %v206 = vadd.s32 %v57, 6
    %v207 = vadd.s32 %v58, 6
    %208 = vset.pattern.permute.xlu0 1
    %209 = vperm.xlu0 %208, %v206
    %v210 = vpop.permute.xlu0 %209
    %211 = vset.pattern.permute.xlu0 1
    %212 = vperm.xlu0 %211, %v207
    %v213 = vpop.permute.xlu0 %212
    %vm214 = vcmp.eq.s32.totalorder %v98, %v210
    %vm215 = vcmp.eq.s32.totalorder %v98, %v213
    %v216 = vsel %vm214, %v93, 0.0
    %v217 = vsel %vm215, %v95, 0.0
    %218 = vadd.xlane.f32.xlu0 %v216
    %v219 = vpop.xlane.xlu0 %218
    %220 = vadd.xlane.f32.xlu0 %v217
    %v221 = vpop.xlane.xlu0 %220
    %v222 = vsub.f32 %v219, %v116
    %v223 = vsub.f32 %v221, %v118
    %v224 = vlog2.pop %v197
    %v225 = vmul.f32 %v224, 0.6931472
    %v226 = vlog2.pop %v199
    %v227 = vmul.f32 %v226, 0.6931472
    %v228 = vsub.f32 %v222, %v225
    %v229 = vsub.f32 %v223, %v227
    %v230 = vsel %vm123, %v157, 0.0
    %v231 = vsel %vm123, %v159, 0.0
    %232 = vadd.xlane.f32.xlu0 %v230
    %v233 = vpop.xlane.xlu0 %232
    %234 = vadd.xlane.f32.xlu0 %v231
    %v235 = vpop.xlane.xlu0 %234
    %v236 = vrcp.pop %v233
    %v237 = vrcp.pop %v235
    %v238 = vmul.f32 %v230, %v236
    %v239 = vmul.f32 %v231, %v237
    %v240 = vadd.f32 %v204, %v238
    %v241 = vadd.f32 %v205, %v239
    %v242 = vadd.s32 %v57, 14
    %v243 = vadd.s32 %v58, 14
    %244 = vset.pattern.permute.xlu0 2
    %245 = vperm.xlu0 %244, %v242
    %v246 = vpop.permute.xlu0 %245
    %247 = vset.pattern.permute.xlu0 2
    %248 = vperm.xlu0 %247, %v243
    %v249 = vpop.permute.xlu0 %248
    %vm250 = vcmp.eq.s32.totalorder %v98, %v246
    %vm251 = vcmp.eq.s32.totalorder %v98, %v249
    %v252 = vsel %vm250, %v93, 0.0
    %v253 = vsel %vm251, %v95, 0.0
    %254 = vadd.xlane.f32.xlu0 %v252
    %v255 = vpop.xlane.xlu0 %254
    %256 = vadd.xlane.f32.xlu0 %v253
    %v257 = vpop.xlane.xlu0 %256
    %v258 = vsub.f32 %v255, %v127
    %v259 = vsub.f32 %v257, %v129
    %v260 = vlog2.pop %v233
    %v261 = vmul.f32 %v260, 0.6931472
    %v262 = vlog2.pop %v235
    %v263 = vmul.f32 %v262, 0.6931472
    %v264 = vsub.f32 %v258, %v261
    %v265 = vsub.f32 %v259, %v263
    %v266 = vsel %vm134, %v157, 0.0
    %v267 = vsel %vm134, %v159, 0.0
    %268 = vadd.xlane.f32.xlu0 %v266
    %v269 = vpop.xlane.xlu0 %268
    %270 = vadd.xlane.f32.xlu0 %v267
    %v271 = vpop.xlane.xlu0 %270
    %v272 = vrcp.pop %v269
    %v273 = vrcp.pop %v271
    %v274 = vmul.f32 %v266, %v272
    %v275 = vmul.f32 %v267, %v273
    %v276 = vadd.f32 %v240, %v274
    %v277 = vadd.f32 %v241, %v275
    %v278 = vadd.s32 %v57, 22
    %v279 = vadd.s32 %v58, 22
    %280 = vset.pattern.permute.xlu0 3
    %281 = vperm.xlu0 %280, %v278
    %v282 = vpop.permute.xlu0 %281
    %283 = vset.pattern.permute.xlu0 3
    %284 = vperm.xlu0 %283, %v279
    %v285 = vpop.permute.xlu0 %284
    %vm286 = vcmp.eq.s32.totalorder %v98, %v282
    %vm287 = vcmp.eq.s32.totalorder %v98, %v285
    %v288 = vsel %vm286, %v93, 0.0
    %v289 = vsel %vm287, %v95, 0.0
    %290 = vadd.xlane.f32.xlu0 %v288
    %v291 = vpop.xlane.xlu0 %290
    %292 = vadd.xlane.f32.xlu0 %v289
    %v293 = vpop.xlane.xlu0 %292
    %v294 = vsub.f32 %v291, %v138
    %v295 = vsub.f32 %v293, %v140
    %v296 = vlog2.pop %v269
    %v297 = vmul.f32 %v296, 0.6931472
    %v298 = vlog2.pop %v271
    %v299 = vmul.f32 %v298, 0.6931472
    %v300 = vsub.f32 %v294, %v297
    %v301 = vsub.f32 %v295, %v299
    %v302 = vsel %vm145, %v157, 0.0
    %v303 = vsel %vm145, %v159, 0.0
    %304 = vadd.xlane.f32.xlu0 %v302
    %v305 = vpop.xlane.xlu0 %304
    %306 = vadd.xlane.f32.xlu0 %v303
    %v307 = vpop.xlane.xlu0 %306
    %v308 = vrcp.pop %v305
    %v309 = vrcp.pop %v307
    %v310 = vmul.f32 %v302, %v308
    %v311 = vmul.f32 %v303, %v309
    %v312 = vadd.f32 %v276, %v310
    %v313 = vadd.f32 %v277, %v311
    %v314 = vadd.s32 %v57, 30
    %v315 = vadd.s32 %v58, 30
    %316 = vset.pattern.permute.xlu0 4
    %317 = vperm.xlu0 %316, %v314
    %v318 = vpop.permute.xlu0 %317
    %319 = vset.pattern.permute.xlu0 4
    %320 = vperm.xlu0 %319, %v315
    %v321 = vpop.permute.xlu0 %320
    %vm322 = vcmp.eq.s32.totalorder %v98, %v318
    %vm323 = vcmp.eq.s32.totalorder %v98, %v321
    %v324 = vsel %vm322, %v93, 0.0
    %v325 = vsel %vm323, %v95, 0.0
    %326 = vadd.xlane.f32.xlu0 %v324
    %v327 = vpop.xlane.xlu0 %326
    %328 = vadd.xlane.f32.xlu0 %v325
    %v329 = vpop.xlane.xlu0 %328
    %v330 = vsub.f32 %v327, %v149
    %v331 = vsub.f32 %v329, %v151
    %v332 = vlog2.pop %v305
    %v333 = vmul.f32 %v332, 0.6931472
    %v334 = vlog2.pop %v307
    %v335 = vmul.f32 %v334, 0.6931472
    %v336 = vsub.f32 %v330, %v333
    %v337 = vsub.f32 %v331, %v335
    %v338 = vpack.c.bf16 %v312, %v312
    %v339 = vpack.c.bf16 %v313, %v313
    %340 = vst [vmem:[#allocation7] sm:$0xf] %v338
    %341 = vst [vmem:[#allocation7 + $0x44] sm:$0xf] %v339
    %v342 = vld [vmem:[#allocation5 + $0x4] sm:$0xff]
    %v343 = vld [vmem:[#allocation5 + $0xc] sm:$0xff]
    %v344 = vld [vmem:[#allocation5 + $0x14] sm:$0xff]
    %v345 = vld [vmem:[#allocation5 + $0x1c] sm:$0xff]
    %v346 = vld [vmem:[#allocation5 + $0x48] sm:$0xff]
    %v347 = vld [vmem:[#allocation5 + $0x50] sm:$0xff]
    %v348 = vld [vmem:[#allocation5 + $0x58] sm:$0xff]
    %v349 = vld [vmem:[#allocation5 + $0x60] sm:$0xff]
    %v350 = vld [vmem:[#allocation5 + $0x8c] sm:$0xff]
    %v351 = vld [vmem:[#allocation5 + $0x94] sm:$0xff]
    %v352 = vld [vmem:[#allocation5 + $0x9c] sm:$0xff]
    %v353 = vld [vmem:[#allocation5 + $0xa4] sm:$0xff]
    %v354 = vld [vmem:[#allocation5 + $0xd0] sm:$0xff]
    %v355 = vld [vmem:[#allocation5 + $0xd8] sm:$0xff]
    %v356 = vld [vmem:[#allocation5 + $0xe0] sm:$0xff]
    %v357 = vld [vmem:[#allocation5 + $0xe8] sm:$0xff]
    %v358 = vld [vmem:[%s2 + $0x1] sm:$0xff]
    %v360 = vperm.slane %v358, 0
    %v361 = vperm.slane %v358, 1
    %v362 = vperm.slane %v358, 2
    %v363 = vperm.slane %v358, 3
    %v364 = vperm.slane %v358, 4
    %v365 = vperm.slane %v358, 5
    %v366 = vperm.slane %v358, 6
    %v367 = vperm.slane %v358, 7
    %v392 = vunpack.c.l.b16 %v342
    %v393 = vunpack.c.h.b16 %v342
    %v394 = vunpack.c.l.b16 %v343
    %v395 = vunpack.c.h.b16 %v343
    %v396 = vunpack.c.l.b16 %v344
    %v397 = vunpack.c.h.b16 %v344
    %v398 = vunpack.c.l.b16 %v345
    %v399 = vunpack.c.h.b16 %v345
    %v400 = vunpack.c.l.b16 %v346
    %v401 = vunpack.c.h.b16 %v346
    %v402 = vunpack.c.l.b16 %v347
    %v403 = vunpack.c.h.b16 %v347
    %v404 = vunpack.c.l.b16 %v348
    %v405 = vunpack.c.h.b16 %v348
    %v406 = vunpack.c.l.b16 %v349
    %v407 = vunpack.c.h.b16 %v349
    %v408 = vunpack.c.l.b16 %v350
    %v409 = vunpack.c.h.b16 %v350
    %v410 = vunpack.c.l.b16 %v351
    %v411 = vunpack.c.h.b16 %v351
    %v412 = vunpack.c.l.b16 %v352
    %v413 = vunpack.c.h.b16 %v352
    %v414 = vunpack.c.l.b16 %v353
    %v415 = vunpack.c.h.b16 %v353
    %v416 = vunpack.c.l.b16 %v354
    %v417 = vunpack.c.h.b16 %v354
    %v418 = vunpack.c.l.b16 %v355
    %v419 = vunpack.c.h.b16 %v355
    %v420 = vunpack.c.l.b16 %v356
    %v421 = vunpack.c.h.b16 %v356
    %v422 = vunpack.c.l.b16 %v357
    %v423 = vunpack.c.h.b16 %v357
    %v424 = vpack.c.b16 %v400, %v392
    %v425 = vpack.c.b16 %v401, %v393
    %v426 = vpack.c.b16 %v402, %v394
    %v427 = vpack.c.b16 %v403, %v395
    %v428 = vpack.c.b16 %v404, %v396
    %v429 = vpack.c.b16 %v405, %v397
    %v430 = vpack.c.b16 %v406, %v398
    %v431 = vpack.c.b16 %v407, %v399
    %v432 = vpack.c.b16 %v416, %v408
    %v433 = vpack.c.b16 %v417, %v409
    %v434 = vpack.c.b16 %v418, %v410
    %v435 = vpack.c.b16 %v419, %v411
    %v436 = vpack.c.b16 %v420, %v412
    %v437 = vpack.c.b16 %v421, %v413
    %v438 = vpack.c.b16 %v422, %v414
    %v439 = vpack.c.b16 %v423, %v415
    %456 = vmatpush.bf16.msra.mxu0 0
    %457 = vmatpush.bf16.msra.mxu0 0
    %458 = vmatpush.bf16.msra.mxu0 0
    %459 = vmatpush.bf16.msra.mxu0 0
    %460 = vmatpush.bf16.msra.mxu0 0
    %461 = vmatpush.bf16.msra.mxu0 0
    %462 = vmatpush.bf16.msra.mxu0 %v432
    %463 = vmatpush.bf16.msra.mxu0 %v424
    %464 = vmatmul.bf16.gmra.mxu0 %v81
    %v465 = vpop.f32.mrf.mxu0
    %v466 = vadd.f32 %v360, %v465
    %v467 = vpop.f32.mrf.mxu0
    %v468 = vadd.f32 %v360, %v467
    %469 = vdwg.mxu0
    %470 = vmatpush.bf16.msra.mxu0 0
    %471 = vmatpush.bf16.msra.mxu0 0
    %472 = vmatpush.bf16.msra.mxu0 0
    %473 = vmatpush.bf16.msra.mxu0 0
    %474 = vmatpush.bf16.msra.mxu0 0
    %475 = vmatpush.bf16.msra.mxu0 0
    %476 = vmatpush.bf16.msra.mxu0 %v433
    %477 = vmatpush.bf16.msra.mxu0 %v425
    %478 = vmatmul.bf16.gmra.mxu0 %v81
    %v479 = vpop.f32.mrf.mxu0
    %v480 = vadd.f32 %v361, %v479
    %v481 = vpop.f32.mrf.mxu0
    %v482 = vadd.f32 %v361, %v481
    %483 = vdwg.mxu0
    %484 = vmatpush.bf16.msra.mxu0 0
    %485 = vmatpush.bf16.msra.mxu0 0
    %486 = vmatpush.bf16.msra.mxu0 0
    %487 = vmatpush.bf16.msra.mxu0 0
    %488 = vmatpush.bf16.msra.mxu0 0
    %489 = vmatpush.bf16.msra.mxu0 0
    %490 = vmatpush.bf16.msra.mxu0 %v434
    %491 = vmatpush.bf16.msra.mxu0 %v426
    %492 = vmatmul.bf16.gmra.mxu0 %v81
    %v493 = vpop.f32.mrf.mxu0
    %v494 = vadd.f32 %v362, %v493
    %v495 = vpop.f32.mrf.mxu0
    %v496 = vadd.f32 %v362, %v495
    %497 = vdwg.mxu0
    %498 = vmatpush.bf16.msra.mxu0 0
    %499 = vmatpush.bf16.msra.mxu0 0
    %500 = vmatpush.bf16.msra.mxu0 0
    %501 = vmatpush.bf16.msra.mxu0 0
    %502 = vmatpush.bf16.msra.mxu0 0
    %503 = vmatpush.bf16.msra.mxu0 0
    %504 = vmatpush.bf16.msra.mxu0 %v435
    %505 = vmatpush.bf16.msra.mxu0 %v427
    %506 = vmatmul.bf16.gmra.mxu0 %v81
    %v507 = vpop.f32.mrf.mxu0
    %v508 = vadd.f32 %v363, %v507
    %v509 = vpop.f32.mrf.mxu0
    %v510 = vadd.f32 %v363, %v509
    %511 = vdwg.mxu0
    %512 = vmatpush.bf16.msra.mxu0 0
    %513 = vmatpush.bf16.msra.mxu0 0
    %514 = vmatpush.bf16.msra.mxu0 0
    %515 = vmatpush.bf16.msra.mxu0 0
    %516 = vmatpush.bf16.msra.mxu0 0
    %517 = vmatpush.bf16.msra.mxu0 0
    %518 = vmatpush.bf16.msra.mxu0 %v436
    %519 = vmatpush.bf16.msra.mxu0 %v428
    %520 = vmatmul.bf16.gmra.mxu0 %v81
    %v521 = vpop.f32.mrf.mxu0
    %v522 = vadd.f32 %v364, %v521
    %v523 = vpop.f32.mrf.mxu0
    %v524 = vadd.f32 %v364, %v523
    %525 = vdwg.mxu0
    %526 = vmatpush.bf16.msra.mxu0 0
    %527 = vmatpush.bf16.msra.mxu0 0
    %528 = vmatpush.bf16.msra.mxu0 0
    %529 = vmatpush.bf16.msra.mxu0 0
    %530 = vmatpush.bf16.msra.mxu0 0
    %531 = vmatpush.bf16.msra.mxu0 0
    %532 = vmatpush.bf16.msra.mxu0 %v437
    %533 = vmatpush.bf16.msra.mxu0 %v429
    %534 = vmatmul.bf16.gmra.mxu0 %v81
    %v535 = vpop.f32.mrf.mxu0
    %v536 = vadd.f32 %v365, %v535
    %v537 = vpop.f32.mrf.mxu0
    %v538 = vadd.f32 %v365, %v537
    %539 = vdwg.mxu0
    %540 = vmatpush.bf16.msra.mxu0 0
    %541 = vmatpush.bf16.msra.mxu0 0
    %542 = vmatpush.bf16.msra.mxu0 0
    %543 = vmatpush.bf16.msra.mxu0 0
    %544 = vmatpush.bf16.msra.mxu0 0
    %545 = vmatpush.bf16.msra.mxu0 0
    %546 = vmatpush.bf16.msra.mxu0 %v438
    %547 = vmatpush.bf16.msra.mxu0 %v430
    %548 = vmatmul.bf16.gmra.mxu0 %v81
    %v549 = vpop.f32.mrf.mxu0
    %v550 = vadd.f32 %v366, %v549
    %v551 = vpop.f32.mrf.mxu0
    %v552 = vadd.f32 %v366, %v551
    %553 = vdwg.mxu0
    %554 = vmatpush.bf16.msra.mxu0 0
    %555 = vmatpush.bf16.msra.mxu0 0
    %556 = vmatpush.bf16.msra.mxu0 0
    %557 = vmatpush.bf16.msra.mxu0 0
    %558 = vmatpush.bf16.msra.mxu0 0
    %559 = vmatpush.bf16.msra.mxu0 0
    %560 = vmatpush.bf16.msra.mxu0 %v439
    %561 = vmatpush.bf16.msra.mxu0 %v431
    %562 = vmatmul.bf16.gmra.mxu0 %v81
    %v563 = vpop.f32.mrf.mxu0
    %v564 = vadd.f32 %v367, %v563
    %v565 = vpop.f32.mrf.mxu0
    %v566 = vadd.f32 %v367, %v565
    %567 = vdwg.mxu0
    %v568 = vmax.f32 %v466, %v494
    %v569 = vmax.f32 %v480, %v508
    %v570 = vmax.f32 %v568, %v522
    %v571 = vmax.f32 %v569, %v536
    %v572 = vmax.f32 %v570, %v550
    %v573 = vmax.f32 %v571, %v564
    %v574 = vmax.f32 %v572, %v573
    %575 = vmax.xlane.f32.xlu0 %v574
    %v576 = vpop.xlane.xlu0 %575
    %v577 = vmax.f32 %v468, %v496
    %v578 = vmax.f32 %v482, %v510
    %v579 = vmax.f32 %v577, %v524
    %v580 = vmax.f32 %v578, %v538
    %v581 = vmax.f32 %v579, %v552
    %v582 = vmax.f32 %v580, %v566
    %v583 = vmax.f32 %v581, %v582
    %584 = vmax.xlane.f32.xlu0 %v583
    %v585 = vpop.xlane.xlu0 %584
    %v586 = vsub.f32 %v466, %v576
    %v587 = vsub.f32 %v480, %v576
    %v588 = vsub.f32 %v494, %v576
    %v589 = vsub.f32 %v508, %v576
    %v590 = vsub.f32 %v522, %v576
    %v591 = vsub.f32 %v536, %v576
    %v592 = vsub.f32 %v550, %v576
    %v593 = vsub.f32 %v564, %v576
    %v594 = vsub.f32 %v468, %v585
    %v595 = vsub.f32 %v482, %v585
    %v596 = vsub.f32 %v496, %v585
    %v597 = vsub.f32 %v510, %v585
    %v598 = vsub.f32 %v524, %v585
    %v599 = vsub.f32 %v538, %v585
    %v600 = vsub.f32 %v552, %v585
    %v601 = vsub.f32 %v566, %v585
    %v602 = vmul.f32 %v586, 1.442695
    %v603 = vpow.pop %v602
    %v604 = vmul.f32 %v587, 1.442695
    %v605 = vpow.pop %v604
    %v606 = vmul.f32 %v588, 1.442695
    %v607 = vpow.pop %v606
    %v608 = vmul.f32 %v589, 1.442695
    %v609 = vpow.pop %v608
    %v610 = vmul.f32 %v590, 1.442695
    %v611 = vpow.pop %v610
    %v612 = vmul.f32 %v591, 1.442695
    %v613 = vpow.pop %v612
    %v614 = vmul.f32 %v592, 1.442695
    %v615 = vpow.pop %v614
    %v616 = vmul.f32 %v593, 1.442695
    %v617 = vpow.pop %v616
    %v618 = vmul.f32 %v594, 1.442695
    %v619 = vpow.pop %v618
    %v620 = vmul.f32 %v595, 1.442695
    %v621 = vpow.pop %v620
    %v622 = vmul.f32 %v596, 1.442695
    %v623 = vpow.pop %v622
    %v624 = vmul.f32 %v597, 1.442695
    %v625 = vpow.pop %v624
    %v626 = vmul.f32 %v598, 1.442695
    %v627 = vpow.pop %v626
    %v628 = vmul.f32 %v599, 1.442695
    %v629 = vpow.pop %v628
    %v630 = vmul.f32 %v600, 1.442695
    %v631 = vpow.pop %v630
    %v632 = vmul.f32 %v601, 1.442695
    %v633 = vpow.pop %v632
    %v634 = vadd.f32 %v603, %v605
    %v635 = vadd.f32 %v634, %v607
    %v636 = vadd.f32 %v635, %v609
    %v637 = vadd.f32 %v636, %v611
    %v638 = vadd.f32 %v637, %v613
    %v639 = vadd.f32 %v638, %v615
    %v640 = vadd.f32 %v639, %v617
    %641 = vadd.xlane.f32.xlu0 %v640
    %v642 = vpop.xlane.xlu0 %641
    %v643 = vadd.f32 %v619, %v621
    %v644 = vadd.f32 %v643, %v623
    %v645 = vadd.f32 %v644, %v625
    %v646 = vadd.f32 %v645, %v627
    %v647 = vadd.f32 %v646, %v629
    %v648 = vadd.f32 %v647, %v631
    %v649 = vadd.f32 %v648, %v633
    %650 = vadd.xlane.f32.xlu0 %v649
    %v651 = vpop.xlane.xlu0 %650
    %v652 = vrcp.pop %v642
    %v653 = vrcp.pop %v651
    %v654 = vmul.f32 %v603, %v652
    %v655 = vmul.f32 %v605, %v652
    %v656 = vmul.f32 %v607, %v652
    %v657 = vmul.f32 %v609, %v652
    %v658 = vmul.f32 %v611, %v652
    %v659 = vmul.f32 %v613, %v652
    %v660 = vmul.f32 %v615, %v652
    %v661 = vmul.f32 %v617, %v652
    %v662 = vmul.f32 %v619, %v653
    %v663 = vmul.f32 %v621, %v653
    %v664 = vmul.f32 %v623, %v653
    %v665 = vmul.f32 %v625, %v653
    %v666 = vmul.f32 %v627, %v653
    %v667 = vmul.f32 %v629, %v653
    %v668 = vmul.f32 %v631, %v653
    %v669 = vmul.f32 %v633, %v653
    %v670 = vpack.c.bf16 %v655, %v654
    %v671 = vpack.c.bf16 %v657, %v656
    %v672 = vpack.c.bf16 %v659, %v658
    %v673 = vpack.c.bf16 %v661, %v660
    %v674 = vpack.c.bf16 %v663, %v662
    %v675 = vpack.c.bf16 %v665, %v664
    %v676 = vpack.c.bf16 %v667, %v666
    %v677 = vpack.c.bf16 %v669, %v668
    %678 = vst [vmem:[#allocation7 + $0x4] sm:$0xff] %v670
    %679 = vst [vmem:[#allocation7 + $0xc] sm:$0xff] %v671
    %680 = vst [vmem:[#allocation7 + $0x14] sm:$0xff] %v672
    %681 = vst [vmem:[#allocation7 + $0x1c] sm:$0xff] %v673
    %682 = vst [vmem:[#allocation7 + $0x48] sm:$0xff] %v674
    %683 = vst [vmem:[#allocation7 + $0x50] sm:$0xff] %v675
    %684 = vst [vmem:[#allocation7 + $0x58] sm:$0xff] %v676
    %685 = vst [vmem:[#allocation7 + $0x60] sm:$0xff] %v677
    %v686 = vadd.s32 %v98, 128
    %v687 = vadd.s32 %v98, 256
    %v688 = vadd.s32 %v98, 384
    %v689 = vadd.s32 %v98, 512
    %v690 = vadd.s32 %v98, 640
    %v691 = vadd.s32 %v98, 768
    %v692 = vadd.s32 %v98, 896
    %693 = vset.pattern.permute.xlu0 5
    %694 = vperm.xlu0 %693, %v57
    %v695 = vpop.permute.xlu0 %694
    %696 = vset.pattern.permute.xlu0 5
    %697 = vperm.xlu0 %696, %v58
    %v698 = vpop.permute.xlu0 %697
    %vm699 = vcmp.eq.s32.totalorder %v98, %v695
    %vm700 = vcmp.eq.s32.totalorder %v686, %v695
    %vm701 = vcmp.eq.s32.totalorder %v687, %v695
    %vm702 = vcmp.eq.s32.totalorder %v688, %v695
    %vm703 = vcmp.eq.s32.totalorder %v689, %v695
    %vm704 = vcmp.eq.s32.totalorder %v690, %v695
    %vm705 = vcmp.eq.s32.totalorder %v691, %v695
    %vm706 = vcmp.eq.s32.totalorder %v692, %v695
    %vm707 = vcmp.eq.s32.totalorder %v98, %v698
    %vm708 = vcmp.eq.s32.totalorder %v686, %v698
    %vm709 = vcmp.eq.s32.totalorder %v687, %v698
    %vm710 = vcmp.eq.s32.totalorder %v688, %v698
    %vm711 = vcmp.eq.s32.totalorder %v689, %v698
    %vm712 = vcmp.eq.s32.totalorder %v690, %v698
    %vm713 = vcmp.eq.s32.totalorder %v691, %v698
    %vm714 = vcmp.eq.s32.totalorder %v692, %v698
    %v715 = vsel %vm699, %v466, 0.0
    %v716 = vsel %vm700, %v480, 0.0
    %v717 = vsel %vm701, %v494, 0.0
    %v718 = vsel %vm702, %v508, 0.0
    %v719 = vsel %vm703, %v522, 0.0
    %v720 = vsel %vm704, %v536, 0.0
    %v721 = vsel %vm705, %v550, 0.0
    %v722 = vsel %vm706, %v564, 0.0
    %v723 = vsel %vm707, %v468, 0.0
    %v724 = vsel %vm708, %v482, 0.0
    %v725 = vsel %vm709, %v496, 0.0
    %v726 = vsel %vm710, %v510, 0.0
    %v727 = vsel %vm711, %v524, 0.0
    %v728 = vsel %vm712, %v538, 0.0
    %v729 = vsel %vm713, %v552, 0.0
    %v730 = vsel %vm714, %v566, 0.0
    %v731 = vadd.f32 %v715, %v716
    %v732 = vadd.f32 %v731, %v717
    %v733 = vadd.f32 %v732, %v718
    %v734 = vadd.f32 %v733, %v719
    %v735 = vadd.f32 %v734, %v720
    %v736 = vadd.f32 %v735, %v721
    %v737 = vadd.f32 %v736, %v722
    %738 = vadd.xlane.f32.xlu0 %v737
    %v739 = vpop.xlane.xlu0 %738
    %v740 = vadd.f32 %v723, %v724
    %v741 = vadd.f32 %v740, %v725
    %v742 = vadd.f32 %v741, %v726
    %v743 = vadd.f32 %v742, %v727
    %v744 = vadd.f32 %v743, %v728
    %v745 = vadd.f32 %v744, %v729
    %v746 = vadd.f32 %v745, %v730
    %747 = vadd.xlane.f32.xlu0 %v746
    %v748 = vpop.xlane.xlu0 %747
    %v749 = vsub.f32 %v739, %v576
    %v750 = vsub.f32 %v748, %v585
    %v751 = vlog2.pop %v642
    %v752 = vmul.f32 %v751, 0.6931472
    %v753 = vlog2.pop %v651
    %v754 = vmul.f32 %v753, 0.6931472
    %v755 = vsub.f32 %v749, %v752
    %v756 = vsub.f32 %v750, %v754
    %v757 = vld [vmem:[#allocation5 + $0x24] sm:$0xff]
    %v758 = vld [vmem:[#allocation5 + $0x2c] sm:$0xff]
    %v759 = vld [vmem:[#allocation5 + $0x34] sm:$0xff]
    %v760 = vld [vmem:[#allocation5 + $0x3c] sm:$0xff]
    %v761 = vld [vmem:[#allocation5 + $0x68] sm:$0xff]
    %v762 = vld [vmem:[#allocation5 + $0x70] sm:$0xff]
    %v763 = vld [vmem:[#allocation5 + $0x78] sm:$0xff]
    %v764 = vld [vmem:[#allocation5 + $0x80] sm:$0xff]
    %v765 = vld [vmem:[#allocation5 + $0xac] sm:$0xff]
    %v766 = vld [vmem:[#allocation5 + $0xb4] sm:$0xff]
    %v767 = vld [vmem:[#allocation5 + $0xbc] sm:$0xff]
    %v768 = vld [vmem:[#allocation5 + $0xc4] sm:$0xff]
    %v769 = vld [vmem:[#allocation5 + $0xf0] sm:$0xff]
    %v770 = vld [vmem:[#allocation5 + $0xf8] sm:$0xff]
    %v771 = vld [vmem:[#allocation5 + $0x100] sm:$0xff]
    %v772 = vld [vmem:[#allocation5 + $0x108] sm:$0xff]
    %v773 = vld [vmem:[%s2 + $0x9] sm:$0xff]
    %v775 = vperm.slane %v773, 0
    %v776 = vperm.slane %v773, 1
    %v777 = vperm.slane %v773, 2
    %v778 = vperm.slane %v773, 3
    %v779 = vperm.slane %v773, 4
    %v780 = vperm.slane %v773, 5
    %v781 = vperm.slane %v773, 6
    %v782 = vperm.slane %v773, 7
    %v807 = vunpack.c.l.b16 %v757
    %v808 = vunpack.c.h.b16 %v757
    %v809 = vunpack.c.l.b16 %v758
    %v810 = vunpack.c.h.b16 %v758
    %v811 = vunpack.c.l.b16 %v759
    %v812 = vunpack.c.h.b16 %v759
    %v813 = vunpack.c.l.b16 %v760
    %v814 = vunpack.c.h.b16 %v760
    %v815 = vunpack.c.l.b16 %v761
    %v816 = vunpack.c.h.b16 %v761
    %v817 = vunpack.c.l.b16 %v762
    %v818 = vunpack.c.h.b16 %v762
    %v819 = vunpack.c.l.b16 %v763
    %v820 = vunpack.c.h.b16 %v763
    %v821 = vunpack.c.l.b16 %v764
    %v822 = vunpack.c.h.b16 %v764
    %v823 = vunpack.c.l.b16 %v765
    %v824 = vunpack.c.h.b16 %v765
    %v825 = vunpack.c.l.b16 %v766
    %v826 = vunpack.c.h.b16 %v766
    %v827 = vunpack.c.l.b16 %v767
    %v828 = vunpack.c.h.b16 %v767
    %v829 = vunpack.c.l.b16 %v768
    %v830 = vunpack.c.h.b16 %v768
    %v831 = vunpack.c.l.b16 %v769
    %v832 = vunpack.c.h.b16 %v769
    %v833 = vunpack.c.l.b16 %v770
    %v834 = vunpack.c.h.b16 %v770
    %v835 = vunpack.c.l.b16 %v771
    %v836 = vunpack.c.h.b16 %v771
    %v837 = vunpack.c.l.b16 %v772
    %v838 = vunpack.c.h.b16 %v772
    %v839 = vpack.c.b16 %v815, %v807
    %v840 = vpack.c.b16 %v816, %v808
    %v841 = vpack.c.b16 %v817, %v809
    %v842 = vpack.c.b16 %v818, %v810
    %v843 = vpack.c.b16 %v819, %v811
    %v844 = vpack.c.b16 %v820, %v812
    %v845 = vpack.c.b16 %v821, %v813
    %v846 = vpack.c.b16 %v822, %v814
    %v847 = vpack.c.b16 %v831, %v823
    %v848 = vpack.c.b16 %v832, %v824
    %v849 = vpack.c.b16 %v833, %v825
    %v850 = vpack.c.b16 %v834, %v826
    %v851 = vpack.c.b16 %v835, %v827
    %v852 = vpack.c.b16 %v836, %v828
    %v853 = vpack.c.b16 %v837, %v829
    %v854 = vpack.c.b16 %v838, %v830
    %871 = vmatpush.bf16.msra.mxu0 0
    %872 = vmatpush.bf16.msra.mxu0 0
    %873 = vmatpush.bf16.msra.mxu0 0
    %874 = vmatpush.bf16.msra.mxu0 0
    %875 = vmatpush.bf16.msra.mxu0 0
    %876 = vmatpush.bf16.msra.mxu0 0
    %877 = vmatpush.bf16.msra.mxu0 %v847
    %878 = vmatpush.bf16.msra.mxu0 %v839
    %879 = vmatmul.bf16.gmra.mxu0 %v81
    %v880 = vpop.f32.mrf.mxu0
    %v881 = vadd.f32 %v775, %v880
    %v882 = vpop.f32.mrf.mxu0
    %v883 = vadd.f32 %v775, %v882
    %884 = vdwg.mxu0
    %885 = vmatpush.bf16.msra.mxu0 0
    %886 = vmatpush.bf16.msra.mxu0 0
    %887 = vmatpush.bf16.msra.mxu0 0
    %888 = vmatpush.bf16.msra.mxu0 0
    %889 = vmatpush.bf16.msra.mxu0 0
    %890 = vmatpush.bf16.msra.mxu0 0
    %891 = vmatpush.bf16.msra.mxu0 %v848
    %892 = vmatpush.bf16.msra.mxu0 %v840
    %893 = vmatmul.bf16.gmra.mxu0 %v81
    %v894 = vpop.f32.mrf.mxu0
    %v895 = vadd.f32 %v776, %v894
    %v896 = vpop.f32.mrf.mxu0
    %v897 = vadd.f32 %v776, %v896
    %898 = vdwg.mxu0
    %899 = vmatpush.bf16.msra.mxu0 0
    %900 = vmatpush.bf16.msra.mxu0 0
    %901 = vmatpush.bf16.msra.mxu0 0
    %902 = vmatpush.bf16.msra.mxu0 0
    %903 = vmatpush.bf16.msra.mxu0 0
    %904 = vmatpush.bf16.msra.mxu0 0
    %905 = vmatpush.bf16.msra.mxu0 %v849
    %906 = vmatpush.bf16.msra.mxu0 %v841
    %907 = vmatmul.bf16.gmra.mxu0 %v81
    %v908 = vpop.f32.mrf.mxu0
    %v909 = vadd.f32 %v777, %v908
    %v910 = vpop.f32.mrf.mxu0
    %v911 = vadd.f32 %v777, %v910
    %912 = vdwg.mxu0
    %913 = vmatpush.bf16.msra.mxu0 0
    %914 = vmatpush.bf16.msra.mxu0 0
    %915 = vmatpush.bf16.msra.mxu0 0
    %916 = vmatpush.bf16.msra.mxu0 0
    %917 = vmatpush.bf16.msra.mxu0 0
    %918 = vmatpush.bf16.msra.mxu0 0
    %919 = vmatpush.bf16.msra.mxu0 %v850
    %920 = vmatpush.bf16.msra.mxu0 %v842
    %921 = vmatmul.bf16.gmra.mxu0 %v81
    %v922 = vpop.f32.mrf.mxu0
    %v923 = vadd.f32 %v778, %v922
    %v924 = vpop.f32.mrf.mxu0
    %v925 = vadd.f32 %v778, %v924
    %926 = vdwg.mxu0
    %927 = vmatpush.bf16.msra.mxu0 0
    %928 = vmatpush.bf16.msra.mxu0 0
    %929 = vmatpush.bf16.msra.mxu0 0
    %930 = vmatpush.bf16.msra.mxu0 0
    %931 = vmatpush.bf16.msra.mxu0 0
    %932 = vmatpush.bf16.msra.mxu0 0
    %933 = vmatpush.bf16.msra.mxu0 %v851
    %934 = vmatpush.bf16.msra.mxu0 %v843
    %935 = vmatmul.bf16.gmra.mxu0 %v81
    %v936 = vpop.f32.mrf.mxu0
    %v937 = vadd.f32 %v779, %v936
    %v938 = vpop.f32.mrf.mxu0
    %v939 = vadd.f32 %v779, %v938
    %940 = vdwg.mxu0
    %941 = vmatpush.bf16.msra.mxu0 0
    %942 = vmatpush.bf16.msra.mxu0 0
    %943 = vmatpush.bf16.msra.mxu0 0
    %944 = vmatpush.bf16.msra.mxu0 0
    %945 = vmatpush.bf16.msra.mxu0 0
    %946 = vmatpush.bf16.msra.mxu0 0
    %947 = vmatpush.bf16.msra.mxu0 %v852
    %948 = vmatpush.bf16.msra.mxu0 %v844
    %949 = vmatmul.bf16.gmra.mxu0 %v81
    %v950 = vpop.f32.mrf.mxu0
    %v951 = vadd.f32 %v780, %v950
    %v952 = vpop.f32.mrf.mxu0
    %v953 = vadd.f32 %v780, %v952
    %954 = vdwg.mxu0
    %955 = vmatpush.bf16.msra.mxu0 0
    %956 = vmatpush.bf16.msra.mxu0 0
    %957 = vmatpush.bf16.msra.mxu0 0
    %958 = vmatpush.bf16.msra.mxu0 0
    %959 = vmatpush.bf16.msra.mxu0 0
    %960 = vmatpush.bf16.msra.mxu0 0
    %961 = vmatpush.bf16.msra.mxu0 %v853
    %962 = vmatpush.bf16.msra.mxu0 %v845
    %963 = vmatmul.bf16.gmra.mxu0 %v81
    %v964 = vpop.f32.mrf.mxu0
    %v965 = vadd.f32 %v781, %v964
    %v966 = vpop.f32.mrf.mxu0
    %v967 = vadd.f32 %v781, %v966
    %968 = vdwg.mxu0
    %969 = vmatpush.bf16.msra.mxu0 0
    %970 = vmatpush.bf16.msra.mxu0 0
    %971 = vmatpush.bf16.msra.mxu0 0
    %972 = vmatpush.bf16.msra.mxu0 0
    %973 = vmatpush.bf16.msra.mxu0 0
    %974 = vmatpush.bf16.msra.mxu0 0
    %975 = vmatpush.bf16.msra.mxu0 %v854
    %976 = vmatpush.bf16.msra.mxu0 %v846
    %977 = vmatmul.bf16.gmra.mxu0 %v81
    %v978 = vpop.f32.mrf.mxu0
    %v979 = vadd.f32 %v782, %v978
    %v980 = vpop.f32.mrf.mxu0
    %v981 = vadd.f32 %v782, %v980
    %982 = vdwg.mxu0
    %v983 = vmax.f32 %v881, %v909
    %v984 = vmax.f32 %v895, %v923
    %v985 = vmax.f32 %v983, %v937
    %v986 = vmax.f32 %v984, %v951
    %v987 = vmax.f32 %v985, %v965
    %v988 = vmax.f32 %v986, %v979
    %v989 = vmax.f32 %v987, %v988
    %990 = vmax.xlane.f32.xlu0 %v989
    %v991 = vpop.xlane.xlu0 %990
    %v992 = vmax.f32 %v883, %v911
    %v993 = vmax.f32 %v897, %v925
    %v994 = vmax.f32 %v992, %v939
    %v995 = vmax.f32 %v993, %v953
    %v996 = vmax.f32 %v994, %v967
    %v997 = vmax.f32 %v995, %v981
    %v998 = vmax.f32 %v996, %v997
    %999 = vmax.xlane.f32.xlu0 %v998
    %v1000 = vpop.xlane.xlu0 %999
    %v1001 = vsub.f32 %v881, %v991
    %v1002 = vsub.f32 %v895, %v991
    %v1003 = vsub.f32 %v909, %v991
    %v1004 = vsub.f32 %v923, %v991
    %v1005 = vsub.f32 %v937, %v991
    %v1006 = vsub.f32 %v951, %v991
    %v1007 = vsub.f32 %v965, %v991
    %v1008 = vsub.f32 %v979, %v991
    %v1009 = vsub.f32 %v883, %v1000
    %v1010 = vsub.f32 %v897, %v1000
    %v1011 = vsub.f32 %v911, %v1000
    %v1012 = vsub.f32 %v925, %v1000
    %v1013 = vsub.f32 %v939, %v1000
    %v1014 = vsub.f32 %v953, %v1000
    %v1015 = vsub.f32 %v967, %v1000
    %v1016 = vsub.f32 %v981, %v1000
    %v1017 = vmul.f32 %v1001, 1.442695
    %v1018 = vpow.pop %v1017
    %v1019 = vmul.f32 %v1002, 1.442695
    %v1020 = vpow.pop %v1019
    %v1021 = vmul.f32 %v1003, 1.442695
    %v1022 = vpow.pop %v1021
    %v1023 = vmul.f32 %v1004, 1.442695
    %v1024 = vpow.pop %v1023
    %v1025 = vmul.f32 %v1005, 1.442695
    %v1026 = vpow.pop %v1025
    %v1027 = vmul.f32 %v1006, 1.442695
    %v1028 = vpow.pop %v1027
    %v1029 = vmul.f32 %v1007, 1.442695
    %v1030 = vpow.pop %v1029
    %v1031 = vmul.f32 %v1008, 1.442695
    %v1032 = vpow.pop %v1031
    %v1033 = vmul.f32 %v1009, 1.442695
    %v1034 = vpow.pop %v1033
    %v1035 = vmul.f32 %v1010, 1.442695
    %v1036 = vpow.pop %v1035
    %v1037 = vmul.f32 %v1011, 1.442695
    %v1038 = vpow.pop %v1037
    %v1039 = vmul.f32 %v1012, 1.442695
    %v1040 = vpow.pop %v1039
    %v1041 = vmul.f32 %v1013, 1.442695
    %v1042 = vpow.pop %v1041
    %v1043 = vmul.f32 %v1014, 1.442695
    %v1044 = vpow.pop %v1043
    %v1045 = vmul.f32 %v1015, 1.442695
    %v1046 = vpow.pop %v1045
    %v1047 = vmul.f32 %v1016, 1.442695
    %v1048 = vpow.pop %v1047
    %v1049 = vadd.f32 %v1018, %v1020
    %v1050 = vadd.f32 %v1049, %v1022
    %v1051 = vadd.f32 %v1050, %v1024
    %v1052 = vadd.f32 %v1051, %v1026
    %v1053 = vadd.f32 %v1052, %v1028
    %v1054 = vadd.f32 %v1053, %v1030
    %v1055 = vadd.f32 %v1054, %v1032
    %1056 = vadd.xlane.f32.xlu0 %v1055
    %v1057 = vpop.xlane.xlu0 %1056
    %v1058 = vadd.f32 %v1034, %v1036
    %v1059 = vadd.f32 %v1058, %v1038
    %v1060 = vadd.f32 %v1059, %v1040
    %v1061 = vadd.f32 %v1060, %v1042
    %v1062 = vadd.f32 %v1061, %v1044
    %v1063 = vadd.f32 %v1062, %v1046
    %v1064 = vadd.f32 %v1063, %v1048
    %1065 = vadd.xlane.f32.xlu0 %v1064
    %v1066 = vpop.xlane.xlu0 %1065
    %v1067 = vrcp.pop %v1057
    %v1068 = vrcp.pop %v1066
    %v1069 = vmul.f32 %v1018, %v1067
    %v1070 = vmul.f32 %v1020, %v1067
    %v1071 = vmul.f32 %v1022, %v1067
    %v1072 = vmul.f32 %v1024, %v1067
    %v1073 = vmul.f32 %v1026, %v1067
    %v1074 = vmul.f32 %v1028, %v1067
    %v1075 = vmul.f32 %v1030, %v1067
    %v1076 = vmul.f32 %v1032, %v1067
    %v1077 = vmul.f32 %v1034, %v1068
    %v1078 = vmul.f32 %v1036, %v1068
    %v1079 = vmul.f32 %v1038, %v1068
    %v1080 = vmul.f32 %v1040, %v1068
    %v1081 = vmul.f32 %v1042, %v1068
    %v1082 = vmul.f32 %v1044, %v1068
    %v1083 = vmul.f32 %v1046, %v1068
    %v1084 = vmul.f32 %v1048, %v1068
    %v1085 = vpack.c.bf16 %v1070, %v1069
    %v1086 = vpack.c.bf16 %v1072, %v1071
    %v1087 = vpack.c.bf16 %v1074, %v1073
    %v1088 = vpack.c.bf16 %v1076, %v1075
    %v1089 = vpack.c.bf16 %v1078, %v1077
    %v1090 = vpack.c.bf16 %v1080, %v1079
    %v1091 = vpack.c.bf16 %v1082, %v1081
    %v1092 = vpack.c.bf16 %v1084, %v1083
    %1093 = vst [vmem:[#allocation7 + $0x24] sm:$0xff] %v1085
    %1094 = vst [vmem:[#allocation7 + $0x2c] sm:$0xff] %v1086
    %1095 = vst [vmem:[#allocation7 + $0x34] sm:$0xff] %v1087
    %1096 = vst [vmem:[#allocation7 + $0x3c] sm:$0xff] %v1088
    %1097 = vst [vmem:[#allocation7 + $0x68] sm:$0xff] %v1089
    %1098 = vst [vmem:[#allocation7 + $0x70] sm:$0xff] %v1090
    %1099 = vst [vmem:[#allocation7 + $0x78] sm:$0xff] %v1091
    %1100 = vst [vmem:[#allocation7 + $0x80] sm:$0xff] %v1092
    %1101 = vset.pattern.permute.xlu0 6
    %1102 = vperm.xlu0 %1101, %v57
    %v1103 = vpop.permute.xlu0 %1102
    %1104 = vset.pattern.permute.xlu0 6
    %1105 = vperm.xlu0 %1104, %v58
    %v1106 = vpop.permute.xlu0 %1105
    %vm1107 = vcmp.eq.s32.totalorder %v98, %v1103
    %vm1108 = vcmp.eq.s32.totalorder %v686, %v1103
    %vm1109 = vcmp.eq.s32.totalorder %v687, %v1103
    %vm1110 = vcmp.eq.s32.totalorder %v688, %v1103
    %vm1111 = vcmp.eq.s32.totalorder %v689, %v1103
    %vm1112 = vcmp.eq.s32.totalorder %v690, %v1103
    %vm1113 = vcmp.eq.s32.totalorder %v691, %v1103
    %vm1114 = vcmp.eq.s32.totalorder %v692, %v1103
    %vm1115 = vcmp.eq.s32.totalorder %v98, %v1106
    %vm1116 = vcmp.eq.s32.totalorder %v686, %v1106
    %vm1117 = vcmp.eq.s32.totalorder %v687, %v1106
    %vm1118 = vcmp.eq.s32.totalorder %v688, %v1106
    %vm1119 = vcmp.eq.s32.totalorder %v689, %v1106
    %vm1120 = vcmp.eq.s32.totalorder %v690, %v1106
    %vm1121 = vcmp.eq.s32.totalorder %v691, %v1106
    %vm1122 = vcmp.eq.s32.totalorder %v692, %v1106
    %v1123 = vsel %vm1107, %v881, 0.0
    %v1124 = vsel %vm1108, %v895, 0.0
    %v1125 = vsel %vm1109, %v909, 0.0
    %v1126 = vsel %vm1110, %v923, 0.0
    %v1127 = vsel %vm1111, %v937, 0.0
    %v1128 = vsel %vm1112, %v951, 0.0
    %v1129 = vsel %vm1113, %v965, 0.0
    %v1130 = vsel %vm1114, %v979, 0.0
    %v1131 = vsel %vm1115, %v883, 0.0
    %v1132 = vsel %vm1116, %v897, 0.0
    %v1133 = vsel %vm1117, %v911, 0.0
    %v1134 = vsel %vm1118, %v925, 0.0
    %v1135 = vsel %vm1119, %v939, 0.0
    %v1136 = vsel %vm1120, %v953, 0.0
    %v1137 = vsel %vm1121, %v967, 0.0
    %v1138 = vsel %vm1122, %v981, 0.0
    %v1139 = vadd.f32 %v1123, %v1124
    %v1140 = vadd.f32 %v1139, %v1125
    %v1141 = vadd.f32 %v1140, %v1126
    %v1142 = vadd.f32 %v1141, %v1127
    %v1143 = vadd.f32 %v1142, %v1128
    %v1144 = vadd.f32 %v1143, %v1129
    %v1145 = vadd.f32 %v1144, %v1130
    %1146 = vadd.xlane.f32.xlu0 %v1145
    %v1147 = vpop.xlane.xlu0 %1146
    %v1148 = vadd.f32 %v1131, %v1132
    %v1149 = vadd.f32 %v1148, %v1133
    %v1150 = vadd.f32 %v1149, %v1134
    %v1151 = vadd.f32 %v1150, %v1135
    %v1152 = vadd.f32 %v1151, %v1136
    %v1153 = vadd.f32 %v1152, %v1137
    %v1154 = vadd.f32 %v1153, %v1138
    %1155 = vadd.xlane.f32.xlu0 %v1154
    %v1156 = vpop.xlane.xlu0 %1155
    %v1157 = vsub.f32 %v1147, %v991
    %v1158 = vsub.f32 %v1156, %v1000
    %v1159 = vlog2.pop %v1057
    %v1160 = vmul.f32 %v1159, 0.6931472
    %v1161 = vlog2.pop %v1066
    %v1162 = vmul.f32 %v1161, 0.6931472
    %v1163 = vsub.f32 %v1157, %v1160
    %v1164 = vsub.f32 %v1158, %v1162
    %vm1165 = vcmp.eq.s32.totalorder %v57, 1
    %vm1166 = vcmp.eq.s32.totalorder %v58, 1
    %v1167 = vsel %vm1165, 1, 0
    %v1168 = vsel %vm1166, 1, 0
    %v1169 = vcvt.s32.f32 %v1167
    %v1170 = vcvt.s32.f32 %v1168
    %v1171 = vmul.f32 %v1169, %v228
    %v1172 = vmul.f32 %v1170, %v229
    %v1173 = vadd.f32 %v192, %v1171
    %v1174 = vadd.f32 %v193, %v1172
    %vm1175 = vcmp.eq.s32.totalorder %v57, 2
    %vm1176 = vcmp.eq.s32.totalorder %v58, 2
    %v1177 = vsel %vm1175, 1, 0
    %v1178 = vsel %vm1176, 1, 0
    %v1179 = vcvt.s32.f32 %v1177
    %v1180 = vcvt.s32.f32 %v1178
    %v1181 = vmul.f32 %v1179, %v264
    %v1182 = vmul.f32 %v1180, %v265
    %v1183 = vadd.f32 %v1173, %v1181
    %v1184 = vadd.f32 %v1174, %v1182
    %vm1185 = vcmp.eq.s32.totalorder %v57, 4
    %vm1186 = vcmp.eq.s32.totalorder %v58, 4
    %v1187 = vsel %vm1185, 1, 0
    %v1188 = vsel %vm1186, 1, 0
    %v1189 = vcvt.s32.f32 %v1187
    %v1190 = vcvt.s32.f32 %v1188
    %v1191 = vmul.f32 %v1189, %v300
    %v1192 = vmul.f32 %v1190, %v301
    %v1193 = vadd.f32 %v1183, %v1191
    %v1194 = vadd.f32 %v1184, %v1192
    %vm1195 = vcmp.eq.s32.totalorder %v57, 3
    %vm1196 = vcmp.eq.s32.totalorder %v58, 3
    %v1197 = vsel %vm1195, 1, 0
    %v1198 = vsel %vm1196, 1, 0
    %v1199 = vcvt.s32.f32 %v1197
    %v1200 = vcvt.s32.f32 %v1198
    %v1201 = vmul.f32 %v1199, %v336
    %v1202 = vmul.f32 %v1200, %v337
    %v1203 = vadd.f32 %v1193, %v1201
    %v1204 = vadd.f32 %v1194, %v1202
    %v1205 = vmul.f32 %v1199, %v755
    %v1206 = vmul.f32 %v1200, %v756
    %v1207 = vadd.f32 %v1203, %v1205
    %v1208 = vadd.f32 %v1204, %v1206
    %vm1209 = vcmp.eq.s32.totalorder %v57, 5
    %vm1210 = vcmp.eq.s32.totalorder %v58, 5
    %v1211 = vsel %vm1209, 1, 0
    %v1212 = vsel %vm1210, 1, 0
    %v1213 = vcvt.s32.f32 %v1211
    %v1214 = vcvt.s32.f32 %v1212
    %v1215 = vmul.f32 %v1213, %v1163
    %v1216 = vmul.f32 %v1214, %v1164
    %v1217 = vadd.f32 %v1207, %v1215
    %v1218 = vadd.f32 %v1208, %v1216
    %vm1219 = vcmp.eq.s32.totalorder %v98, 0
    %v1220 = vsel %vm1219, %v192, 0.0
    %v1221 = vsel %vm1219, %v193, 0.0
    %vm1222 = vcmp.eq.s32.totalorder %v98, 1
    %v1223 = vsel %vm1222, %v228, %v1220
    %v1224 = vsel %vm1222, %v229, %v1221
    %vm1225 = vcmp.eq.s32.totalorder %v98, 2
    %v1226 = vsel %vm1225, %v264, %v1223
    %v1227 = vsel %vm1225, %v265, %v1224
    %vm1228 = vcmp.eq.s32.totalorder %v98, 3
    %v1229 = vsel %vm1228, %v300, %v1226
    %v1230 = vsel %vm1228, %v301, %v1227
    %vm1231 = vcmp.eq.s32.totalorder %v98, 4
    %v1232 = vsel %vm1231, %v336, %v1229
    %v1233 = vsel %vm1231, %v337, %v1230
    %vm1234 = vcmp.eq.s32.totalorder %v98, 5
    %v1235 = vsel %vm1234, %v755, %v1232
    %v1236 = vsel %vm1234, %v756, %v1233
    %vm1237 = vcmp.eq.s32.totalorder %v98, 6
    %v1238 = vsel %vm1237, %v1163, %v1235
    %v1239 = vsel %vm1237, %v1164, %v1236
    %vm1240 = vcmp.eq.s32.totalorder %v98, 7
    %1242 = vset.pattern.permute.xlu0 0
    %1243 = vperm.xlu0 %1242, %v1217
    %v1244 = vpop.permute.xlu0 %1243
    %1247 = vset.pattern.permute.xlu0 0
    %1248 = vperm.xlu0 %1247, %v1218
    %v1249 = vpop.permute.xlu0 %1248
    %v1251 = vsel %vm1240, %v1244, %v1238
    %v1252 = vsel %vm1240, %v1249, %v1239
    %1253 = vst [vmem:[#allocation8] sm:$0xff] %v1251
    %1254 = vst [vmem:[#allocation8 + $0x8] sm:$0xff] %v1252
    // Predicated region
    $region26: #{tpu_custom_call.1} parent=1 // pred_check
      _
    $region27: #{tpu_custom_call.1} parent=1 // pred_check_branch
      %1256 = sbr.rel (0) target = $region29
    $region28: #{tpu_custom_call.1} parent=1 // pred_region
      %1258 = vsyncadd [#allocation4], 0
      %s1259 = sshll.u32 [#allocation7], 4
      %s1260 = int_to_ptr.vmem [resolvable:$true] %s1259
      %s1261 = sshll.u32 %s4, 4
      %s1262 = int_to_ptr.hbm [resolvable:$true] %s1261
      %1267 = dma.vmem_to_hbm [thread:$0]  %s1260, 2176, %s1262, [#allocation4], 1088, 1088, 68
    $region29: #{tpu_custom_call.1} parent=1 // pred_fallthru
      _
    // Predicated region
    $region30: #{tpu_custom_call.1} parent=1 // pred_check
      _
    $region31: #{tpu_custom_call.1} parent=1 // pred_check_branch
      %1269 = sbr.rel (0) target = $region33
    $region32: #{tpu_custom_call.1} parent=1 // pred_region
      %1271 = vsyncadd [#allocation9], 0
      %s1272 = sshll.u32 [#allocation8], 4
      %s1273 = int_to_ptr.vmem [resolvable:$true] %s1272
      %s1274 = sshll.u32 %s5, 4
      %s1275 = int_to_ptr.hbm [resolvable:$true] %s1274
      %1280 = dma.vmem_to_hbm [thread:$0]  %s1273, 256, %s1275, [#allocation9], 128, 128, 8
    $region33: #{tpu_custom_call.1} parent=1 // pred_fallthru
      _
    // Predicated region
    $region34: #{tpu_custom_call.1} parent=1 // pred_check
      _
    $region35: #{tpu_custom_call.1} parent=1 // pred_check_branch
      %1282 = sbr.rel (0) target = $region37
    $region36: #{tpu_custom_call.1} parent=1 // pred_region
      %1284 = dma.done [#allocation4], 2176
    $region37: #{tpu_custom_call.1} parent=1 // pred_fallthru
      _
    // Predicated region
    $region38: #{tpu_custom_call.1} parent=1 // pred_check
      _
    $region39: #{tpu_custom_call.1} parent=1 // pred_check_branch
      %1286 = sbr.rel (0) target = $region41
    $region40: #{tpu_custom_call.1} parent=1 // pred_region
      %1288 = dma.done [#allocation9], 256
    $region41: #{tpu_custom_call.1} parent=1 // pred_fallthru
      _
    %1289 = vsyncpa [#allocation3], 1
    %1290 = vsyncpa [#allocation6], 1
    %1291 = vsyncpa [#allocation4], 1
    %1292 = vsyncpa [#allocation9], 1

</llo_original>
